<compile_context>
chip_gen: v7x
topology: tpu7x:2x2x1
jax: 0.10.0
libtpu: 0.0.40
codegen_flags: <defaults>
</compile_context>

<pallas_src>
import functools

import jax
import jax.numpy as jnp
import numpy as np
from jax.experimental import pallas as pl
from jax.experimental.pallas import tpu as pltpu

EPS = 1e-5


# ----------------------------- compiler params -------------------------------- #

@functools.lru_cache(maxsize=None)
def _vmem_limit_bytes():
    cap = 64 * 1024 * 1024                      # conservative default (v7x physical)
    try:
        info = pltpu.get_tpu_info()
        cap = int(getattr(info, "vmem_capacity_bytes", cap) or cap)
    except Exception:
        pass
    return int(min(cap * 3 // 4, 100 * 1024 * 1024))


def _cparams(sems):
    return pltpu.CompilerParams(dimension_semantics=sems,
                                vmem_limit_bytes=_vmem_limit_bytes())


# --------------------------------- kernels ------------------------------------ #

def _conv_acc(x_ref, w_ref, taps, length):
    """sum_k  W_k @ x[:, s_k : s_k + length]  -- 9 halo taps sliced in VMEM."""
    acc = jnp.dot(w_ref[0], x_ref[0, :, taps[0]:taps[0] + length],
                  preferred_element_type=jnp.float32)
    for k in range(1, 9):
        acc = acc + jnp.dot(w_ref[k], x_ref[0, :, taps[k]:taps[k] + length],
                            preferred_element_type=jnp.float32)
    return acc


def _conv1_kernel(x_ref, w_ref, ws_ref, mwin_ref, ml1_ref,
                  pre1_ref, presc_ref, s1_ref, q1_ref, ss_ref, qs_ref,
                  *, taps, l1, lwin, ctr):
    """Pass A (stage 1): conv1 (3x3) + fused 1x1 shortcut + global BN stats.

    x_ref    : (1, Cin, L0)   bf16   guarded, conv-padded, flattened image
    w_ref    : (9, Cout, Cin) bf16   conv1 weights per tap
    ws_ref   : (Cout, Cin)    bf16   1x1 projection weights
    mwin_ref : (1, Lwin)      f32    validity mask over the conv-padded grid
    ml1_ref  : (1, L1)        f32    validity mask over the guarded h1 window
    pre1_ref : (1, Cout, L1)  bf16   conv1 pre-activations (guarded window)
    presc_ref: (1, Cout, Lwin)bf16   shortcut pre-activations
    s*,q*    : (1, Cout, 1)   f32    per-megacore-part sum / sum(x^2) accumulators
    """
    @pl.when(pl.program_id(1) == 0)
    def _():
        s1_ref[...] = jnp.zeros_like(s1_ref)
        q1_ref[...] = jnp.zeros_like(q1_ref)
        ss_ref[...] = jnp.zeros_like(ss_ref)
        qs_ref[...] = jnp.zeros_like(qs_ref)

    # main 3x3 branch: 9 shifted MXU dots, f32 accumulation, bf16 store.
    acc = _conv_acc(x_ref, w_ref, taps, l1)
    pre1_ref[0] = acc.astype(pre1_ref.dtype)
    m1 = ml1_ref[...]
    am = acc * m1
    s1_ref[0] += jnp.sum(am, axis=1, keepdims=True)
    q1_ref[0] += jnp.sum(acc * am, axis=1, keepdims=True)

    # 1x1 projection shortcut: a single center-tap dot (x stays in VMEM).
    acc_s = jnp.dot(ws_ref[...], x_ref[0, :, ctr:ctr + lwin],
                    preferred_element_type=jnp.float32)
    presc_ref[0] = acc_s.astype(presc_ref.dtype)
    mw = mwin_ref[...]
    ams = acc_s * mw
    ss_ref[0] += jnp.sum(ams, axis=1, keepdims=True)
    qs_ref[0] += jnp.sum(acc_s * ams, axis=1, keepdims=True)


def _conv2_kernel(h_ref, w_ref, mwin_ref, pre_ref, s_ref, q_ref, *, taps, lwin):
    """Pass A (stage 2): conv2 (3x3) over the zero-padded h1 buffer + BN stats."""
    @pl.when(pl.program_id(1) == 0)
    def _():
        s_ref[...] = jnp.zeros_like(s_ref)
        q_ref[...] = jnp.zeros_like(q_ref)

    acc = _conv_acc(h_ref, w_ref, taps, lwin)
    pre_ref[0] = acc.astype(pre_ref.dtype)
    m = mwin_ref[...]
    am = acc * m
    s_ref[0] += jnp.sum(am, axis=1, keepdims=True)
    q_ref[0] += jnp.sum(acc * am, axis=1, keepdims=True)


def _bn1_relu_kernel(pre_ref, k_ref, b_ref, ml1_ref, h_ref):
    """Pass B (stage 1): BN1 + ReLU + mask -> guarded bf16 h1 buffer (conv2 input)."""
    h = pre_ref[0].astype(jnp.float32) * k_ref[...] + b_ref[...]
    h = jnp.maximum(h, 0.0) * ml1_ref[...]
    h_ref[0] = h.astype(h_ref.dtype)


def _bn2_add_relu_kernel(pre2_ref, presc_ref, k2_ref, b2_ref, ks_ref, bs_ref, o_ref):
    """Pass B (stage 2): BN2 + BN(shortcut) + add + ReLU, all in f32."""
    h2 = pre2_ref[0].astype(jnp.float32) * k2_ref[...] + b2_ref[...]
    idn = presc_ref[0].astype(jnp.float32) * ks_ref[...] + bs_ref[...]
    o_ref[0] = jnp.maximum(h2 + idn, 0.0).astype(o_ref.dtype)


# ------------------------------ pallas_call glue ------------------------------- #

def _conv1_pass(x_buf, w1, ws, mask_win, mask_l1, cout, lwin, l1, taps, ctr, parts):
    n, cin, l0 = x_buf.shape
    per = n // parts
    img = lambda p, i: (p * per + i, 0, 0)
    full3 = lambda p, i: (0, 0, 0)
    full2 = lambda p, i: (0, 0)
    stat = lambda p, i: (p, 0, 0)
    flops = 2 * n * cin * cout * (9 * l1 + lwin)
    bytes_acc = (x_buf.size * 2 + w1.size * 2 + ws.size * 2
                 + n * cout * (l1 + lwin) * 2 + 4 * parts * cout * 4)
    kern = functools.partial(_conv1_kernel, taps=taps, l1=l1, lwin=lwin, ctr=ctr)
    return pl.pallas_call(
        kern,
        out_shape=(jax.ShapeDtypeStruct((n, cout, l1), jnp.bfloat16),
                   jax.ShapeDtypeStruct((n, cout, lwin), jnp.bfloat16),
                   jax.ShapeDtypeStruct((parts, cout, 1), jnp.float32),
                   jax.ShapeDtypeStruct((parts, cout, 1), jnp.float32),
                   jax.ShapeDtypeStruct((parts, cout, 1), jnp.float32),
                   jax.ShapeDtypeStruct((parts, cout, 1), jnp.float32)),
        grid=(parts, per),
        in_specs=[pl.BlockSpec((1, cin, l0), img),
                  pl.BlockSpec((9, cout, cin), full3),
                  pl.BlockSpec((cout, cin), full2),
                  pl.BlockSpec((1, lwin), full2),
                  pl.BlockSpec((1, l1), full2)],
        out_specs=(pl.BlockSpec((1, cout, l1), img),
                   pl.BlockSpec((1, cout, lwin), img),
                   pl.BlockSpec((1, cout, 1), stat),
                   pl.BlockSpec((1, cout, 1), stat),
                   pl.BlockSpec((1, cout, 1), stat),
                   pl.BlockSpec((1, cout, 1), stat)),
        compiler_params=_cparams(("parallel", "arbitrary")),
        cost_estimate=pl.CostEstimate(flops=flops, transcendentals=0,
                                      bytes_accessed=bytes_acc),
    )(x_buf, w1, ws, mask_win, mask_l1)


def _conv2_pass(h_buf, w2, mask_win, cout, lwin, taps, parts):
    n, _, l1 = h_buf.shape
    per = n // parts
    img = lambda p, i: (p * per + i, 0, 0)
    full3 = lambda p, i: (0, 0, 0)
    full2 = lambda p, i: (0, 0)
    stat = lambda p, i: (p, 0, 0)
    flops = 2 * n * 9 * cout * cout * lwin
    bytes_acc = h_buf.size * 2 + w2.size * 2 + n * cout * lwin * 2 + 2 * parts * cout * 4
    kern = functools.partial(_conv2_kernel, taps=taps, lwin=lwin)
    return pl.pallas_call(
        kern,
        out_shape=(jax.ShapeDtypeStruct((n, cout, lwin), jnp.bfloat16),
                   jax.ShapeDtypeStruct((parts, cout, 1), jnp.float32),
                   jax.ShapeDtypeStruct((parts, cout, 1), jnp.float32)),
        grid=(parts, per),
        in_specs=[pl.BlockSpec((1, cout, l1), img),
                  pl.BlockSpec((9, cout, cout), full3),
                  pl.BlockSpec((1, lwin), full2)],
        out_specs=(pl.BlockSpec((1, cout, lwin), img),
                   pl.BlockSpec((1, cout, 1), stat),
                   pl.BlockSpec((1, cout, 1), stat)),
        compiler_params=_cparams(("parallel", "arbitrary")),
        cost_estimate=pl.CostEstimate(flops=flops, transcendentals=0,
                                      bytes_accessed=bytes_acc),
    )(h_buf, w2, mask_win)


def _bn1_pass(pre1, k1, b1, mask_l1):
    n, cout, l1 = pre1.shape
    return pl.pallas_call(
        _bn1_relu_kernel,
        out_shape=jax.ShapeDtypeStruct((n, cout, l1), jnp.bfloat16),
        grid=(n,),
        in_specs=[pl.BlockSpec((1, cout, l1), lambda i: (i, 0, 0)),
                  pl.BlockSpec((cout, 1), lambda i: (0, 0)),
                  pl.BlockSpec((cout, 1), lambda i: (0, 0)),
                  pl.BlockSpec((1, l1), lambda i: (0, 0))],
        out_specs=pl.BlockSpec((1, cout, l1), lambda i: (i, 0, 0)),
        compiler_params=_cparams(("parallel",)),
        cost_estimate=pl.CostEstimate(flops=4 * n * cout * l1, transcendentals=0,
                                      bytes_accessed=4 * n * cout * l1),
    )(pre1, k1, b1, mask_l1)


def _bn2_pass(pre2, presc, k2, b2, ks, bs):
    n, cout, lwin = pre2.shape
    return pl.pallas_call(
        _bn2_add_relu_kernel,
        out_shape=jax.ShapeDtypeStruct((n, cout, lwin), jnp.float32),
        grid=(n,),
        in_specs=[pl.BlockSpec((1, cout, lwin), lambda i: (i, 0, 0)),
                  pl.BlockSpec((1, cout, lwin), lambda i: (i, 0, 0)),
                  pl.BlockSpec((cout, 1), lambda i: (0, 0)),
                  pl.BlockSpec((cout, 1), lambda i: (0, 0)),
                  pl.BlockSpec((cout, 1), lambda i: (0, 0)),
                  pl.BlockSpec((cout, 1), lambda i: (0, 0))],
        out_specs=pl.BlockSpec((1, cout, lwin), lambda i: (i, 0, 0)),
        compiler_params=_cparams(("parallel",)),
        cost_estimate=pl.CostEstimate(flops=6 * n * cout * lwin, transcendentals=0,
                                      bytes_accessed=8 * n * cout * lwin),
    )(pre2, presc, k2, b2, ks, bs)


# ----------------------------- wrapper-side glue ------------------------------- #

def _bn_affine(s_parts, q_parts, gamma, beta, count):
    """Fold global (train-mode) BN statistics into per-channel scale/shift (f32)."""
    s = jnp.sum(s_parts, axis=0)                       # (Cout, 1)
    q = jnp.sum(q_parts, axis=0)
    mean = s / count
    var = jnp.maximum(q / count - mean * mean, 0.0)    # guard f32 cancellation
    scale = gamma.reshape(-1, 1) * jax.lax.rsqrt(var + EPS)
    shift = beta.reshape(-1, 1) - mean * scale
    return scale, shift


@jax.jit
def rblock_pallas(x, p):
    n, cin, h, w = x.shape
    cout = p["w1"].shape[-1]
    hp, wp = h + 2, w + 2
    lwin = hp * wp                       # conv-padded grid, flattened per image
    g = wp + 1                           # halo guard (max tap offset)
    l1 = lwin + 2 * g                    # guarded h1 window length
    taps = tuple(kh * wp + kw for kh in range(3) for kw in range(3))
    ctr = 2 * g                          # center-tap base for the 1x1 shortcut
    m = n * h * w
    parts = 2 if (n >= 2 and n % 2 == 0) else 1   # megacore split of pass A

    # Guarded, conv-padded, per-image-flattened input (the only XLA-side prep).
    xpad = jnp.pad(x, ((0, 0), (0, 0), (1, 1), (1, 1)))            # (N,Cin,Hp,Wp)
    x_buf = jnp.pad(xpad.reshape(n, cin, lwin),
                    ((0, 0), (0, 0), (2 * g, 2 * g))).astype(jnp.bfloat16)

    # Validity masks (zero padding ring / guard positions in stats and h1).
    mask_win = jnp.zeros((hp, wp), jnp.float32).at[1:h + 1, 1:w + 1].set(1.0)
    mask_win = mask_win.reshape(1, lwin)
    mask_l1 = jnp.pad(mask_win, ((0, 0), (g, g)))                  # (1, L1)

    # Weights as (tap, Cout, Cin) bf16 MXU lhs operands.
    w1 = jnp.transpose(p["w1"], (0, 1, 3, 2)).reshape(9, cout, cin).astype(jnp.bfloat16)
    ws = jnp.transpose(p["ws"][0, 0]).astype(jnp.bfloat16)          # (Cout, Cin)
    w2 = jnp.transpose(p["w2"], (0, 1, 3, 2)).reshape(9, cout, cout).astype(jnp.bfloat16)

    # ---- pass A1: conv1 + 1x1 shortcut + global BN stats ----------------------
    pre1, presc, s1, q1, ss, qs = _conv1_pass(
        x_buf, w1, ws, mask_win, mask_l1, cout, lwin, l1, taps, ctr, parts)
    k1, b1 = _bn_affine(s1, q1, p["g1"], p["b1"], m)
    ks, bs = _bn_affine(ss, qs, p["gs"], p["bs"], m)

    # ---- pass B1: BN1 + ReLU -> zero-padded, guarded bf16 h1 buffer ------------
    h1_buf = _bn1_pass(pre1, k1, b1, mask_l1)          # (N, Cout, L1)

    # ---- pass A2: conv2 + global BN stats --------------------------------------
    pre2, s2, q2 = _conv2_pass(h1_buf, w2, mask_win, cout, lwin, taps, parts)
    k2, b2 = _bn_affine(s2, q2, p["g2"], p["b2"], m)

    # ---- pass B2: BN2 + BN(shortcut) + add + ReLU -------------------------------
    out_win = _bn2_pass(pre2, presc, k2, b2, ks, bs)   # (N, Cout, Lwin) f32

    # Crop the conv-padding ring (reshape is free; the slice is the only relayout).
    return out_win.reshape(n, cout, hp, wp)[:, :, 1:h + 1, 1:w + 1]


# -------------------------------- params / reference --------------------------- #

def init_params(key, cin, cout):
    ks = jax.random.split(key, 9)
    return {
        "w1": jax.random.normal(ks[0], (3, 3, cin, cout), jnp.float32) / np.sqrt(9 * cin),
        "w2": jax.random.normal(ks[1], (3, 3, cout, cout), jnp.float32) / np.sqrt(9 * cout),
        "ws": jax.random.normal(ks[2], (1, 1, cin, cout), jnp.float32) / np.sqrt(cin),
        "g1": 1.0 + 0.1 * jax.random.normal(ks[3], (cout,), jnp.float32),
        "b1": 0.1 * jax.random.normal(ks[4], (cout,), jnp.float32),
        "g2": 1.0 + 0.1 * jax.random.normal(ks[5], (cout,), jnp.float32),
        "b2": 0.1 * jax.random.normal(ks[6], (cout,), jnp.float32),
        "gs": 1.0 + 0.1 * jax.random.normal(ks[7], (cout,), jnp.float32),
        "bs": 0.1 * jax.random.normal(ks[8], (cout,), jnp.float32),
    }


def _bn_train(x_nhwc, g, b):
    mean = jnp.mean(x_nhwc, axis=(0, 1, 2), keepdims=True)
    var = jnp.mean((x_nhwc - mean) ** 2, axis=(0, 1, 2), keepdims=True)
    return (x_nhwc - mean) * jax.lax.rsqrt(var + EPS) * g + b


def _conv_nhwc(x, w_hwio, pad):
    return jax.lax.conv_general_dilated(
        x, w_hwio, (1, 1), [(pad, pad), (pad, pad)],
        dimension_numbers=("NHWC", "HWIO", "NHWC"))


def rblock_ref(x_nchw, p):
    x = jnp.transpose(x_nchw, (0, 2, 3, 1))
    out = _conv_nhwc(x, p["w1"], 1)
    out = _bn_train(out, p["g1"], p["b1"])
    out = jnp.maximum(out, 0.0)
    out = _conv_nhwc(out, p["w2"], 1)
    out = _bn_train(out, p["g2"], p["b2"])
    identity = _conv_nhwc(x, p["ws"], 0)
    identity = _bn_train(identity, p["gs"], p["bs"])
    out = jnp.maximum(out + identity, 0.0)
    return jnp.transpose(out, (0, 3, 1, 2))


# ------------------------------------ main -------------------------------------- #

if __name__ == "__main__":
    key = jax.random.PRNGKey(0)
    kx, kp = jax.random.split(key)

    N, Cin, Cout, H, W = 2, 4, 8, 16, 16     # Cin != Cout -> projection shortcut
    x = jax.random.normal(kx, (N, Cin, H, W), jnp.float32)
    params = init_params(kp, Cin, Cout)

    out = jax.block_until_ready(rblock_pallas(x, params))

    ref = rblock_ref(x, params)
    assert out.shape == (N, Cout, H, W), out.shape
    # Tolerance accounts for bf16 MXU operands and bf16 pre-activation storage;
    # BN statistics and all normalization math stay in f32.
    np.testing.assert_allclose(np.asarray(out), np.asarray(ref),
                               rtol=5e-2, atol=5e-2)
    print("KERNEL_OK")
</pallas_src>

<mosaic_0001>
module attributes {stable_mosaic.version = 11 : i64} {
  func.func @_conv1_kernel(%arg0: i32, %arg1: i32, %arg2: memref<1x4x400xbf16, #tpu.memory_space<vmem>>, %arg3: memref<9x8x4xbf16, #tpu.memory_space<vmem>>, %arg4: memref<8x4xbf16, #tpu.memory_space<vmem>>, %arg5: memref<1x324xf32, #tpu.memory_space<vmem>>, %arg6: memref<1x362xf32, #tpu.memory_space<vmem>>, %arg7: memref<1x8x362xbf16, #tpu.memory_space<vmem>>, %arg8: memref<1x8x324xbf16, #tpu.memory_space<vmem>>, %arg9: memref<1x8x1xf32, #tpu.memory_space<vmem>>, %arg10: memref<1x8x1xf32, #tpu.memory_space<vmem>>, %arg11: memref<1x8x1xf32, #tpu.memory_space<vmem>>, %arg12: memref<1x8x1xf32, #tpu.memory_space<vmem>>) attributes {dimension_semantics = [#tpu.dimension_semantics<parallel>, #tpu.dimension_semantics<arbitrary>], iteration_bounds = array<i64: 2, 1>, scalar_prefetch = 0 : i64, scratch_operands = 0 : i64, tpu.core_type = #tpu.core_type<tc>, window_params = [{transform_indices = @transform_0, window_bounds = array<i64: 1, 4, 400>}, {pipeline_mode = #tpu.pipeline_mode<synchronous>, transform_indices = @transform_1, window_bounds = array<i64: 9, 8, 4>}, {pipeline_mode = #tpu.pipeline_mode<synchronous>, transform_indices = @transform_2, window_bounds = array<i64: 8, 4>}, {pipeline_mode = #tpu.pipeline_mode<synchronous>, transform_indices = @transform_3, window_bounds = array<i64: 1, 324>}, {pipeline_mode = #tpu.pipeline_mode<synchronous>, transform_indices = @transform_4, window_bounds = array<i64: 1, 362>}, {transform_indices = @transform_5, window_bounds = array<i64: 1, 8, 362>}, {transform_indices = @transform_6, window_bounds = array<i64: 1, 8, 324>}, {transform_indices = @transform_7, window_bounds = array<i64: 1, 8, 1>}, {transform_indices = @transform_8, window_bounds = array<i64: 1, 8, 1>}, {transform_indices = @transform_9, window_bounds = array<i64: 1, 8, 1>}, {transform_indices = @transform_10, window_bounds = array<i64: 1, 8, 1>}]} {
    %c0_i32 = arith.constant 0 : i32
    %0 = arith.cmpi eq, %arg1, %c0_i32 : i32
    %1 = arith.extui %0 : i1 to i32
    %c0_i32_0 = arith.constant 0 : i32
    %2 = arith.cmpi ne, %1, %c0_i32_0 : i32
    scf.if %2 {
      %cst_92 = arith.constant 0.000000e+00 : f32
      %108 = vector.broadcast %cst_92 : f32 to vector<1x8x1xf32>
      %c0_93 = arith.constant 0 : index
      %c0_94 = arith.constant 0 : index
      %c0_95 = arith.constant 0 : index
      %109 = vector.load %arg9[%c0_93, %c0_94, %c0_95] : memref<1x8x1xf32, #tpu.memory_space<vmem>>, vector<1x8x1xf32>
      tpu.vector_store %arg9[%c0_93, %c0_94, %c0_95], %108 {strides = array<i32>} : memref<1x8x1xf32, #tpu.memory_space<vmem>>, vector<1x8x1xf32>,
      %cst_96 = arith.constant 0.000000e+00 : f32
      %110 = vector.broadcast %cst_96 : f32 to vector<1x8x1xf32>
      %c0_97 = arith.constant 0 : index
      %c0_98 = arith.constant 0 : index
      %c0_99 = arith.constant 0 : index
      %111 = vector.load %arg10[%c0_97, %c0_98, %c0_99] : memref<1x8x1xf32, #tpu.memory_space<vmem>>, vector<1x8x1xf32>
      tpu.vector_store %arg10[%c0_97, %c0_98, %c0_99], %110 {strides = array<i32>} : memref<1x8x1xf32, #tpu.memory_space<vmem>>, vector<1x8x1xf32>,
      %cst_100 = arith.constant 0.000000e+00 : f32
      %112 = vector.broadcast %cst_100 : f32 to vector<1x8x1xf32>
      %c0_101 = arith.constant 0 : index
      %c0_102 = arith.constant 0 : index
      %c0_103 = arith.constant 0 : index
      %113 = vector.load %arg11[%c0_101, %c0_102, %c0_103] : memref<1x8x1xf32, #tpu.memory_space<vmem>>, vector<1x8x1xf32>
      tpu.vector_store %arg11[%c0_101, %c0_102, %c0_103], %112 {strides = array<i32>} : memref<1x8x1xf32, #tpu.memory_space<vmem>>, vector<1x8x1xf32>,
      %cst_104 = arith.constant 0.000000e+00 : f32
      %114 = vector.broadcast %cst_104 : f32 to vector<1x8x1xf32>
      %c0_105 = arith.constant 0 : index
      %c0_106 = arith.constant 0 : index
      %c0_107 = arith.constant 0 : index
      %115 = vector.load %arg12[%c0_105, %c0_106, %c0_107] : memref<1x8x1xf32, #tpu.memory_space<vmem>>, vector<1x8x1xf32>
      tpu.vector_store %arg12[%c0_105, %c0_106, %c0_107], %114 {strides = array<i32>} : memref<1x8x1xf32, #tpu.memory_space<vmem>>, vector<1x8x1xf32>,
    } else {
    }
    %c0 = arith.constant 0 : index
    %c0_1 = arith.constant 0 : index
    %c0_2 = arith.constant 0 : index
    %3 = vector.load %arg3[%c0, %c0_1, %c0_2] : memref<9x8x4xbf16, #tpu.memory_space<vmem>>, vector<1x8x4xbf16>
    %4 = vector.shape_cast %3 : vector<1x8x4xbf16> to vector<8x4xbf16>
    %c0_3 = arith.constant 0 : index
    %c0_4 = arith.constant 0 : index
    %c0_5 = arith.constant 0 : index
    %5 = vector.load %arg2[%c0_3, %c0_4, %c0_5] : memref<1x4x400xbf16, #tpu.memory_space<vmem>>, vector<1x4x362xbf16>
    %6 = vector.shape_cast %5 : vector<1x4x362xbf16> to vector<4x362xbf16>
    %cst = arith.constant dense<0.000000e+00> : vector<8x362xf32>
    %7 = tpu.matmul %4, %6, %cst {dimension_numbers = #tpu.dot_dimension_numbers<[1], [0], [0], [1], [0, 0, 1, 1], [], []>} : vector<8x4xbf16>, vector<4x362xbf16>, vector<8x362xf32> -> vector<8x362xf32>
    %c1 = arith.constant 1 : index
    %c0_6 = arith.constant 0 : index
    %c0_7 = arith.constant 0 : index
    %8 = vector.load %arg3[%c1, %c0_6, %c0_7] : memref<9x8x4xbf16, #tpu.memory_space<vmem>>, vector<1x8x4xbf16>
    %9 = vector.shape_cast %8 : vector<1x8x4xbf16> to vector<8x4xbf16>
    %c0_8 = arith.constant 0 : index
    %c0_9 = arith.constant 0 : index
    %c1_10 = arith.constant 1 : index
    %10 = vector.load %arg2[%c0_8, %c0_9, %c1_10] : memref<1x4x400xbf16, #tpu.memory_space<vmem>>, vector<1x4x362xbf16>
    %11 = vector.shape_cast %10 : vector<1x4x362xbf16> to vector<4x362xbf16>
    %cst_11 = arith.constant dense<0.000000e+00> : vector<8x362xf32>
    %12 = tpu.matmul %9, %11, %cst_11 {dimension_numbers = #tpu.dot_dimension_numbers<[1], [0], [0], [1], [0, 0, 1, 1], [], []>} : vector<8x4xbf16>, vector<4x362xbf16>, vector<8x362xf32> -> vector<8x362xf32>
    %13 = arith.addf %7, %12 : vector<8x362xf32>
    %c2 = arith.constant 2 : index
    %c0_12 = arith.constant 0 : index
    %c0_13 = arith.constant 0 : index
    %14 = vector.load %arg3[%c2, %c0_12, %c0_13] : memref<9x8x4xbf16, #tpu.memory_space<vmem>>, vector<1x8x4xbf16>
    %15 = vector.shape_cast %14 : vector<1x8x4xbf16> to vector<8x4xbf16>
    %c0_14 = arith.constant 0 : index
    %c0_15 = arith.constant 0 : index
    %c2_16 = arith.constant 2 : index
    %16 = vector.load %arg2[%c0_14, %c0_15, %c2_16] : memref<1x4x400xbf16, #tpu.memory_space<vmem>>, vector<1x4x362xbf16>
    %17 = vector.shape_cast %16 : vector<1x4x362xbf16> to vector<4x362xbf16>
    %cst_17 = arith.constant dense<0.000000e+00> : vector<8x362xf32>
    %18 = tpu.matmul %15, %17, %cst_17 {dimension_numbers = #tpu.dot_dimension_numbers<[1], [0], [0], [1], [0, 0, 1, 1], [], []>} : vector<8x4xbf16>, vector<4x362xbf16>, vector<8x362xf32> -> vector<8x362xf32>
    %19 = arith.addf %13, %18 : vector<8x362xf32>
    %c3 = arith.constant 3 : index
    %c0_18 = arith.constant 0 : index
    %c0_19 = arith.constant 0 : index
    %20 = vector.load %arg3[%c3, %c0_18, %c0_19] : memref<9x8x4xbf16, #tpu.memory_space<vmem>>, vector<1x8x4xbf16>
    %21 = vector.shape_cast %20 : vector<1x8x4xbf16> to vector<8x4xbf16>
    %c0_20 = arith.constant 0 : index
    %c0_21 = arith.constant 0 : index
    %c18 = arith.constant 18 : index
    %22 = vector.load %arg2[%c0_20, %c0_21, %c18] : memref<1x4x400xbf16, #tpu.memory_space<vmem>>, vector<1x4x362xbf16>
    %23 = vector.shape_cast %22 : vector<1x4x362xbf16> to vector<4x362xbf16>
    %cst_22 = arith.constant dense<0.000000e+00> : vector<8x362xf32>
    %24 = tpu.matmul %21, %23, %cst_22 {dimension_numbers = #tpu.dot_dimension_numbers<[1], [0], [0], [1], [0, 0, 1, 1], [], []>} : vector<8x4xbf16>, vector<4x362xbf16>, vector<8x362xf32> -> vector<8x362xf32>
    %25 = arith.addf %19, %24 : vector<8x362xf32>
    %c4 = arith.constant 4 : index
    %c0_23 = arith.constant 0 : index
    %c0_24 = arith.constant 0 : index
    %26 = vector.load %arg3[%c4, %c0_23, %c0_24] : memref<9x8x4xbf16, #tpu.memory_space<vmem>>, vector<1x8x4xbf16>
    %27 = vector.shape_cast %26 : vector<1x8x4xbf16> to vector<8x4xbf16>
    %c0_25 = arith.constant 0 : index
    %c0_26 = arith.constant 0 : index
    %c19 = arith.constant 19 : index
    %28 = vector.load %arg2[%c0_25, %c0_26, %c19] : memref<1x4x400xbf16, #tpu.memory_space<vmem>>, vector<1x4x362xbf16>
    %29 = vector.shape_cast %28 : vector<1x4x362xbf16> to vector<4x362xbf16>
    %cst_27 = arith.constant dense<0.000000e+00> : vector<8x362xf32>
    %30 = tpu.matmul %27, %29, %cst_27 {dimension_numbers = #tpu.dot_dimension_numbers<[1], [0], [0], [1], [0, 0, 1, 1], [], []>} : vector<8x4xbf16>, vector<4x362xbf16>, vector<8x362xf32> -> vector<8x362xf32>
    %31 = arith.addf %25, %30 : vector<8x362xf32>
    %c5 = arith.constant 5 : index
    %c0_28 = arith.constant 0 : index
    %c0_29 = arith.constant 0 : index
    %32 = vector.load %arg3[%c5, %c0_28, %c0_29] : memref<9x8x4xbf16, #tpu.memory_space<vmem>>, vector<1x8x4xbf16>
    %33 = vector.shape_cast %32 : vector<1x8x4xbf16> to vector<8x4xbf16>
    %c0_30 = arith.constant 0 : index
    %c0_31 = arith.constant 0 : index
    %c20 = arith.constant 20 : index
    %34 = vector.load %arg2[%c0_30, %c0_31, %c20] : memref<1x4x400xbf16, #tpu.memory_space<vmem>>, vector<1x4x362xbf16>
    %35 = vector.shape_cast %34 : vector<1x4x362xbf16> to vector<4x362xbf16>
    %cst_32 = arith.constant dense<0.000000e+00> : vector<8x362xf32>
    %36 = tpu.matmul %33, %35, %cst_32 {dimension_numbers = #tpu.dot_dimension_numbers<[1], [0], [0], [1], [0, 0, 1, 1], [], []>} : vector<8x4xbf16>, vector<4x362xbf16>, vector<8x362xf32> -> vector<8x362xf32>
    %37 = arith.addf %31, %36 : vector<8x362xf32>
    %c6 = arith.constant 6 : index
    %c0_33 = arith.constant 0 : index
    %c0_34 = arith.constant 0 : index
    %38 = vector.load %arg3[%c6, %c0_33, %c0_34] : memref<9x8x4xbf16, #tpu.memory_space<vmem>>, vector<1x8x4xbf16>
    %39 = vector.shape_cast %38 : vector<1x8x4xbf16> to vector<8x4xbf16>
    %c0_35 = arith.constant 0 : index
    %c0_36 = arith.constant 0 : index
    %c36 = arith.constant 36 : index
    %40 = vector.load %arg2[%c0_35, %c0_36, %c36] : memref<1x4x400xbf16, #tpu.memory_space<vmem>>, vector<1x4x362xbf16>
    %41 = vector.shape_cast %40 : vector<1x4x362xbf16> to vector<4x362xbf16>
    %cst_37 = arith.constant dense<0.000000e+00> : vector<8x362xf32>
    %42 = tpu.matmul %39, %41, %cst_37 {dimension_numbers = #tpu.dot_dimension_numbers<[1], [0], [0], [1], [0, 0, 1, 1], [], []>} : vector<8x4xbf16>, vector<4x362xbf16>, vector<8x362xf32> -> vector<8x362xf32>
    %43 = arith.addf %37, %42 : vector<8x362xf32>
    %c7 = arith.constant 7 : index
    %c0_38 = arith.constant 0 : index
    %c0_39 = arith.constant 0 : index
    %44 = vector.load %arg3[%c7, %c0_38, %c0_39] : memref<9x8x4xbf16, #tpu.memory_space<vmem>>, vector<1x8x4xbf16>
    %45 = vector.shape_cast %44 : vector<1x8x4xbf16> to vector<8x4xbf16>
    %c0_40 = arith.constant 0 : index
    %c0_41 = arith.constant 0 : index
    %c37 = arith.constant 37 : index
    %46 = vector.load %arg2[%c0_40, %c0_41, %c37] : memref<1x4x400xbf16, #tpu.memory_space<vmem>>, vector<1x4x362xbf16>
    %47 = vector.shape_cast %46 : vector<1x4x362xbf16> to vector<4x362xbf16>
    %cst_42 = arith.constant dense<0.000000e+00> : vector<8x362xf32>
    %48 = tpu.matmul %45, %47, %cst_42 {dimension_numbers = #tpu.dot_dimension_numbers<[1], [0], [0], [1], [0, 0, 1, 1], [], []>} : vector<8x4xbf16>, vector<4x362xbf16>, vector<8x362xf32> -> vector<8x362xf32>
    %49 = arith.addf %43, %48 : vector<8x362xf32>
    %c8 = arith.constant 8 : index
    %c0_43 = arith.constant 0 : index
    %c0_44 = arith.constant 0 : index
    %50 = vector.load %arg3[%c8, %c0_43, %c0_44] : memref<9x8x4xbf16, #tpu.memory_space<vmem>>, vector<1x8x4xbf16>
    %51 = vector.shape_cast %50 : vector<1x8x4xbf16> to vector<8x4xbf16>
    %c0_45 = arith.constant 0 : index
    %c0_46 = arith.constant 0 : index
    %c38 = arith.constant 38 : index
    %52 = vector.load %arg2[%c0_45, %c0_46, %c38] : memref<1x4x400xbf16, #tpu.memory_space<vmem>>, vector<1x4x362xbf16>
    %53 = vector.shape_cast %52 : vector<1x4x362xbf16> to vector<4x362xbf16>
    %cst_47 = arith.constant dense<0.000000e+00> : vector<8x362xf32>
    %54 = tpu.matmul %51, %53, %cst_47 {dimension_numbers = #tpu.dot_dimension_numbers<[1], [0], [0], [1], [0, 0, 1, 1], [], []>} : vector<8x4xbf16>, vector<4x362xbf16>, vector<8x362xf32> -> vector<8x362xf32>
    %55 = arith.addf %49, %54 : vector<8x362xf32>
    %56 = arith.truncf %55 : vector<8x362xf32> to vector<8x362xbf16>
    %c0_48 = arith.constant 0 : index
    %c0_49 = arith.constant 0 : index
    %c0_50 = arith.constant 0 : index
    %57 = vector.load %arg7[%c0_48, %c0_49, %c0_50] : memref<1x8x362xbf16, #tpu.memory_space<vmem>>, vector<1x8x362xbf16>
    %58 = vector.shape_cast %57 : vector<1x8x362xbf16> to vector<8x362xbf16>
    %59 = vector.shape_cast %56 : vector<8x362xbf16> to vector<1x8x362xbf16>
    tpu.vector_store %arg7[%c0_48, %c0_49, %c0_50], %59 {strides = array<i32>} : memref<1x8x362xbf16, #tpu.memory_space<vmem>>, vector<1x8x362xbf16>,
    %c0_51 = arith.constant 0 : index
    %c0_52 = arith.constant 0 : index
    %60 = vector.load %arg6[%c0_51, %c0_52] : memref<1x362xf32, #tpu.memory_space<vmem>>, vector<1x362xf32>
    %61 = vector.broadcast %60 : vector<1x362xf32> to vector<8x362xf32>
    %62 = arith.mulf %55, %61 : vector<8x362xf32>
    %c0_53 = arith.constant 0 : index
    %c0_54 = arith.constant 0 : index
    %c0_55 = arith.constant 0 : index
    %63 = vector.load %arg9[%c0_53, %c0_54, %c0_55] : memref<1x8x1xf32, #tpu.memory_space<vmem>>, vector<1x8x1xf32>
    %64 = vector.shape_cast %63 : vector<1x8x1xf32> to vector<8x1xf32>
    %cst_56 = arith.constant dense<0.000000e+00> : vector<8xf32>
    %65 = vector.multi_reduction <add>, %62, %cst_56 [1] : vector<8x362xf32> to vector<8xf32>
    %66 = vector.shape_cast %65 : vector<8xf32> to vector<8x1xf32>
    %67 = arith.addf %64, %66 : vector<8x1xf32>
    %c0_57 = arith.constant 0 : index
    %c0_58 = arith.constant 0 : index
    %c0_59 = arith.constant 0 : index
    %68 = vector.load %arg9[%c0_57, %c0_58, %c0_59] : memref<1x8x1xf32, #tpu.memory_space<vmem>>, vector<1x8x1xf32>
    %69 = vector.shape_cast %68 : vector<1x8x1xf32> to vector<8x1xf32>
    %70 = vector.shape_cast %67 : vector<8x1xf32> to vector<1x8x1xf32>
    tpu.vector_store %arg9[%c0_57, %c0_58, %c0_59], %70 {strides = array<i32>} : memref<1x8x1xf32, #tpu.memory_space<vmem>>, vector<1x8x1xf32>,
    %c0_60 = arith.constant 0 : index
    %c0_61 = arith.constant 0 : index
    %c0_62 = arith.constant 0 : index
    %71 = vector.load %arg10[%c0_60, %c0_61, %c0_62] : memref<1x8x1xf32, #tpu.memory_space<vmem>>, vector<1x8x1xf32>
    %72 = vector.shape_cast %71 : vector<1x8x1xf32> to vector<8x1xf32>
    %73 = arith.mulf %55, %62 : vector<8x362xf32>
    %cst_63 = arith.constant dense<0.000000e+00> : vector<8xf32>
    %74 = vector.multi_reduction <add>, %73, %cst_63 [1] : vector<8x362xf32> to vector<8xf32>
    %75 = vector.shape_cast %74 : vector<8xf32> to vector<8x1xf32>
    %76 = arith.addf %72, %75 : vector<8x1xf32>
    %c0_64 = arith.constant 0 : index
    %c0_65 = arith.constant 0 : index
    %c0_66 = arith.constant 0 : index
    %77 = vector.load %arg10[%c0_64, %c0_65, %c0_66] : memref<1x8x1xf32, #tpu.memory_space<vmem>>, vector<1x8x1xf32>
    %78 = vector.shape_cast %77 : vector<1x8x1xf32> to vector<8x1xf32>
    %79 = vector.shape_cast %76 : vector<8x1xf32> to vector<1x8x1xf32>
    tpu.vector_store %arg10[%c0_64, %c0_65, %c0_66], %79 {strides = array<i32>} : memref<1x8x1xf32, #tpu.memory_space<vmem>>, vector<1x8x1xf32>,
    %c0_67 = arith.constant 0 : index
    %c0_68 = arith.constant 0 : index
    %80 = vector.load %arg4[%c0_67, %c0_68] : memref<8x4xbf16, #tpu.memory_space<vmem>>, vector<8x4xbf16>
    %c0_69 = arith.constant 0 : index
    %c0_70 = arith.constant 0 : index
    %c38_71 = arith.constant 38 : index
    %81 = vector.load %arg2[%c0_69, %c0_70, %c38_71] : memref<1x4x400xbf16, #tpu.memory_space<vmem>>, vector<1x4x324xbf16>
    %82 = vector.shape_cast %81 : vector<1x4x324xbf16> to vector<4x324xbf16>
    %cst_72 = arith.constant dense<0.000000e+00> : vector<8x324xf32>
    %83 = tpu.matmul %80, %82, %cst_72 {dimension_numbers = #tpu.dot_dimension_numbers<[1], [0], [0], [1], [0, 0, 1, 1], [], []>} : vector<8x4xbf16>, vector<4x324xbf16>, vector<8x324xf32> -> vector<8x324xf32>
    %84 = arith.truncf %83 : vector<8x324xf32> to vector<8x324xbf16>
    %c0_73 = arith.constant 0 : index
    %c0_74 = arith.constant 0 : index
    %c0_75 = arith.constant 0 : index
    %85 = vector.load %arg8[%c0_73, %c0_74, %c0_75] : memref<1x8x324xbf16, #tpu.memory_space<vmem>>, vector<1x8x324xbf16>
    %86 = vector.shape_cast %85 : vector<1x8x324xbf16> to vector<8x324xbf16>
    %87 = vector.shape_cast %84 : vector<8x324xbf16> to vector<1x8x324xbf16>
    tpu.vector_store %arg8[%c0_73, %c0_74, %c0_75], %87 {strides = array<i32>} : memref<1x8x324xbf16, #tpu.memory_space<vmem>>, vector<1x8x324xbf16>,
    %c0_76 = arith.constant 0 : index
    %c0_77 = arith.constant 0 : index
    %88 = vector.load %arg5[%c0_76, %c0_77] : memref<1x324xf32, #tpu.memory_space<vmem>>, vector<1x324xf32>
    %89 = vector.broadcast %88 : vector<1x324xf32> to vector<8x324xf32>
    %90 = arith.mulf %83, %89 : vector<8x324xf32>
    %c0_78 = arith.constant 0 : index
    %c0_79 = arith.constant 0 : index
    %c0_80 = arith.constant 0 : index
    %91 = vector.load %arg11[%c0_78, %c0_79, %c0_80] : memref<1x8x1xf32, #tpu.memory_space<vmem>>, vector<1x8x1xf32>
    %92 = vector.shape_cast %91 : vector<1x8x1xf32> to vector<8x1xf32>
    %cst_81 = arith.constant dense<0.000000e+00> : vector<8xf32>
    %93 = vector.multi_reduction <add>, %90, %cst_81 [1] : vector<8x324xf32> to vector<8xf32>
    %94 = vector.shape_cast %93 : vector<8xf32> to vector<8x1xf32>
    %95 = arith.addf %92, %94 : vector<8x1xf32>
    %c0_82 = arith.constant 0 : index
    %c0_83 = arith.constant 0 : index
    %c0_84 = arith.constant 0 : index
    %96 = vector.load %arg11[%c0_82, %c0_83, %c0_84] : memref<1x8x1xf32, #tpu.memory_space<vmem>>, vector<1x8x1xf32>
    %97 = vector.shape_cast %96 : vector<1x8x1xf32> to vector<8x1xf32>
    %98 = vector.shape_cast %95 : vector<8x1xf32> to vector<1x8x1xf32>
    tpu.vector_store %arg11[%c0_82, %c0_83, %c0_84], %98 {strides = array<i32>} : memref<1x8x1xf32, #tpu.memory_space<vmem>>, vector<1x8x1xf32>,
    %c0_85 = arith.constant 0 : index
    %c0_86 = arith.constant 0 : index
    %c0_87 = arith.constant 0 : index
    %99 = vector.load %arg12[%c0_85, %c0_86, %c0_87] : memref<1x8x1xf32, #tpu.memory_space<vmem>>, vector<1x8x1xf32>
    %100 = vector.shape_cast %99 : vector<1x8x1xf32> to vector<8x1xf32>
    %101 = arith.mulf %83, %90 : vector<8x324xf32>
    %cst_88 = arith.constant dense<0.000000e+00> : vector<8xf32>
    %102 = vector.multi_reduction <add>, %101, %cst_88 [1] : vector<8x324xf32> to vector<8xf32>
    %103 = vector.shape_cast %102 : vector<8xf32> to vector<8x1xf32>
    %104 = arith.addf %100, %103 : vector<8x1xf32>
    %c0_89 = arith.constant 0 : index
    %c0_90 = arith.constant 0 : index
    %c0_91 = arith.constant 0 : index
    %105 = vector.load %arg12[%c0_89, %c0_90, %c0_91] : memref<1x8x1xf32, #tpu.memory_space<vmem>>, vector<1x8x1xf32>
    %106 = vector.shape_cast %105 : vector<1x8x1xf32> to vector<8x1xf32>
    %107 = vector.shape_cast %104 : vector<8x1xf32> to vector<1x8x1xf32>
    tpu.vector_store %arg12[%c0_89, %c0_90, %c0_91], %107 {strides = array<i32>} : memref<1x8x1xf32, #tpu.memory_space<vmem>>, vector<1x8x1xf32>,
    return
  }
  func.func @transform_0(%arg0: i32, %arg1: i32) -> (i32, i32, i32) {
    %c1_i32 = arith.constant 1 : i32
    %0 = arith.muli %arg0, %c1_i32 : i32
    %1 = arith.addi %0, %arg1 : i32
    %c0_i32 = arith.constant 0 : i32
    %c0_i32_0 = arith.constant 0 : i32
    %c0_i32_1 = arith.constant 0 : i32
    return %1, %c0_i32, %c0_i32_0 : i32, i32, i32
  }
  func.func @transform_1(%arg0: i32, %arg1: i32) -> (i32, i32, i32) {
    %c0_i32 = arith.constant 0 : i32
    %c0_i32_0 = arith.constant 0 : i32
    %c0_i32_1 = arith.constant 0 : i32
    %c0_i32_2 = arith.constant 0 : i32
    return %c0_i32, %c0_i32_0, %c0_i32_1 : i32, i32, i32
  }
  func.func @transform_2(%arg0: i32, %arg1: i32) -> (i32, i32) {
    %c0_i32 = arith.constant 0 : i32
    %c0_i32_0 = arith.constant 0 : i32
    %c0_i32_1 = arith.constant 0 : i32
    return %c0_i32, %c0_i32_0 : i32, i32
  }
  func.func @transform_3(%arg0: i32, %arg1: i32) -> (i32, i32) {
    %c0_i32 = arith.constant 0 : i32
    %c0_i32_0 = arith.constant 0 : i32
    %c0_i32_1 = arith.constant 0 : i32
    return %c0_i32, %c0_i32_0 : i32, i32
  }
  func.func @transform_4(%arg0: i32, %arg1: i32) -> (i32, i32) {
    %c0_i32 = arith.constant 0 : i32
    %c0_i32_0 = arith.constant 0 : i32
    %c0_i32_1 = arith.constant 0 : i32
    return %c0_i32, %c0_i32_0 : i32, i32
  }
  func.func @transform_5(%arg0: i32, %arg1: i32) -> (i32, i32, i32) {
    %c1_i32 = arith.constant 1 : i32
    %0 = arith.muli %arg0, %c1_i32 : i32
    %1 = arith.addi %0, %arg1 : i32
    %c0_i32 = arith.constant 0 : i32
    %c0_i32_0 = arith.constant 0 : i32
    %c0_i32_1 = arith.constant 0 : i32
    return %1, %c0_i32, %c0_i32_0 : i32, i32, i32
  }
  func.func @transform_6(%arg0: i32, %arg1: i32) -> (i32, i32, i32) {
    %c1_i32 = arith.constant 1 : i32
    %0 = arith.muli %arg0, %c1_i32 : i32
    %1 = arith.addi %0, %arg1 : i32
    %c0_i32 = arith.constant 0 : i32
    %c0_i32_0 = arith.constant 0 : i32
    %c0_i32_1 = arith.constant 0 : i32
    return %1, %c0_i32, %c0_i32_0 : i32, i32, i32
  }
  func.func @transform_7(%arg0: i32, %arg1: i32) -> (i32, i32, i32) {
    %c0_i32 = arith.constant 0 : i32
    %c0_i32_0 = arith.constant 0 : i32
    %c0_i32_1 = arith.constant 0 : i32
    return %arg0, %c0_i32, %c0_i32_0 : i32, i32, i32
  }
  func.func @transform_8(%arg0: i32, %arg1: i32) -> (i32, i32, i32) {
    %c0_i32 = arith.constant 0 : i32
    %c0_i32_0 = arith.constant 0 : i32
    %c0_i32_1 = arith.constant 0 : i32
    return %arg0, %c0_i32, %c0_i32_0 : i32, i32, i32
  }
  func.func @transform_9(%arg0: i32, %arg1: i32) -> (i32, i32, i32) {
    %c0_i32 = arith.constant 0 : i32
    %c0_i32_0 = arith.constant 0 : i32
    %c0_i32_1 = arith.constant 0 : i32
    return %arg0, %c0_i32, %c0_i32_0 : i32, i32, i32
  }
  func.func @transform_10(%arg0: i32, %arg1: i32) -> (i32, i32, i32) {
    %c0_i32 = arith.constant 0 : i32
    %c0_i32_0 = arith.constant 0 : i32
    %c0_i32_1 = arith.constant 0 : i32
    return %arg0, %c0_i32, %c0_i32_0 : i32, i32, i32
  }
}

module attributes {stable_mosaic.version = 11 : i64} {
  func.func @_bn1_relu_kernel(%arg0: i32, %arg1: memref<1x8x362xbf16, #tpu.memory_space<vmem>>, %arg2: memref<8x1xf32, #tpu.memory_space<vmem>>, %arg3: memref<8x1xf32, #tpu.memory_space<vmem>>, %arg4: memref<1x362xf32, #tpu.memory_space<vmem>>, %arg5: memref<1x8x362xbf16, #tpu.memory_space<vmem>>) attributes {dimension_semantics = [#tpu.dimension_semantics<parallel>], iteration_bounds = array<i64: 2>, scalar_prefetch = 0 : i64, scratch_operands = 0 : i64, tpu.core_type = #tpu.core_type<tc>, window_params = [{transform_indices = @transform_0, window_bounds = array<i64: 1, 8, 362>}, {pipeline_mode = #tpu.pipeline_mode<synchronous>, transform_indices = @transform_1, window_bounds = array<i64: 8, 1>}, {pipeline_mode = #tpu.pipeline_mode<synchronous>, transform_indices = @transform_2, window_bounds = array<i64: 8, 1>}, {pipeline_mode = #tpu.pipeline_mode<synchronous>, transform_indices = @transform_3, window_bounds = array<i64: 1, 362>}, {transform_indices = @transform_4, window_bounds = array<i64: 1, 8, 362>}]} {
    %c0 = arith.constant 0 : index
    %c0_0 = arith.constant 0 : index
    %c0_1 = arith.constant 0 : index
    %0 = vector.load %arg1[%c0, %c0_0, %c0_1] : memref<1x8x362xbf16, #tpu.memory_space<vmem>>, vector<1x8x362xbf16>
    %1 = vector.shape_cast %0 : vector<1x8x362xbf16> to vector<8x362xbf16>
    %2 = arith.extf %1 : vector<8x362xbf16> to vector<8x362xf32>
    %c0_2 = arith.constant 0 : index
    %c0_3 = arith.constant 0 : index
    %3 = vector.load %arg2[%c0_2, %c0_3] : memref<8x1xf32, #tpu.memory_space<vmem>>, vector<8x1xf32>
    %4 = vector.broadcast %3 : vector<8x1xf32> to vector<8x362xf32>
    %5 = arith.mulf %2, %4 : vector<8x362xf32>
    %c0_4 = arith.constant 0 : index
    %c0_5 = arith.constant 0 : index
    %6 = vector.load %arg3[%c0_4, %c0_5] : memref<8x1xf32, #tpu.memory_space<vmem>>, vector<8x1xf32>
    %7 = vector.broadcast %6 : vector<8x1xf32> to vector<8x362xf32>
    %8 = arith.addf %5, %7 : vector<8x362xf32>
    %cst = arith.constant 0.000000e+00 : f32
    %9 = vector.broadcast %cst : f32 to vector<8x362xf32>
    %10 = arith.maximumf %8, %9 : vector<8x362xf32>
    %c0_6 = arith.constant 0 : index
    %c0_7 = arith.constant 0 : index
    %11 = vector.load %arg4[%c0_6, %c0_7] : memref<1x362xf32, #tpu.memory_space<vmem>>, vector<1x362xf32>
    %12 = vector.broadcast %11 : vector<1x362xf32> to vector<8x362xf32>
    %13 = arith.mulf %10, %12 : vector<8x362xf32>
    %14 = arith.truncf %13 : vector<8x362xf32> to vector<8x362xbf16>
    %c0_8 = arith.constant 0 : index
    %c0_9 = arith.constant 0 : index
    %c0_10 = arith.constant 0 : index
    %15 = vector.load %arg5[%c0_8, %c0_9, %c0_10] : memref<1x8x362xbf16, #tpu.memory_space<vmem>>, vector<1x8x362xbf16>
    %16 = vector.shape_cast %15 : vector<1x8x362xbf16> to vector<8x362xbf16>
    %17 = vector.shape_cast %14 : vector<8x362xbf16> to vector<1x8x362xbf16>
    tpu.vector_store %arg5[%c0_8, %c0_9, %c0_10], %17 {strides = array<i32>} : memref<1x8x362xbf16, #tpu.memory_space<vmem>>, vector<1x8x362xbf16>,
    return
  }
  func.func @transform_0(%arg0: i32) -> (i32, i32, i32) {
    %c0_i32 = arith.constant 0 : i32
    %c0_i32_0 = arith.constant 0 : i32
    %c0_i32_1 = arith.constant 0 : i32
    return %arg0, %c0_i32, %c0_i32_0 : i32, i32, i32
  }
  func.func @transform_1(%arg0: i32) -> (i32, i32) {
    %c0_i32 = arith.constant 0 : i32
    %c0_i32_0 = arith.constant 0 : i32
    %c0_i32_1 = arith.constant 0 : i32
    return %c0_i32, %c0_i32_0 : i32, i32
  }
  func.func @transform_2(%arg0: i32) -> (i32, i32) {
    %c0_i32 = arith.constant 0 : i32
    %c0_i32_0 = arith.constant 0 : i32
    %c0_i32_1 = arith.constant 0 : i32
    return %c0_i32, %c0_i32_0 : i32, i32
  }
  func.func @transform_3(%arg0: i32) -> (i32, i32) {
    %c0_i32 = arith.constant 0 : i32
    %c0_i32_0 = arith.constant 0 : i32
    %c0_i32_1 = arith.constant 0 : i32
    return %c0_i32, %c0_i32_0 : i32, i32
  }
  func.func @transform_4(%arg0: i32) -> (i32, i32, i32) {
    %c0_i32 = arith.constant 0 : i32
    %c0_i32_0 = arith.constant 0 : i32
    %c0_i32_1 = arith.constant 0 : i32
    return %arg0, %c0_i32, %c0_i32_0 : i32, i32, i32
  }
}

module attributes {stable_mosaic.version = 11 : i64} {
  func.func @_conv2_kernel(%arg0: i32, %arg1: i32, %arg2: memref<1x8x362xbf16, #tpu.memory_space<vmem>>, %arg3: memref<9x8x8xbf16, #tpu.memory_space<vmem>>, %arg4: memref<1x324xf32, #tpu.memory_space<vmem>>, %arg5: memref<1x8x324xbf16, #tpu.memory_space<vmem>>, %arg6: memref<1x8x1xf32, #tpu.memory_space<vmem>>, %arg7: memref<1x8x1xf32, #tpu.memory_space<vmem>>) attributes {dimension_semantics = [#tpu.dimension_semantics<parallel>, #tpu.dimension_semantics<arbitrary>], iteration_bounds = array<i64: 2, 1>, scalar_prefetch = 0 : i64, scratch_operands = 0 : i64, tpu.core_type = #tpu.core_type<tc>, window_params = [{transform_indices = @transform_0, window_bounds = array<i64: 1, 8, 362>}, {pipeline_mode = #tpu.pipeline_mode<synchronous>, transform_indices = @transform_1, window_bounds = array<i64: 9, 8, 8>}, {pipeline_mode = #tpu.pipeline_mode<synchronous>, transform_indices = @transform_2, window_bounds = array<i64: 1, 324>}, {transform_indices = @transform_3, window_bounds = array<i64: 1, 8, 324>}, {transform_indices = @transform_4, window_bounds = array<i64: 1, 8, 1>}, {transform_indices = @transform_5, window_bounds = array<i64: 1, 8, 1>}]} {
    %c0_i32 = arith.constant 0 : i32
    %0 = arith.cmpi eq, %arg1, %c0_i32 : i32
    %1 = arith.extui %0 : i1 to i32
    %c0_i32_0 = arith.constant 0 : i32
    %2 = arith.cmpi ne, %1, %c0_i32_0 : i32
    scf.if %2 {
      %cst_67 = arith.constant 0.000000e+00 : f32
      %80 = vector.broadcast %cst_67 : f32 to vector<1x8x1xf32>
      %c0_68 = arith.constant 0 : index
      %c0_69 = arith.constant 0 : index
      %c0_70 = arith.constant 0 : index
      %81 = vector.load %arg6[%c0_68, %c0_69, %c0_70] : memref<1x8x1xf32, #tpu.memory_space<vmem>>, vector<1x8x1xf32>
      tpu.vector_store %arg6[%c0_68, %c0_69, %c0_70], %80 {strides = array<i32>} : memref<1x8x1xf32, #tpu.memory_space<vmem>>, vector<1x8x1xf32>,
      %cst_71 = arith.constant 0.000000e+00 : f32
      %82 = vector.broadcast %cst_71 : f32 to vector<1x8x1xf32>
      %c0_72 = arith.constant 0 : index
      %c0_73 = arith.constant 0 : index
      %c0_74 = arith.constant 0 : index
      %83 = vector.load %arg7[%c0_72, %c0_73, %c0_74] : memref<1x8x1xf32, #tpu.memory_space<vmem>>, vector<1x8x1xf32>
      tpu.vector_store %arg7[%c0_72, %c0_73, %c0_74], %82 {strides = array<i32>} : memref<1x8x1xf32, #tpu.memory_space<vmem>>, vector<1x8x1xf32>,
    } else {
    }
    %c0 = arith.constant 0 : index
    %c0_1 = arith.constant 0 : index
    %c0_2 = arith.constant 0 : index
    %3 = vector.load %arg3[%c0, %c0_1, %c0_2] : memref<9x8x8xbf16, #tpu.memory_space<vmem>>, vector<1x8x8xbf16>
    %4 = vector.shape_cast %3 : vector<1x8x8xbf16> to vector<8x8xbf16>
    %c0_3 = arith.constant 0 : index
    %c0_4 = arith.constant 0 : index
    %c0_5 = arith.constant 0 : index
    %5 = vector.load %arg2[%c0_3, %c0_4, %c0_5] : memref<1x8x362xbf16, #tpu.memory_space<vmem>>, vector<1x8x324xbf16>
    %6 = vector.shape_cast %5 : vector<1x8x324xbf16> to vector<8x324xbf16>
    %cst = arith.constant dense<0.000000e+00> : vector<8x324xf32>
    %7 = tpu.matmul %4, %6, %cst {dimension_numbers = #tpu.dot_dimension_numbers<[1], [0], [0], [1], [0, 0, 1, 1], [], []>} : vector<8x8xbf16>, vector<8x324xbf16>, vector<8x324xf32> -> vector<8x324xf32>
    %c1 = arith.constant 1 : index
    %c0_6 = arith.constant 0 : index
    %c0_7 = arith.constant 0 : index
    %8 = vector.load %arg3[%c1, %c0_6, %c0_7] : memref<9x8x8xbf16, #tpu.memory_space<vmem>>, vector<1x8x8xbf16>
    %9 = vector.shape_cast %8 : vector<1x8x8xbf16> to vector<8x8xbf16>
    %c0_8 = arith.constant 0 : index
    %c0_9 = arith.constant 0 : index
    %c1_10 = arith.constant 1 : index
    %10 = vector.load %arg2[%c0_8, %c0_9, %c1_10] : memref<1x8x362xbf16, #tpu.memory_space<vmem>>, vector<1x8x324xbf16>
    %11 = vector.shape_cast %10 : vector<1x8x324xbf16> to vector<8x324xbf16>
    %cst_11 = arith.constant dense<0.000000e+00> : vector<8x324xf32>
    %12 = tpu.matmul %9, %11, %cst_11 {dimension_numbers = #tpu.dot_dimension_numbers<[1], [0], [0], [1], [0, 0, 1, 1], [], []>} : vector<8x8xbf16>, vector<8x324xbf16>, vector<8x324xf32> -> vector<8x324xf32>
    %13 = arith.addf %7, %12 : vector<8x324xf32>
    %c2 = arith.constant 2 : index
    %c0_12 = arith.constant 0 : index
    %c0_13 = arith.constant 0 : index
    %14 = vector.load %arg3[%c2, %c0_12, %c0_13] : memref<9x8x8xbf16, #tpu.memory_space<vmem>>, vector<1x8x8xbf16>
    %15 = vector.shape_cast %14 : vector<1x8x8xbf16> to vector<8x8xbf16>
    %c0_14 = arith.constant 0 : index
    %c0_15 = arith.constant 0 : index
    %c2_16 = arith.constant 2 : index
    %16 = vector.load %arg2[%c0_14, %c0_15, %c2_16] : memref<1x8x362xbf16, #tpu.memory_space<vmem>>, vector<1x8x324xbf16>
    %17 = vector.shape_cast %16 : vector<1x8x324xbf16> to vector<8x324xbf16>
    %cst_17 = arith.constant dense<0.000000e+00> : vector<8x324xf32>
    %18 = tpu.matmul %15, %17, %cst_17 {dimension_numbers = #tpu.dot_dimension_numbers<[1], [0], [0], [1], [0, 0, 1, 1], [], []>} : vector<8x8xbf16>, vector<8x324xbf16>, vector<8x324xf32> -> vector<8x324xf32>
    %19 = arith.addf %13, %18 : vector<8x324xf32>
    %c3 = arith.constant 3 : index
    %c0_18 = arith.constant 0 : index
    %c0_19 = arith.constant 0 : index
    %20 = vector.load %arg3[%c3, %c0_18, %c0_19] : memref<9x8x8xbf16, #tpu.memory_space<vmem>>, vector<1x8x8xbf16>
    %21 = vector.shape_cast %20 : vector<1x8x8xbf16> to vector<8x8xbf16>
    %c0_20 = arith.constant 0 : index
    %c0_21 = arith.constant 0 : index
    %c18 = arith.constant 18 : index
    %22 = vector.load %arg2[%c0_20, %c0_21, %c18] : memref<1x8x362xbf16, #tpu.memory_space<vmem>>, vector<1x8x324xbf16>
    %23 = vector.shape_cast %22 : vector<1x8x324xbf16> to vector<8x324xbf16>
    %cst_22 = arith.constant dense<0.000000e+00> : vector<8x324xf32>
    %24 = tpu.matmul %21, %23, %cst_22 {dimension_numbers = #tpu.dot_dimension_numbers<[1], [0], [0], [1], [0, 0, 1, 1], [], []>} : vector<8x8xbf16>, vector<8x324xbf16>, vector<8x324xf32> -> vector<8x324xf32>
    %25 = arith.addf %19, %24 : vector<8x324xf32>
    %c4 = arith.constant 4 : index
    %c0_23 = arith.constant 0 : index
    %c0_24 = arith.constant 0 : index
    %26 = vector.load %arg3[%c4, %c0_23, %c0_24] : memref<9x8x8xbf16, #tpu.memory_space<vmem>>, vector<1x8x8xbf16>
    %27 = vector.shape_cast %26 : vector<1x8x8xbf16> to vector<8x8xbf16>
    %c0_25 = arith.constant 0 : index
    %c0_26 = arith.constant 0 : index
    %c19 = arith.constant 19 : index
    %28 = vector.load %arg2[%c0_25, %c0_26, %c19] : memref<1x8x362xbf16, #tpu.memory_space<vmem>>, vector<1x8x324xbf16>
    %29 = vector.shape_cast %28 : vector<1x8x324xbf16> to vector<8x324xbf16>
    %cst_27 = arith.constant dense<0.000000e+00> : vector<8x324xf32>
    %30 = tpu.matmul %27, %29, %cst_27 {dimension_numbers = #tpu.dot_dimension_numbers<[1], [0], [0], [1], [0, 0, 1, 1], [], []>} : vector<8x8xbf16>, vector<8x324xbf16>, vector<8x324xf32> -> vector<8x324xf32>
    %31 = arith.addf %25, %30 : vector<8x324xf32>
    %c5 = arith.constant 5 : index
    %c0_28 = arith.constant 0 : index
    %c0_29 = arith.constant 0 : index
    %32 = vector.load %arg3[%c5, %c0_28, %c0_29] : memref<9x8x8xbf16, #tpu.memory_space<vmem>>, vector<1x8x8xbf16>
    %33 = vector.shape_cast %32 : vector<1x8x8xbf16> to vector<8x8xbf16>
    %c0_30 = arith.constant 0 : index
    %c0_31 = arith.constant 0 : index
    %c20 = arith.constant 20 : index
    %34 = vector.load %arg2[%c0_30, %c0_31, %c20] : memref<1x8x362xbf16, #tpu.memory_space<vmem>>, vector<1x8x324xbf16>
    %35 = vector.shape_cast %34 : vector<1x8x324xbf16> to vector<8x324xbf16>
    %cst_32 = arith.constant dense<0.000000e+00> : vector<8x324xf32>
    %36 = tpu.matmul %33, %35, %cst_32 {dimension_numbers = #tpu.dot_dimension_numbers<[1], [0], [0], [1], [0, 0, 1, 1], [], []>} : vector<8x8xbf16>, vector<8x324xbf16>, vector<8x324xf32> -> vector<8x324xf32>
    %37 = arith.addf %31, %36 : vector<8x324xf32>
    %c6 = arith.constant 6 : index
    %c0_33 = arith.constant 0 : index
    %c0_34 = arith.constant 0 : index
    %38 = vector.load %arg3[%c6, %c0_33, %c0_34] : memref<9x8x8xbf16, #tpu.memory_space<vmem>>, vector<1x8x8xbf16>
    %39 = vector.shape_cast %38 : vector<1x8x8xbf16> to vector<8x8xbf16>
    %c0_35 = arith.constant 0 : index
    %c0_36 = arith.constant 0 : index
    %c36 = arith.constant 36 : index
    %40 = vector.load %arg2[%c0_35, %c0_36, %c36] : memref<1x8x362xbf16, #tpu.memory_space<vmem>>, vector<1x8x324xbf16>
    %41 = vector.shape_cast %40 : vector<1x8x324xbf16> to vector<8x324xbf16>
    %cst_37 = arith.constant dense<0.000000e+00> : vector<8x324xf32>
    %42 = tpu.matmul %39, %41, %cst_37 {dimension_numbers = #tpu.dot_dimension_numbers<[1], [0], [0], [1], [0, 0, 1, 1], [], []>} : vector<8x8xbf16>, vector<8x324xbf16>, vector<8x324xf32> -> vector<8x324xf32>
    %43 = arith.addf %37, %42 : vector<8x324xf32>
    %c7 = arith.constant 7 : index
    %c0_38 = arith.constant 0 : index
    %c0_39 = arith.constant 0 : index
    %44 = vector.load %arg3[%c7, %c0_38, %c0_39] : memref<9x8x8xbf16, #tpu.memory_space<vmem>>, vector<1x8x8xbf16>
    %45 = vector.shape_cast %44 : vector<1x8x8xbf16> to vector<8x8xbf16>
    %c0_40 = arith.constant 0 : index
    %c0_41 = arith.constant 0 : index
    %c37 = arith.constant 37 : index
    %46 = vector.load %arg2[%c0_40, %c0_41, %c37] : memref<1x8x362xbf16, #tpu.memory_space<vmem>>, vector<1x8x324xbf16>
    %47 = vector.shape_cast %46 : vector<1x8x324xbf16> to vector<8x324xbf16>
    %cst_42 = arith.constant dense<0.000000e+00> : vector<8x324xf32>
    %48 = tpu.matmul %45, %47, %cst_42 {dimension_numbers = #tpu.dot_dimension_numbers<[1], [0], [0], [1], [0, 0, 1, 1], [], []>} : vector<8x8xbf16>, vector<8x324xbf16>, vector<8x324xf32> -> vector<8x324xf32>
    %49 = arith.addf %43, %48 : vector<8x324xf32>
    %c8 = arith.constant 8 : index
    %c0_43 = arith.constant 0 : index
    %c0_44 = arith.constant 0 : index
    %50 = vector.load %arg3[%c8, %c0_43, %c0_44] : memref<9x8x8xbf16, #tpu.memory_space<vmem>>, vector<1x8x8xbf16>
    %51 = vector.shape_cast %50 : vector<1x8x8xbf16> to vector<8x8xbf16>
    %c0_45 = arith.constant 0 : index
    %c0_46 = arith.constant 0 : index
    %c38 = arith.constant 38 : index
    %52 = vector.load %arg2[%c0_45, %c0_46, %c38] : memref<1x8x362xbf16, #tpu.memory_space<vmem>>, vector<1x8x324xbf16>
    %53 = vector.shape_cast %52 : vector<1x8x324xbf16> to vector<8x324xbf16>
    %cst_47 = arith.constant dense<0.000000e+00> : vector<8x324xf32>
    %54 = tpu.matmul %51, %53, %cst_47 {dimension_numbers = #tpu.dot_dimension_numbers<[1], [0], [0], [1], [0, 0, 1, 1], [], []>} : vector<8x8xbf16>, vector<8x324xbf16>, vector<8x324xf32> -> vector<8x324xf32>
    %55 = arith.addf %49, %54 : vector<8x324xf32>
    %56 = arith.truncf %55 : vector<8x324xf32> to vector<8x324xbf16>
    %c0_48 = arith.constant 0 : index
    %c0_49 = arith.constant 0 : index
    %c0_50 = arith.constant 0 : index
    %57 = vector.load %arg5[%c0_48, %c0_49, %c0_50] : memref<1x8x324xbf16, #tpu.memory_space<vmem>>, vector<1x8x324xbf16>
    %58 = vector.shape_cast %57 : vector<1x8x324xbf16> to vector<8x324xbf16>
    %59 = vector.shape_cast %56 : vector<8x324xbf16> to vector<1x8x324xbf16>
    tpu.vector_store %arg5[%c0_48, %c0_49, %c0_50], %59 {strides = array<i32>} : memref<1x8x324xbf16, #tpu.memory_space<vmem>>, vector<1x8x324xbf16>,
    %c0_51 = arith.constant 0 : index
    %c0_52 = arith.constant 0 : index
    %60 = vector.load %arg4[%c0_51, %c0_52] : memref<1x324xf32, #tpu.memory_space<vmem>>, vector<1x324xf32>
    %61 = vector.broadcast %60 : vector<1x324xf32> to vector<8x324xf32>
    %62 = arith.mulf %55, %61 : vector<8x324xf32>
    %c0_53 = arith.constant 0 : index
    %c0_54 = arith.constant 0 : index
    %c0_55 = arith.constant 0 : index
    %63 = vector.load %arg6[%c0_53, %c0_54, %c0_55] : memref<1x8x1xf32, #tpu.memory_space<vmem>>, vector<1x8x1xf32>
    %64 = vector.shape_cast %63 : vector<1x8x1xf32> to vector<8x1xf32>
    %cst_56 = arith.constant dense<0.000000e+00> : vector<8xf32>
    %65 = vector.multi_reduction <add>, %62, %cst_56 [1] : vector<8x324xf32> to vector<8xf32>
    %66 = vector.shape_cast %65 : vector<8xf32> to vector<8x1xf32>
    %67 = arith.addf %64, %66 : vector<8x1xf32>
    %c0_57 = arith.constant 0 : index
    %c0_58 = arith.constant 0 : index
    %c0_59 = arith.constant 0 : index
    %68 = vector.load %arg6[%c0_57, %c0_58, %c0_59] : memref<1x8x1xf32, #tpu.memory_space<vmem>>, vector<1x8x1xf32>
    %69 = vector.shape_cast %68 : vector<1x8x1xf32> to vector<8x1xf32>
    %70 = vector.shape_cast %67 : vector<8x1xf32> to vector<1x8x1xf32>
    tpu.vector_store %arg6[%c0_57, %c0_58, %c0_59], %70 {strides = array<i32>} : memref<1x8x1xf32, #tpu.memory_space<vmem>>, vector<1x8x1xf32>,
    %c0_60 = arith.constant 0 : index
    %c0_61 = arith.constant 0 : index
    %c0_62 = arith.constant 0 : index
    %71 = vector.load %arg7[%c0_60, %c0_61, %c0_62] : memref<1x8x1xf32, #tpu.memory_space<vmem>>, vector<1x8x1xf32>
    %72 = vector.shape_cast %71 : vector<1x8x1xf32> to vector<8x1xf32>
    %73 = arith.mulf %55, %62 : vector<8x324xf32>
    %cst_63 = arith.constant dense<0.000000e+00> : vector<8xf32>
    %74 = vector.multi_reduction <add>, %73, %cst_63 [1] : vector<8x324xf32> to vector<8xf32>
    %75 = vector.shape_cast %74 : vector<8xf32> to vector<8x1xf32>
    %76 = arith.addf %72, %75 : vector<8x1xf32>
    %c0_64 = arith.constant 0 : index
    %c0_65 = arith.constant 0 : index
    %c0_66 = arith.constant 0 : index
    %77 = vector.load %arg7[%c0_64, %c0_65, %c0_66] : memref<1x8x1xf32, #tpu.memory_space<vmem>>, vector<1x8x1xf32>
    %78 = vector.shape_cast %77 : vector<1x8x1xf32> to vector<8x1xf32>
    %79 = vector.shape_cast %76 : vector<8x1xf32> to vector<1x8x1xf32>
    tpu.vector_store %arg7[%c0_64, %c0_65, %c0_66], %79 {strides = array<i32>} : memref<1x8x1xf32, #tpu.memory_space<vmem>>, vector<1x8x1xf32>,
    return
  }
  func.func @transform_0(%arg0: i32, %arg1: i32) -> (i32, i32, i32) {
    %c1_i32 = arith.constant 1 : i32
    %0 = arith.muli %arg0, %c1_i32 : i32
    %1 = arith.addi %0, %arg1 : i32
    %c0_i32 = arith.constant 0 : i32
    %c0_i32_0 = arith.constant 0 : i32
    %c0_i32_1 = arith.constant 0 : i32
    return %1, %c0_i32, %c0_i32_0 : i32, i32, i32
  }
  func.func @transform_1(%arg0: i32, %arg1: i32) -> (i32, i32, i32) {
    %c0_i32 = arith.constant 0 : i32
    %c0_i32_0 = arith.constant 0 : i32
    %c0_i32_1 = arith.constant 0 : i32
    %c0_i32_2 = arith.constant 0 : i32
    return %c0_i32, %c0_i32_0, %c0_i32_1 : i32, i32, i32
  }
  func.func @transform_2(%arg0: i32, %arg1: i32) -> (i32, i32) {
    %c0_i32 = arith.constant 0 : i32
    %c0_i32_0 = arith.constant 0 : i32
    %c0_i32_1 = arith.constant 0 : i32
    return %c0_i32, %c0_i32_0 : i32, i32
  }
  func.func @transform_3(%arg0: i32, %arg1: i32) -> (i32, i32, i32) {
    %c1_i32 = arith.constant 1 : i32
    %0 = arith.muli %arg0, %c1_i32 : i32
    %1 = arith.addi %0, %arg1 : i32
    %c0_i32 = arith.constant 0 : i32
    %c0_i32_0 = arith.constant 0 : i32
    %c0_i32_1 = arith.constant 0 : i32
    return %1, %c0_i32, %c0_i32_0 : i32, i32, i32
  }
  func.func @transform_4(%arg0: i32, %arg1: i32) -> (i32, i32, i32) {
    %c0_i32 = arith.constant 0 : i32
    %c0_i32_0 = arith.constant 0 : i32
    %c0_i32_1 = arith.constant 0 : i32
    return %arg0, %c0_i32, %c0_i32_0 : i32, i32, i32
  }
  func.func @transform_5(%arg0: i32, %arg1: i32) -> (i32, i32, i32) {
    %c0_i32 = arith.constant 0 : i32
    %c0_i32_0 = arith.constant 0 : i32
    %c0_i32_1 = arith.constant 0 : i32
    return %arg0, %c0_i32, %c0_i32_0 : i32, i32, i32
  }
}

module attributes {stable_mosaic.version = 11 : i64} {
  func.func @_bn2_add_relu_kernel(%arg0: i32, %arg1: memref<1x8x324xbf16, #tpu.memory_space<vmem>>, %arg2: memref<1x8x324xbf16, #tpu.memory_space<vmem>>, %arg3: memref<8x1xf32, #tpu.memory_space<vmem>>, %arg4: memref<8x1xf32, #tpu.memory_space<vmem>>, %arg5: memref<8x1xf32, #tpu.memory_space<vmem>>, %arg6: memref<8x1xf32, #tpu.memory_space<vmem>>, %arg7: memref<1x8x324xf32, #tpu.memory_space<vmem>>) attributes {dimension_semantics = [#tpu.dimension_semantics<parallel>], iteration_bounds = array<i64: 2>, scalar_prefetch = 0 : i64, scratch_operands = 0 : i64, tpu.core_type = #tpu.core_type<tc>, window_params = [{transform_indices = @transform_0, window_bounds = array<i64: 1, 8, 324>}, {transform_indices = @transform_1, window_bounds = array<i64: 1, 8, 324>}, {pipeline_mode = #tpu.pipeline_mode<synchronous>, transform_indices = @transform_2, window_bounds = array<i64: 8, 1>}, {pipeline_mode = #tpu.pipeline_mode<synchronous>, transform_indices = @transform_3, window_bounds = array<i64: 8, 1>}, {pipeline_mode = #tpu.pipeline_mode<synchronous>, transform_indices = @transform_4, window_bounds = array<i64: 8, 1>}, {pipeline_mode = #tpu.pipeline_mode<synchronous>, transform_indices = @transform_5, window_bounds = array<i64: 8, 1>}, {transform_indices = @transform_6, window_bounds = array<i64: 1, 8, 324>}]} {
    %c0 = arith.constant 0 : index
    %c0_0 = arith.constant 0 : index
    %c0_1 = arith.constant 0 : index
    %0 = vector.load %arg1[%c0, %c0_0, %c0_1] : memref<1x8x324xbf16, #tpu.memory_space<vmem>>, vector<1x8x324xbf16>
    %1 = vector.shape_cast %0 : vector<1x8x324xbf16> to vector<8x324xbf16>
    %2 = arith.extf %1 : vector<8x324xbf16> to vector<8x324xf32>
    %c0_2 = arith.constant 0 : index
    %c0_3 = arith.constant 0 : index
    %3 = vector.load %arg3[%c0_2, %c0_3] : memref<8x1xf32, #tpu.memory_space<vmem>>, vector<8x1xf32>
    %4 = vector.broadcast %3 : vector<8x1xf32> to vector<8x324xf32>
    %5 = arith.mulf %2, %4 : vector<8x324xf32>
    %c0_4 = arith.constant 0 : index
    %c0_5 = arith.constant 0 : index
    %6 = vector.load %arg4[%c0_4, %c0_5] : memref<8x1xf32, #tpu.memory_space<vmem>>, vector<8x1xf32>
    %7 = vector.broadcast %6 : vector<8x1xf32> to vector<8x324xf32>
    %8 = arith.addf %5, %7 : vector<8x324xf32>
    %c0_6 = arith.constant 0 : index
    %c0_7 = arith.constant 0 : index
    %c0_8 = arith.constant 0 : index
    %9 = vector.load %arg2[%c0_6, %c0_7, %c0_8] : memref<1x8x324xbf16, #tpu.memory_space<vmem>>, vector<1x8x324xbf16>
    %10 = vector.shape_cast %9 : vector<1x8x324xbf16> to vector<8x324xbf16>
    %11 = arith.extf %10 : vector<8x324xbf16> to vector<8x324xf32>
    %c0_9 = arith.constant 0 : index
    %c0_10 = arith.constant 0 : index
    %12 = vector.load %arg5[%c0_9, %c0_10] : memref<8x1xf32, #tpu.memory_space<vmem>>, vector<8x1xf32>
    %13 = vector.broadcast %12 : vector<8x1xf32> to vector<8x324xf32>
    %14 = arith.mulf %11, %13 : vector<8x324xf32>
    %c0_11 = arith.constant 0 : index
    %c0_12 = arith.constant 0 : index
    %15 = vector.load %arg6[%c0_11, %c0_12] : memref<8x1xf32, #tpu.memory_space<vmem>>, vector<8x1xf32>
    %16 = vector.broadcast %15 : vector<8x1xf32> to vector<8x324xf32>
    %17 = arith.addf %14, %16 : vector<8x324xf32>
    %18 = arith.addf %8, %17 : vector<8x324xf32>
    %cst = arith.constant 0.000000e+00 : f32
    %19 = vector.broadcast %cst : f32 to vector<8x324xf32>
    %20 = arith.maximumf %18, %19 : vector<8x324xf32>
    %c0_13 = arith.constant 0 : index
    %c0_14 = arith.constant 0 : index
    %c0_15 = arith.constant 0 : index
    %21 = vector.load %arg7[%c0_13, %c0_14, %c0_15] : memref<1x8x324xf32, #tpu.memory_space<vmem>>, vector<1x8x324xf32>
    %22 = vector.shape_cast %21 : vector<1x8x324xf32> to vector<8x324xf32>
    %23 = vector.shape_cast %20 : vector<8x324xf32> to vector<1x8x324xf32>
    tpu.vector_store %arg7[%c0_13, %c0_14, %c0_15], %23 {strides = array<i32>} : memref<1x8x324xf32, #tpu.memory_space<vmem>>, vector<1x8x324xf32>,
    return
  }
  func.func @transform_0(%arg0: i32) -> (i32, i32, i32) {
    %c0_i32 = arith.constant 0 : i32
    %c0_i32_0 = arith.constant 0 : i32
    %c0_i32_1 = arith.constant 0 : i32
    return %arg0, %c0_i32, %c0_i32_0 : i32, i32, i32
  }
  func.func @transform_1(%arg0: i32) -> (i32, i32, i32) {
    %c0_i32 = arith.constant 0 : i32
    %c0_i32_0 = arith.constant 0 : i32
    %c0_i32_1 = arith.constant 0 : i32
    return %arg0, %c0_i32, %c0_i32_0 : i32, i32, i32
  }
  func.func @transform_2(%arg0: i32) -> (i32, i32) {
    %c0_i32 = arith.constant 0 : i32
    %c0_i32_0 = arith.constant 0 : i32
    %c0_i32_1 = arith.constant 0 : i32
    return %c0_i32, %c0_i32_0 : i32, i32
  }
  func.func @transform_3(%arg0: i32) -> (i32, i32) {
    %c0_i32 = arith.constant 0 : i32
    %c0_i32_0 = arith.constant 0 : i32
    %c0_i32_1 = arith.constant 0 : i32
    return %c0_i32, %c0_i32_0 : i32, i32
  }
  func.func @transform_4(%arg0: i32) -> (i32, i32) {
    %c0_i32 = arith.constant 0 : i32
    %c0_i32_0 = arith.constant 0 : i32
    %c0_i32_1 = arith.constant 0 : i32
    return %c0_i32, %c0_i32_0 : i32, i32
  }
  func.func @transform_5(%arg0: i32) -> (i32, i32) {
    %c0_i32 = arith.constant 0 : i32
    %c0_i32_0 = arith.constant 0 : i32
    %c0_i32_1 = arith.constant 0 : i32
    return %c0_i32, %c0_i32_0 : i32, i32
  }
  func.func @transform_6(%arg0: i32) -> (i32, i32, i32) {
    %c0_i32 = arith.constant 0 : i32
    %c0_i32_0 = arith.constant 0 : i32
    %c0_i32_1 = arith.constant 0 : i32
    return %arg0, %c0_i32, %c0_i32_0 : i32, i32, i32
  }
}

</mosaic_0001>

<llo_original>
// kernel: rblock_pallas.5
$region0: #{rblock_pallas.5}
  #allocation0 [shape = 'u32[]', space=smem, size = 0x4, offset = 0x4, fixed_abs, tag = 'smem constant byte address 0x4 - core index']
  #allocation1 [shape = 'u32[144,128]{1,0:T(1,128)}', space=vmem, size = 0x12000, scoped, tag = 'internal scratch']
  %s0 = inlined_call_operand.vmem [shape: bf16[2,8,362], index: 0, kind: input, shape index: {}]
  %s1 = inlined_call_operand.vmem [shape: f32[8,1], index: 1, kind: input, shape index: {}]
  %s2 = inlined_call_operand.vmem [shape: f32[8,1], index: 2, kind: input, shape index: {}]
  %s3 = inlined_call_operand.vmem [shape: f32[1,362], index: 3, kind: input, shape index: {}]
  %s4 = inlined_call_operand.vmem [shape: bf16[2,8,362], index: 4, kind: output, shape index: {}]
  %s5 = sld [smem:[#allocation0]]
  $region49: #{rblock_pallas.5} parent=0
    _
  %s7 = ssub.s32 1, %s5
  %s8 = scalar_select 0, %s7, %s5
  loop: start=0, step=1, limit=4
  $region2: #{rblock_pallas.5} parent=0 // loop_pre_header
    _
  $region3: #{rblock_pallas.5} parent=0 // loop_header
    %s10 = sphi 0, %s14
    %p11 = scmp.ge.s32.totalorder %s10, 4
    %s20 = sphi 0, %s22
    %s23 = sphi 0, %s20
    %s24 = sphi 0, %s23
    %s40 = sphi 0, %s24
    %s44 = sphi 0, %s44
    %s46 = sphi 0, %s44
    %s47 = sphi 0, %s46
    %s61 = sphi 0, %s47
    %s65 = sphi 0, %s65
    %s67 = sphi 0, %s65
    %s68 = sphi 0, %s67
    %s82 = sphi 0, %s68
    %s86 = sphi 0, %s86
    %s88 = sphi 0, %s86
    %s89 = sphi 0, %s88
    %s103 = sphi 0, %s89
    %s109 = sphi 0, %s111
    %s112 = sphi 0, %s109
    %s113 = sphi 0, %s112
    %s129 = sphi 0, %s113
  $region4: #{rblock_pallas.5} parent=0 // loop_header_branch
    %13 = sbr.rel (%p11) target = $region8
  $region5: #{rblock_pallas.5} parent=0 // loop_body
    %s15 = ssub.s32 %s10, 1
    %s16 = ssub.s32 %s10, 2
    %s17 = sadd.s32 %s10, 1
    %s18 = ssub.s32 %s10, %s17
    %p19 = scmp.eq.s32.totalorder %s18, 0
    %s21 = sadd.s32 %s20, 1
    %s22 = scalar_select %p19, %s20, %s21
    %p25 = pneg %p19
    %p26 = scmp.eq.s32.totalorder %s10, 1
    %p27 = por %p25, %p26
    %p28 = scmp.ne.s32.totalorder %s20, %s23
    %p29 = scmp.eq.s32.totalorder %s10, 0
    %p30 = por %p28, %p29
    %p31 = scmp.ne.s32.totalorder %s20, %s23
    %p32 = scmp.eq.s32.totalorder %s15, 1
    %p33 = por %p31, %p32
    %p34 = scmp.ne.s32.totalorder %s23, %s24
    %p35 = scmp.eq.s32.totalorder %s15, 0
    %p36 = por %p34, %p35
    %p37 = scmp.ne.s32.totalorder %s23, %s24
    %p38 = scmp.eq.s32.totalorder %s16, 1
    %p39 = por %p37, %p38
    %p41 = scmp.ne.s32.totalorder %s24, %s40
    %p42 = scmp.eq.s32.totalorder %s16, 0
    %p43 = por %p41, %p42
    %s45 = sadd.s32 %s44, 1
    %p48 = scmp.eq.s32.totalorder %s10, 1
    %p49 = scmp.ne.s32.totalorder %s44, %s46
    %p50 = scmp.eq.s32.totalorder %s10, 0
    %p51 = por %p49, %p50
    %p52 = scmp.ne.s32.totalorder %s44, %s46
    %p53 = scmp.eq.s32.totalorder %s15, 1
    %p54 = por %p52, %p53
    %p55 = scmp.ne.s32.totalorder %s46, %s47
    %p56 = scmp.eq.s32.totalorder %s15, 0
    %p57 = por %p55, %p56
    %p58 = scmp.ne.s32.totalorder %s46, %s47
    %p59 = scmp.eq.s32.totalorder %s16, 1
    %p60 = por %p58, %p59
    %p62 = scmp.ne.s32.totalorder %s47, %s61
    %p63 = scmp.eq.s32.totalorder %s16, 0
    %p64 = por %p62, %p63
    %s66 = sadd.s32 %s65, 1
    %p69 = scmp.eq.s32.totalorder %s10, 1
    %p70 = scmp.ne.s32.totalorder %s65, %s67
    %p71 = scmp.eq.s32.totalorder %s10, 0
    %p72 = por %p70, %p71
    %p73 = scmp.ne.s32.totalorder %s65, %s67
    %p74 = scmp.eq.s32.totalorder %s15, 1
    %p75 = por %p73, %p74
    %p76 = scmp.ne.s32.totalorder %s67, %s68
    %p77 = scmp.eq.s32.totalorder %s15, 0
    %p78 = por %p76, %p77
    %p79 = scmp.ne.s32.totalorder %s67, %s68
    %p80 = scmp.eq.s32.totalorder %s16, 1
    %p81 = por %p79, %p80
    %p83 = scmp.ne.s32.totalorder %s68, %s82
    %p84 = scmp.eq.s32.totalorder %s16, 0
    %p85 = por %p83, %p84
    %s87 = sadd.s32 %s86, 1
    %p90 = scmp.eq.s32.totalorder %s10, 1
    %p91 = scmp.ne.s32.totalorder %s86, %s88
    %p92 = scmp.eq.s32.totalorder %s10, 0
    %p93 = por %p91, %p92
    %p94 = scmp.ne.s32.totalorder %s86, %s88
    %p95 = scmp.eq.s32.totalorder %s15, 1
    %p96 = por %p94, %p95
    %p97 = scmp.ne.s32.totalorder %s88, %s89
    %p98 = scmp.eq.s32.totalorder %s15, 0
    %p99 = por %p97, %p98
    %p100 = scmp.ne.s32.totalorder %s88, %s89
    %p101 = scmp.eq.s32.totalorder %s16, 1
    %p102 = por %p100, %p101
    %p104 = scmp.ne.s32.totalorder %s89, %s103
    %p105 = scmp.eq.s32.totalorder %s16, 0
    %p106 = por %p104, %p105
    %s107 = ssub.s32 %s10, %s17
    %p108 = scmp.eq.s32.totalorder %s107, 0
    %s110 = sadd.s32 %s109, 1
    %s111 = scalar_select %p108, %s109, %s110
    %p114 = pneg %p108
    %p115 = scmp.eq.s32.totalorder %s10, 1
    %p116 = por %p114, %p115
    %p117 = scmp.ne.s32.totalorder %s109, %s112
    %p118 = scmp.eq.s32.totalorder %s10, 0
    %p119 = por %p117, %p118
    %p120 = scmp.ne.s32.totalorder %s109, %s112
    %p121 = scmp.eq.s32.totalorder %s15, 1
    %p122 = por %p120, %p121
    %p123 = scmp.ne.s32.totalorder %s112, %s113
    %p124 = scmp.eq.s32.totalorder %s15, 0
    %p125 = por %p123, %p124
    %p126 = scmp.ne.s32.totalorder %s112, %s113
    %p127 = scmp.eq.s32.totalorder %s16, 1
    %p128 = por %p126, %p127
    %p130 = scmp.ne.s32.totalorder %s113, %s129
    %p131 = scmp.eq.s32.totalorder %s16, 0
    %p132 = por %p130, %p131
    %p133 = scmp.le.s32.totalorder 1, %s10
    %p134 = scmp.lt.s32.totalorder %s10, 3
    %p135 = pnand %p133, %p134
    %p136 = pneg %p135
    // Predicated region
    $region9: #{rblock_pallas.5} parent=5 // pred_check
      _
    $region10: #{rblock_pallas.5} parent=5 // pred_check_branch
      %138 = sbr.rel (%p135) target = $region12
    $region11: #{rblock_pallas.5} parent=5 // pred_region
      %s139 = ssub.s32 %s10, 1
      // Predicated region
      $region13: #{rblock_pallas.5} parent=11 // pred_check
        %p140 = pneg %p57
      $region14: #{rblock_pallas.5} parent=11 // pred_check_branch
        %142 = sbr.rel (%p140) target = $region16
      $region15: #{rblock_pallas.5} parent=11 // pred_region
        _
      $region16: #{rblock_pallas.5} parent=11 // pred_fallthru
        _
      // Predicated region
      $region17: #{rblock_pallas.5} parent=11 // pred_check
        %p143 = pneg %p78
      $region18: #{rblock_pallas.5} parent=11 // pred_check_branch
        %145 = sbr.rel (%p143) target = $region20
      $region19: #{rblock_pallas.5} parent=11 // pred_region
        _
      $region20: #{rblock_pallas.5} parent=11 // pred_fallthru
        _
      // Predicated region
      $region21: #{rblock_pallas.5} parent=11 // pred_check
        %p146 = pneg %p99
      $region22: #{rblock_pallas.5} parent=11 // pred_check_branch
        %148 = sbr.rel (%p146) target = $region24
      $region23: #{rblock_pallas.5} parent=11 // pred_region
        _
      $region24: #{rblock_pallas.5} parent=11 // pred_fallthru
        _
    $region12: #{rblock_pallas.5} parent=5 // pred_fallthru
      _
    %p149 = scmp.lt.s32.totalorder %s10, 2
    // Predicated region
    $region25: #{rblock_pallas.5} parent=5 // pred_check
      %p150 = pneg %p149
    $region26: #{rblock_pallas.5} parent=5 // pred_check_branch
      %152 = sbr.rel (%p150) target = $region28
    $region27: #{rblock_pallas.5} parent=5 // pred_region
      // Predicated region
      $region29: #{rblock_pallas.5} parent=27 // pred_check
        %p153 = pneg %p30
      $region30: #{rblock_pallas.5} parent=27 // pred_check_branch
        %155 = sbr.rel (%p153) target = $region32
      $region31: #{rblock_pallas.5} parent=27 // pred_region
        %p156 = scmp.lt.s32.totalorder %s10, 1
        %s157 = scalar_select %p156, %s10, 1
        %s158 = smul.addr %s157, 3
        %s159 = smul.addr %s158, 4
        %s160 = scalar_lea.vmem %s0, %s159
      $region32: #{rblock_pallas.5} parent=27 // pred_fallthru
        _
    $region28: #{rblock_pallas.5} parent=5 // pred_fallthru
      _
    %p161 = scmp.le.s32.totalorder 1, %s10
    %p162 = scmp.lt.s32.totalorder %s10, 3
    %p163 = pnand %p161, %p162
    %p164 = pneg %p163
    // Predicated region
    $region33: #{rblock_pallas.5} parent=5 // pred_check
      _
    $region34: #{rblock_pallas.5} parent=5 // pred_check_branch
      %166 = sbr.rel (%p163) target = $region36
    $region35: #{rblock_pallas.5} parent=5 // pred_region
      %s167 = ssub.s32 %s10, 1
      %p168 = scmp.lt.s32.totalorder %s15, 1
      %s169 = scalar_select %p168, %s15, 1
      %s170 = smul.addr %s169, 3
      %s171 = smul.addr %s170, 4
      %s172 = scalar_lea.vmem %s0, %s171
      %p173 = pneg %p36
      %p174 = pneg %p33
      %p175 = pneg %p57
      %p176 = pneg %p54
      %p177 = pneg %p78
      %p178 = pneg %p75
      %p179 = pneg %p99
      %p180 = pneg %p96
      %p181 = pneg %p125
      %p182 = pneg %p122
      %p183 = scmp.lt.s32.totalorder %s15, 1
      %s184 = scalar_select %p183, %s15, 1
      %s185 = smul.addr %s184, 3
      %s186 = smul.addr %s185, 4
      %s187 = scalar_lea.vmem %s4, %s186
      %p188 = scmp.lt.s32.totalorder %s15, 1
      %s189 = scalar_select %p188, %s15, 1
      %s190 = smul.addr %s189, 3
      %s191 = smul.addr %s190, 4
      %s192 = scalar_lea.vmem %s0, %s191
      %p193 = scmp.lt.s32.totalorder %s15, 1
      %s194 = scalar_select %p193, %s15, 1
      %s195 = smul.addr %s194, 3
      %s196 = smul.addr %s195, 4
      %s197 = scalar_lea.vmem %s4, %s196
      %v198 = vld [vmem:[%s192] sm:$0xff]
      %v199 = vld [vmem:[%s192 + $0x8] sm:$0xf]
      %v200 = vunpack.c.l.bf16 %v198
      %v201 = vunpack.c.h.bf16 %v198
      %v202 = vunpack.c.l.bf16 %v199
      %v203 = vld [vmem:[%s1] sm:$0xff]
      %205 = vset.pattern.permute.xlu0 0
      %206 = vperm.xlu0 %205, %v203
      %v207 = vpop.permute.xlu0 %206
      %v209 = vmul.f32 %v200, %v207
      %v210 = vmul.f32 %v201, %v207
      %v211 = vmul.f32 %v202, %v207
      %v212 = vld [vmem:[%s2] sm:$0xff]
      %214 = vset.pattern.permute.xlu0 0
      %215 = vperm.xlu0 %214, %v212
      %v216 = vpop.permute.xlu0 %215
      %v218 = vadd.f32 %v209, %v216
      %v219 = vadd.f32 %v210, %v216
      %v220 = vadd.f32 %v211, %v216
      %v221 = vmax.f32 %v218, 0.0
      %v222 = vmax.f32 %v219, 0.0
      %v223 = vmax.f32 %v220, 0.0
      %v224 = vld [vmem:[%s3] sm:$0x7]
      %v226 = vlaneseq
      %v227 = vshrl.u32 %v226, 7
      %v228 = vsub.s32 0, %v227
      %v229 = vrot.slane %v224, %v228
      %v230 = vlaneseq
      %v231 = vshrl.u32 %v230, 7
      %v232 = vsub.s32 1, %v231
      %v233 = vrot.slane %v224, %v232
      %v234 = vlaneseq
      %v235 = vshrl.u32 %v234, 7
      %v236 = vsub.s32 2, %v235
      %v237 = vrot.slane %v224, %v236
      %v241 = vmul.f32 %v221, %v229
      %v242 = vmul.f32 %v222, %v233
      %v243 = vmul.f32 %v223, %v237
      %v244 = vpack.c.bf16 %v241, %v241
      %v245 = vpack.c.bf16 %v242, %v242
      %v246 = vpack.c.bf16 %v243, %v243
      %v250 = vunpack.c.l.b16 %v244
      %v251 = vunpack.c.l.b16 %v245
      %v252 = vunpack.c.l.b16 %v246
      %v253 = vpack.c.b16 %v251, %v250
      %v254 = vpack.c.b16 %v252, %v252
      %257 = vst [vmem:[%s197] sm:$0xff] %v253
      %vm258 = vcmask 863232
      %259 = vst.msk [vmem:[%s197 + $0x8] sm:$0xf] %vm258, %v254
      %p260 = scmp.lt.s32.totalorder %s15, 1
      %s261 = scalar_select %p260, %s15, 1
      %s262 = smul.addr %s261, 3
      %s263 = smul.addr %s262, 4
      %s264 = scalar_lea.vmem %s4, %s263
      // Predicated region
      $region37: #{rblock_pallas.5} parent=35 // pred_check
        %p265 = pneg %p122
      $region38: #{rblock_pallas.5} parent=35 // pred_check_branch
        %267 = sbr.rel (%p265) target = $region40
      $region39: #{rblock_pallas.5} parent=35 // pred_region
        _
      $region40: #{rblock_pallas.5} parent=35 // pred_fallthru
        _
    $region36: #{rblock_pallas.5} parent=5 // pred_fallthru
      _
    %p268 = scmp.le.s32.totalorder 2, %s10
    // Predicated region
    $region41: #{rblock_pallas.5} parent=5 // pred_check
      %p269 = pneg %p268
    $region42: #{rblock_pallas.5} parent=5 // pred_check_branch
      %271 = sbr.rel (%p269) target = $region44
    $region43: #{rblock_pallas.5} parent=5 // pred_region
      %s272 = ssub.s32 %s10, 2
      // Predicated region
      $region45: #{rblock_pallas.5} parent=43 // pred_check
        %p273 = pneg %p128
      $region46: #{rblock_pallas.5} parent=43 // pred_check_branch
        %275 = sbr.rel (%p273) target = $region48
      $region47: #{rblock_pallas.5} parent=43 // pred_region
        %p276 = scmp.lt.s32.totalorder %s16, 1
        %s277 = scalar_select %p276, %s16, 1
        %s278 = smul.addr %s277, 3
        %s279 = smul.addr %s278, 4
        %s280 = scalar_lea.vmem %s4, %s279
      $region48: #{rblock_pallas.5} parent=43 // pred_fallthru
        _
    $region44: #{rblock_pallas.5} parent=5 // pred_fallthru
      _
  $region6: #{rblock_pallas.5} parent=0 // loop_footer
    %s14 = sadd.s32 1, %s10
  $region7: #{rblock_pallas.5} parent=0 // loop_footer_branch
    %9 = sbr.rel target = $region3
  $region8: #{rblock_pallas.5} parent=0 // loop_exit
    _

// kernel: rblock_pallas.7
$region0: #{rblock_pallas.7}
  #allocation0 [shape = 'u32[]', space=smem, size = 0x4, offset = 0x4, fixed_abs, tag = 'smem constant byte address 0x4 - core index']
  #allocation1 [shape = 'u32[144,128]{1,0:T(1,128)}', space=vmem, size = 0x12000, scoped, tag = 'internal scratch']
  %s0 = inlined_call_operand.vmem [shape: bf16[2,8,324], index: 0, kind: input, shape index: {}]
  %s1 = inlined_call_operand.vmem [shape: bf16[2,8,324], index: 1, kind: input, shape index: {}]
  %s2 = inlined_call_operand.vmem [shape: f32[8,1], index: 2, kind: input, shape index: {}]
  %s3 = inlined_call_operand.vmem [shape: f32[8,1], index: 3, kind: input, shape index: {}]
  %s4 = inlined_call_operand.vmem [shape: f32[8,1], index: 4, kind: input, shape index: {}]
  %s5 = inlined_call_operand.vmem [shape: f32[8,1], index: 5, kind: input, shape index: {}]
  %s6 = inlined_call_operand.vmem [shape: f32[2,8,324], index: 6, kind: output, shape index: {}]
  %s7 = sld [smem:[#allocation0]]
  $region57: #{rblock_pallas.7} parent=0
    _
  %s9 = ssub.s32 1, %s7
  %s10 = scalar_select 0, %s9, %s7
  loop: start=0, step=1, limit=4
  $region2: #{rblock_pallas.7} parent=0 // loop_pre_header
    _
  $region3: #{rblock_pallas.7} parent=0 // loop_header
    %s12 = sphi 0, %s16
    %p13 = scmp.ge.s32.totalorder %s12, 4
    %s22 = sphi 0, %s24
    %s25 = sphi 0, %s22
    %s26 = sphi 0, %s25
    %s42 = sphi 0, %s26
    %s48 = sphi 0, %s50
    %s51 = sphi 0, %s48
    %s52 = sphi 0, %s51
    %s68 = sphi 0, %s52
    %s72 = sphi 0, %s72
    %s74 = sphi 0, %s72
    %s75 = sphi 0, %s74
    %s89 = sphi 0, %s75
    %s93 = sphi 0, %s93
    %s95 = sphi 0, %s93
    %s96 = sphi 0, %s95
    %s110 = sphi 0, %s96
    %s114 = sphi 0, %s114
    %s116 = sphi 0, %s114
    %s117 = sphi 0, %s116
    %s131 = sphi 0, %s117
    %s135 = sphi 0, %s135
    %s137 = sphi 0, %s135
    %s138 = sphi 0, %s137
    %s152 = sphi 0, %s138
    %s158 = sphi 0, %s160
    %s161 = sphi 0, %s158
    %s162 = sphi 0, %s161
    %s178 = sphi 0, %s162
  $region4: #{rblock_pallas.7} parent=0 // loop_header_branch
    %15 = sbr.rel (%p13) target = $region8
  $region5: #{rblock_pallas.7} parent=0 // loop_body
    %s17 = ssub.s32 %s12, 1
    %s18 = ssub.s32 %s12, 2
    %s19 = sadd.s32 %s12, 1
    %s20 = ssub.s32 %s12, %s19
    %p21 = scmp.eq.s32.totalorder %s20, 0
    %s23 = sadd.s32 %s22, 1
    %s24 = scalar_select %p21, %s22, %s23
    %p27 = pneg %p21
    %p28 = scmp.eq.s32.totalorder %s12, 1
    %p29 = por %p27, %p28
    %p30 = scmp.ne.s32.totalorder %s22, %s25
    %p31 = scmp.eq.s32.totalorder %s12, 0
    %p32 = por %p30, %p31
    %p33 = scmp.ne.s32.totalorder %s22, %s25
    %p34 = scmp.eq.s32.totalorder %s17, 1
    %p35 = por %p33, %p34
    %p36 = scmp.ne.s32.totalorder %s25, %s26
    %p37 = scmp.eq.s32.totalorder %s17, 0
    %p38 = por %p36, %p37
    %p39 = scmp.ne.s32.totalorder %s25, %s26
    %p40 = scmp.eq.s32.totalorder %s18, 1
    %p41 = por %p39, %p40
    %p43 = scmp.ne.s32.totalorder %s26, %s42
    %p44 = scmp.eq.s32.totalorder %s18, 0
    %p45 = por %p43, %p44
    %s46 = ssub.s32 %s12, %s19
    %p47 = scmp.eq.s32.totalorder %s46, 0
    %s49 = sadd.s32 %s48, 1
    %s50 = scalar_select %p47, %s48, %s49
    %p53 = pneg %p47
    %p54 = scmp.eq.s32.totalorder %s12, 1
    %p55 = por %p53, %p54
    %p56 = scmp.ne.s32.totalorder %s48, %s51
    %p57 = scmp.eq.s32.totalorder %s12, 0
    %p58 = por %p56, %p57
    %p59 = scmp.ne.s32.totalorder %s48, %s51
    %p60 = scmp.eq.s32.totalorder %s17, 1
    %p61 = por %p59, %p60
    %p62 = scmp.ne.s32.totalorder %s51, %s52
    %p63 = scmp.eq.s32.totalorder %s17, 0
    %p64 = por %p62, %p63
    %p65 = scmp.ne.s32.totalorder %s51, %s52
    %p66 = scmp.eq.s32.totalorder %s18, 1
    %p67 = por %p65, %p66
    %p69 = scmp.ne.s32.totalorder %s52, %s68
    %p70 = scmp.eq.s32.totalorder %s18, 0
    %p71 = por %p69, %p70
    %s73 = sadd.s32 %s72, 1
    %p76 = scmp.eq.s32.totalorder %s12, 1
    %p77 = scmp.ne.s32.totalorder %s72, %s74
    %p78 = scmp.eq.s32.totalorder %s12, 0
    %p79 = por %p77, %p78
    %p80 = scmp.ne.s32.totalorder %s72, %s74
    %p81 = scmp.eq.s32.totalorder %s17, 1
    %p82 = por %p80, %p81
    %p83 = scmp.ne.s32.totalorder %s74, %s75
    %p84 = scmp.eq.s32.totalorder %s17, 0
    %p85 = por %p83, %p84
    %p86 = scmp.ne.s32.totalorder %s74, %s75
    %p87 = scmp.eq.s32.totalorder %s18, 1
    %p88 = por %p86, %p87
    %p90 = scmp.ne.s32.totalorder %s75, %s89
    %p91 = scmp.eq.s32.totalorder %s18, 0
    %p92 = por %p90, %p91
    %s94 = sadd.s32 %s93, 1
    %p97 = scmp.eq.s32.totalorder %s12, 1
    %p98 = scmp.ne.s32.totalorder %s93, %s95
    %p99 = scmp.eq.s32.totalorder %s12, 0
    %p100 = por %p98, %p99
    %p101 = scmp.ne.s32.totalorder %s93, %s95
    %p102 = scmp.eq.s32.totalorder %s17, 1
    %p103 = por %p101, %p102
    %p104 = scmp.ne.s32.totalorder %s95, %s96
    %p105 = scmp.eq.s32.totalorder %s17, 0
    %p106 = por %p104, %p105
    %p107 = scmp.ne.s32.totalorder %s95, %s96
    %p108 = scmp.eq.s32.totalorder %s18, 1
    %p109 = por %p107, %p108
    %p111 = scmp.ne.s32.totalorder %s96, %s110
    %p112 = scmp.eq.s32.totalorder %s18, 0
    %p113 = por %p111, %p112
    %s115 = sadd.s32 %s114, 1
    %p118 = scmp.eq.s32.totalorder %s12, 1
    %p119 = scmp.ne.s32.totalorder %s114, %s116
    %p120 = scmp.eq.s32.totalorder %s12, 0
    %p121 = por %p119, %p120
    %p122 = scmp.ne.s32.totalorder %s114, %s116
    %p123 = scmp.eq.s32.totalorder %s17, 1
    %p124 = por %p122, %p123
    %p125 = scmp.ne.s32.totalorder %s116, %s117
    %p126 = scmp.eq.s32.totalorder %s17, 0
    %p127 = por %p125, %p126
    %p128 = scmp.ne.s32.totalorder %s116, %s117
    %p129 = scmp.eq.s32.totalorder %s18, 1
    %p130 = por %p128, %p129
    %p132 = scmp.ne.s32.totalorder %s117, %s131
    %p133 = scmp.eq.s32.totalorder %s18, 0
    %p134 = por %p132, %p133
    %s136 = sadd.s32 %s135, 1
    %p139 = scmp.eq.s32.totalorder %s12, 1
    %p140 = scmp.ne.s32.totalorder %s135, %s137
    %p141 = scmp.eq.s32.totalorder %s12, 0
    %p142 = por %p140, %p141
    %p143 = scmp.ne.s32.totalorder %s135, %s137
    %p144 = scmp.eq.s32.totalorder %s17, 1
    %p145 = por %p143, %p144
    %p146 = scmp.ne.s32.totalorder %s137, %s138
    %p147 = scmp.eq.s32.totalorder %s17, 0
    %p148 = por %p146, %p147
    %p149 = scmp.ne.s32.totalorder %s137, %s138
    %p150 = scmp.eq.s32.totalorder %s18, 1
    %p151 = por %p149, %p150
    %p153 = scmp.ne.s32.totalorder %s138, %s152
    %p154 = scmp.eq.s32.totalorder %s18, 0
    %p155 = por %p153, %p154
    %s156 = ssub.s32 %s12, %s19
    %p157 = scmp.eq.s32.totalorder %s156, 0
    %s159 = sadd.s32 %s158, 1
    %s160 = scalar_select %p157, %s158, %s159
    %p163 = pneg %p157
    %p164 = scmp.eq.s32.totalorder %s12, 1
    %p165 = por %p163, %p164
    %p166 = scmp.ne.s32.totalorder %s158, %s161
    %p167 = scmp.eq.s32.totalorder %s12, 0
    %p168 = por %p166, %p167
    %p169 = scmp.ne.s32.totalorder %s158, %s161
    %p170 = scmp.eq.s32.totalorder %s17, 1
    %p171 = por %p169, %p170
    %p172 = scmp.ne.s32.totalorder %s161, %s162
    %p173 = scmp.eq.s32.totalorder %s17, 0
    %p174 = por %p172, %p173
    %p175 = scmp.ne.s32.totalorder %s161, %s162
    %p176 = scmp.eq.s32.totalorder %s18, 1
    %p177 = por %p175, %p176
    %p179 = scmp.ne.s32.totalorder %s162, %s178
    %p180 = scmp.eq.s32.totalorder %s18, 0
    %p181 = por %p179, %p180
    %p182 = scmp.le.s32.totalorder 1, %s12
    %p183 = scmp.lt.s32.totalorder %s12, 3
    %p184 = pnand %p182, %p183
    %p185 = pneg %p184
    // Predicated region
    $region9: #{rblock_pallas.7} parent=5 // pred_check
      _
    $region10: #{rblock_pallas.7} parent=5 // pred_check_branch
      %187 = sbr.rel (%p184) target = $region12
    $region11: #{rblock_pallas.7} parent=5 // pred_region
      %s188 = ssub.s32 %s12, 1
      // Predicated region
      $region13: #{rblock_pallas.7} parent=11 // pred_check
        %p189 = pneg %p85
      $region14: #{rblock_pallas.7} parent=11 // pred_check_branch
        %191 = sbr.rel (%p189) target = $region16
      $region15: #{rblock_pallas.7} parent=11 // pred_region
        _
      $region16: #{rblock_pallas.7} parent=11 // pred_fallthru
        _
      // Predicated region
      $region17: #{rblock_pallas.7} parent=11 // pred_check
        %p192 = pneg %p106
      $region18: #{rblock_pallas.7} parent=11 // pred_check_branch
        %194 = sbr.rel (%p192) target = $region20
      $region19: #{rblock_pallas.7} parent=11 // pred_region
        _
      $region20: #{rblock_pallas.7} parent=11 // pred_fallthru
        _
      // Predicated region
      $region21: #{rblock_pallas.7} parent=11 // pred_check
        %p195 = pneg %p127
      $region22: #{rblock_pallas.7} parent=11 // pred_check_branch
        %197 = sbr.rel (%p195) target = $region24
      $region23: #{rblock_pallas.7} parent=11 // pred_region
        _
      $region24: #{rblock_pallas.7} parent=11 // pred_fallthru
        _
      // Predicated region
      $region25: #{rblock_pallas.7} parent=11 // pred_check
        %p198 = pneg %p148
      $region26: #{rblock_pallas.7} parent=11 // pred_check_branch
        %200 = sbr.rel (%p198) target = $region28
      $region27: #{rblock_pallas.7} parent=11 // pred_region
        _
      $region28: #{rblock_pallas.7} parent=11 // pred_fallthru
        _
    $region12: #{rblock_pallas.7} parent=5 // pred_fallthru
      _
    %p201 = scmp.lt.s32.totalorder %s12, 2
    // Predicated region
    $region29: #{rblock_pallas.7} parent=5 // pred_check
      %p202 = pneg %p201
    $region30: #{rblock_pallas.7} parent=5 // pred_check_branch
      %204 = sbr.rel (%p202) target = $region32
    $region31: #{rblock_pallas.7} parent=5 // pred_region
      // Predicated region
      $region33: #{rblock_pallas.7} parent=31 // pred_check
        %p205 = pneg %p32
      $region34: #{rblock_pallas.7} parent=31 // pred_check_branch
        %207 = sbr.rel (%p205) target = $region36
      $region35: #{rblock_pallas.7} parent=31 // pred_region
        %p208 = scmp.lt.s32.totalorder %s12, 1
        %s209 = scalar_select %p208, %s12, 1
        %s210 = smul.addr %s209, 3
        %s211 = smul.addr %s210, 4
        %s212 = scalar_lea.vmem %s0, %s211
      $region36: #{rblock_pallas.7} parent=31 // pred_fallthru
        _
      // Predicated region
      $region37: #{rblock_pallas.7} parent=31 // pred_check
        %p213 = pneg %p58
      $region38: #{rblock_pallas.7} parent=31 // pred_check_branch
        %215 = sbr.rel (%p213) target = $region40
      $region39: #{rblock_pallas.7} parent=31 // pred_region
        %p216 = scmp.lt.s32.totalorder %s12, 1
        %s217 = scalar_select %p216, %s12, 1
        %s218 = smul.addr %s217, 3
        %s219 = smul.addr %s218, 4
        %s220 = scalar_lea.vmem %s1, %s219
      $region40: #{rblock_pallas.7} parent=31 // pred_fallthru
        _
    $region32: #{rblock_pallas.7} parent=5 // pred_fallthru
      _
    %p221 = scmp.le.s32.totalorder 1, %s12
    %p222 = scmp.lt.s32.totalorder %s12, 3
    %p223 = pnand %p221, %p222
    %p224 = pneg %p223
    // Predicated region
    $region41: #{rblock_pallas.7} parent=5 // pred_check
      _
    $region42: #{rblock_pallas.7} parent=5 // pred_check_branch
      %226 = sbr.rel (%p223) target = $region44
    $region43: #{rblock_pallas.7} parent=5 // pred_region
      %s227 = ssub.s32 %s12, 1
      %p228 = scmp.lt.s32.totalorder %s17, 1
      %s229 = scalar_select %p228, %s17, 1
      %s230 = smul.addr %s229, 3
      %s231 = smul.addr %s230, 4
      %s232 = scalar_lea.vmem %s0, %s231
      %p233 = pneg %p38
      %p234 = pneg %p35
      %p235 = scmp.lt.s32.totalorder %s17, 1
      %s236 = scalar_select %p235, %s17, 1
      %s237 = smul.addr %s236, 3
      %s238 = smul.addr %s237, 4
      %s239 = scalar_lea.vmem %s1, %s238
      %p240 = pneg %p64
      %p241 = pneg %p61
      %p242 = pneg %p85
      %p243 = pneg %p82
      %p244 = pneg %p106
      %p245 = pneg %p103
      %p246 = pneg %p127
      %p247 = pneg %p124
      %p248 = pneg %p148
      %p249 = pneg %p145
      %p250 = pneg %p174
      %p251 = pneg %p171
      %p252 = scmp.lt.s32.totalorder %s17, 1
      %s253 = scalar_select %p252, %s17, 1
      %s254 = smul.addr %s253, 3
      %s255 = smul.addr %s254, 8
      %s256 = scalar_lea.vmem %s6, %s255
      %p257 = scmp.lt.s32.totalorder %s17, 1
      %s258 = scalar_select %p257, %s17, 1
      %s259 = smul.addr %s258, 3
      %s260 = smul.addr %s259, 4
      %s261 = scalar_lea.vmem %s0, %s260
      %p262 = scmp.lt.s32.totalorder %s17, 1
      %s263 = scalar_select %p262, %s17, 1
      %s264 = smul.addr %s263, 3
      %s265 = smul.addr %s264, 4
      %s266 = scalar_lea.vmem %s1, %s265
      %p267 = scmp.lt.s32.totalorder %s17, 1
      %s268 = scalar_select %p267, %s17, 1
      %s269 = smul.addr %s268, 3
      %s270 = smul.addr %s269, 8
      %s271 = scalar_lea.vmem %s6, %s270
      %v272 = vld [vmem:[%s261] sm:$0xff]
      %v273 = vld [vmem:[%s261 + $0x8] sm:$0xf]
      %v274 = vunpack.c.l.bf16 %v272
      %v275 = vunpack.c.h.bf16 %v272
      %v276 = vunpack.c.l.bf16 %v273
      %v277 = vld [vmem:[%s2] sm:$0xff]
      %279 = vset.pattern.permute.xlu0 0
      %280 = vperm.xlu0 %279, %v277
      %v281 = vpop.permute.xlu0 %280
      %v283 = vmul.f32 %v274, %v281
      %v284 = vmul.f32 %v275, %v281
      %v285 = vmul.f32 %v276, %v281
      %v286 = vld [vmem:[%s3] sm:$0xff]
      %288 = vset.pattern.permute.xlu0 0
      %289 = vperm.xlu0 %288, %v286
      %v290 = vpop.permute.xlu0 %289
      %v292 = vadd.f32 %v283, %v290
      %v293 = vadd.f32 %v284, %v290
      %v294 = vadd.f32 %v285, %v290
      %v295 = vld [vmem:[%s266] sm:$0xff]
      %v296 = vld [vmem:[%s266 + $0x8] sm:$0xf]
      %v297 = vunpack.c.l.bf16 %v295
      %v298 = vunpack.c.h.bf16 %v295
      %v299 = vunpack.c.l.bf16 %v296
      %v300 = vld [vmem:[%s4] sm:$0xff]
      %302 = vset.pattern.permute.xlu0 0
      %303 = vperm.xlu0 %302, %v300
      %v304 = vpop.permute.xlu0 %303
      %v306 = vmul.f32 %v297, %v304
      %v307 = vmul.f32 %v298, %v304
      %v308 = vmul.f32 %v299, %v304
      %v309 = vld [vmem:[%s5] sm:$0xff]
      %311 = vset.pattern.permute.xlu0 0
      %312 = vperm.xlu0 %311, %v309
      %v313 = vpop.permute.xlu0 %312
      %v315 = vadd.f32 %v306, %v313
      %v316 = vadd.f32 %v307, %v313
      %v317 = vadd.f32 %v308, %v313
      %v318 = vadd.f32 %v292, %v315
      %v319 = vadd.f32 %v293, %v316
      %v320 = vadd.f32 %v294, %v317
      %v321 = vmax.f32 %v318, 0.0
      %v322 = vmax.f32 %v319, 0.0
      %v323 = vmax.f32 %v320, 0.0
      %324 = vst [vmem:[%s271] sm:$0xff] %v321
      %325 = vst [vmem:[%s271 + $0x8] sm:$0xff] %v322
      %vm326 = vcmask 556032
      %327 = vst.msk [vmem:[%s271 + $0x10] sm:$0xff] %vm326, %v323
      %p328 = scmp.lt.s32.totalorder %s17, 1
      %s329 = scalar_select %p328, %s17, 1
      %s330 = smul.addr %s329, 3
      %s331 = smul.addr %s330, 8
      %s332 = scalar_lea.vmem %s6, %s331
      // Predicated region
      $region45: #{rblock_pallas.7} parent=43 // pred_check
        %p333 = pneg %p171
      $region46: #{rblock_pallas.7} parent=43 // pred_check_branch
        %335 = sbr.rel (%p333) target = $region48
      $region47: #{rblock_pallas.7} parent=43 // pred_region
        _
      $region48: #{rblock_pallas.7} parent=43 // pred_fallthru
        _
    $region44: #{rblock_pallas.7} parent=5 // pred_fallthru
      _
    %p336 = scmp.le.s32.totalorder 2, %s12
    // Predicated region
    $region49: #{rblock_pallas.7} parent=5 // pred_check
      %p337 = pneg %p336
    $region50: #{rblock_pallas.7} parent=5 // pred_check_branch
      %339 = sbr.rel (%p337) target = $region52
    $region51: #{rblock_pallas.7} parent=5 // pred_region
      %s340 = ssub.s32 %s12, 2
      // Predicated region
      $region53: #{rblock_pallas.7} parent=51 // pred_check
        %p341 = pneg %p177
      $region54: #{rblock_pallas.7} parent=51 // pred_check_branch
        %343 = sbr.rel (%p341) target = $region56
      $region55: #{rblock_pallas.7} parent=51 // pred_region
        %p344 = scmp.lt.s32.totalorder %s18, 1
        %s345 = scalar_select %p344, %s18, 1
        %s346 = smul.addr %s345, 3
        %s347 = smul.addr %s346, 8
        %s348 = scalar_lea.vmem %s6, %s347
      $region56: #{rblock_pallas.7} parent=51 // pred_fallthru
        _
    $region52: #{rblock_pallas.7} parent=5 // pred_fallthru
      _
  $region6: #{rblock_pallas.7} parent=0 // loop_footer
    %s16 = sadd.s32 1, %s12
  $region7: #{rblock_pallas.7} parent=0 // loop_footer_branch
    %11 = sbr.rel target = $region3
  $region8: #{rblock_pallas.7} parent=0 // loop_exit
    _

// kernel: rblock_pallas.6
$region0: #{rblock_pallas.6}
  #allocation0 [shape = 'u32[]', space=smem, size = 0x4, offset = 0x4, fixed_abs, tag = 'smem constant byte address 0x4 - core index']
  #allocation1 [shape = 'u32[144,128]{1,0:T(1,128)}', space=vmem, size = 0x12000, scoped, tag = 'internal scratch']
  %s0 = inlined_call_operand.vmem [shape: bf16[2,8,362], index: 0, kind: input, shape index: {}]
  %s1 = inlined_call_operand.vmem [shape: bf16[9,8,8], index: 1, kind: input, shape index: {}]
  %s2 = inlined_call_operand.vmem [shape: f32[1,324], index: 2, kind: input, shape index: {}]
  %s3 = inlined_call_operand.vmem [shape: bf16[2,8,324], index: 3, kind: output, shape index: {0}]
  %s4 = inlined_call_operand.vmem [shape: f32[2,8,1], index: 4, kind: output, shape index: {1}]
  %s5 = inlined_call_operand.vmem [shape: f32[2,8,1], index: 5, kind: output, shape index: {2}]
  %6 = xla_tuple %s3, %s4, %s5
  %s7 = sld [smem:[#allocation0]]
  $region65: #{rblock_pallas.6} parent=0
    _
  %s9 = ssub.s32 1, %s7
  %s10 = scalar_select 0, %s9, %s7
  loop: start=0, step=1, limit=4
  $region2: #{rblock_pallas.6} parent=0 // loop_pre_header
    _
  $region3: #{rblock_pallas.6} parent=0 // loop_header
    %s12 = sphi 0, %s16
    %p13 = scmp.ge.s32.totalorder %s12, 4
    %s19 = sphi 0, %s31
    %s20 = sphi 0, %s27
    %s21 = sphi 0, %s19
    %s22 = sphi 0, %s20
    %s23 = sphi 0, %s21
    %s24 = sphi 0, %s22
    %s36 = sphi 0, %s38
    %s39 = sphi 0, %s36
    %s40 = sphi 0, %s39
    %s56 = sphi 0, %s40
    %s60 = sphi 0, %s60
    %s62 = sphi 0, %s60
    %s63 = sphi 0, %s62
    %s77 = sphi 0, %s63
    %s81 = sphi 0, %s81
    %s83 = sphi 0, %s81
    %s84 = sphi 0, %s83
    %s98 = sphi 0, %s84
    %s106 = sphi 0, %s108
    %s109 = sphi 0, %s106
    %s110 = sphi 0, %s109
    %s126 = sphi 0, %s110
    %s132 = sphi 0, %s134
    %s135 = sphi 0, %s132
    %s136 = sphi 0, %s135
    %s152 = sphi 0, %s136
    %s158 = sphi 0, %s160
    %s161 = sphi 0, %s158
    %s162 = sphi 0, %s161
    %s178 = sphi 0, %s162
  $region4: #{rblock_pallas.6} parent=0 // loop_header_branch
    %15 = sbr.rel (%p13) target = $region8
  $region5: #{rblock_pallas.6} parent=0 // loop_body
    %s17 = ssub.s32 %s12, 1
    %s18 = ssub.s32 %s12, 2
    %s25 = sadd.s32 1, %s20
    %p26 = scmp.ge.s32.totalorder %s25, 1
    %s27 = scalar_select %p26, 0, %s25
    %s28 = sadd.s32 1, %s19
    %s29 = scalar_select %p26, %s28, %s19
    %p30 = scmp.ge.s32.totalorder %s29, 2
    %s31 = scalar_select %p30, 0, %s29
    %s32 = sadd.s32 %s19, %s20
    %s33 = sadd.s32 %s31, %s27
    %s34 = ssub.s32 %s32, %s33
    %p35 = scmp.eq.s32.totalorder %s34, 0
    %s37 = sadd.s32 %s36, 1
    %s38 = scalar_select %p35, %s36, %s37
    %p41 = pneg %p35
    %p42 = scmp.eq.s32.totalorder %s12, 1
    %p43 = por %p41, %p42
    %p44 = scmp.ne.s32.totalorder %s36, %s39
    %p45 = scmp.eq.s32.totalorder %s12, 0
    %p46 = por %p44, %p45
    %p47 = scmp.ne.s32.totalorder %s36, %s39
    %p48 = scmp.eq.s32.totalorder %s17, 1
    %p49 = por %p47, %p48
    %p50 = scmp.ne.s32.totalorder %s39, %s40
    %p51 = scmp.eq.s32.totalorder %s17, 0
    %p52 = por %p50, %p51
    %p53 = scmp.ne.s32.totalorder %s39, %s40
    %p54 = scmp.eq.s32.totalorder %s18, 1
    %p55 = por %p53, %p54
    %p57 = scmp.ne.s32.totalorder %s40, %s56
    %p58 = scmp.eq.s32.totalorder %s18, 0
    %p59 = por %p57, %p58
    %s61 = sadd.s32 %s60, 1
    %p64 = scmp.eq.s32.totalorder %s12, 1
    %p65 = scmp.ne.s32.totalorder %s60, %s62
    %p66 = scmp.eq.s32.totalorder %s12, 0
    %p67 = por %p65, %p66
    %p68 = scmp.ne.s32.totalorder %s60, %s62
    %p69 = scmp.eq.s32.totalorder %s17, 1
    %p70 = por %p68, %p69
    %p71 = scmp.ne.s32.totalorder %s62, %s63
    %p72 = scmp.eq.s32.totalorder %s17, 0
    %p73 = por %p71, %p72
    %p74 = scmp.ne.s32.totalorder %s62, %s63
    %p75 = scmp.eq.s32.totalorder %s18, 1
    %p76 = por %p74, %p75
    %p78 = scmp.ne.s32.totalorder %s63, %s77
    %p79 = scmp.eq.s32.totalorder %s18, 0
    %p80 = por %p78, %p79
    %s82 = sadd.s32 %s81, 1
    %p85 = scmp.eq.s32.totalorder %s12, 1
    %p86 = scmp.ne.s32.totalorder %s81, %s83
    %p87 = scmp.eq.s32.totalorder %s12, 0
    %p88 = por %p86, %p87
    %p89 = scmp.ne.s32.totalorder %s81, %s83
    %p90 = scmp.eq.s32.totalorder %s17, 1
    %p91 = por %p89, %p90
    %p92 = scmp.ne.s32.totalorder %s83, %s84
    %p93 = scmp.eq.s32.totalorder %s17, 0
    %p94 = por %p92, %p93
    %p95 = scmp.ne.s32.totalorder %s83, %s84
    %p96 = scmp.eq.s32.totalorder %s18, 1
    %p97 = por %p95, %p96
    %p99 = scmp.ne.s32.totalorder %s84, %s98
    %p100 = scmp.eq.s32.totalorder %s18, 0
    %p101 = por %p99, %p100
    %s102 = sadd.s32 %s19, %s20
    %s103 = sadd.s32 %s31, %s27
    %s104 = ssub.s32 %s102, %s103
    %p105 = scmp.eq.s32.totalorder %s104, 0
    %s107 = sadd.s32 %s106, 1
    %s108 = scalar_select %p105, %s106, %s107
    %p111 = pneg %p105
    %p112 = scmp.eq.s32.totalorder %s12, 1
    %p113 = por %p111, %p112
    %p114 = scmp.ne.s32.totalorder %s106, %s109
    %p115 = scmp.eq.s32.totalorder %s12, 0
    %p116 = por %p114, %p115
    %p117 = scmp.ne.s32.totalorder %s106, %s109
    %p118 = scmp.eq.s32.totalorder %s17, 1
    %p119 = por %p117, %p118
    %p120 = scmp.ne.s32.totalorder %s109, %s110
    %p121 = scmp.eq.s32.totalorder %s17, 0
    %p122 = por %p120, %p121
    %p123 = scmp.ne.s32.totalorder %s109, %s110
    %p124 = scmp.eq.s32.totalorder %s18, 1
    %p125 = por %p123, %p124
    %p127 = scmp.ne.s32.totalorder %s110, %s126
    %p128 = scmp.eq.s32.totalorder %s18, 0
    %p129 = por %p127, %p128
    %s130 = ssub.s32 %s19, %s31
    %p131 = scmp.eq.s32.totalorder %s130, 0
    %s133 = sadd.s32 %s132, 1
    %s134 = scalar_select %p131, %s132, %s133
    %p137 = pneg %p131
    %p138 = scmp.eq.s32.totalorder %s12, 1
    %p139 = por %p137, %p138
    %p140 = scmp.ne.s32.totalorder %s132, %s135
    %p141 = scmp.eq.s32.totalorder %s12, 0
    %p142 = por %p140, %p141
    %p143 = scmp.ne.s32.totalorder %s132, %s135
    %p144 = scmp.eq.s32.totalorder %s17, 1
    %p145 = por %p143, %p144
    %p146 = scmp.ne.s32.totalorder %s135, %s136
    %p147 = scmp.eq.s32.totalorder %s17, 0
    %p148 = por %p146, %p147
    %p149 = scmp.ne.s32.totalorder %s135, %s136
    %p150 = scmp.eq.s32.totalorder %s18, 1
    %p151 = por %p149, %p150
    %p153 = scmp.ne.s32.totalorder %s136, %s152
    %p154 = scmp.eq.s32.totalorder %s18, 0
    %p155 = por %p153, %p154
    %s156 = ssub.s32 %s19, %s31
    %p157 = scmp.eq.s32.totalorder %s156, 0
    %s159 = sadd.s32 %s158, 1
    %s160 = scalar_select %p157, %s158, %s159
    %p163 = pneg %p157
    %p164 = scmp.eq.s32.totalorder %s12, 1
    %p165 = por %p163, %p164
    %p166 = scmp.ne.s32.totalorder %s158, %s161
    %p167 = scmp.eq.s32.totalorder %s12, 0
    %p168 = por %p166, %p167
    %p169 = scmp.ne.s32.totalorder %s158, %s161
    %p170 = scmp.eq.s32.totalorder %s17, 1
    %p171 = por %p169, %p170
    %p172 = scmp.ne.s32.totalorder %s161, %s162
    %p173 = scmp.eq.s32.totalorder %s17, 0
    %p174 = por %p172, %p173
    %p175 = scmp.ne.s32.totalorder %s161, %s162
    %p176 = scmp.eq.s32.totalorder %s18, 1
    %p177 = por %p175, %p176
    %p179 = scmp.ne.s32.totalorder %s162, %s178
    %p180 = scmp.eq.s32.totalorder %s18, 0
    %p181 = por %p179, %p180
    %p182 = scmp.le.s32.totalorder 1, %s12
    %p183 = scmp.lt.s32.totalorder %s12, 3
    %p184 = pnand %p182, %p183
    %p185 = pneg %p184
    // Predicated region
    $region9: #{rblock_pallas.6} parent=5 // pred_check
      _
    $region10: #{rblock_pallas.6} parent=5 // pred_check_branch
      %187 = sbr.rel (%p184) target = $region12
    $region11: #{rblock_pallas.6} parent=5 // pred_region
      %s188 = ssub.s32 %s12, 1
      // Predicated region
      $region13: #{rblock_pallas.6} parent=11 // pred_check
        %p189 = pneg %p73
      $region14: #{rblock_pallas.6} parent=11 // pred_check_branch
        %191 = sbr.rel (%p189) target = $region16
      $region15: #{rblock_pallas.6} parent=11 // pred_region
        _
      $region16: #{rblock_pallas.6} parent=11 // pred_fallthru
        _
      // Predicated region
      $region17: #{rblock_pallas.6} parent=11 // pred_check
        %p192 = pneg %p94
      $region18: #{rblock_pallas.6} parent=11 // pred_check_branch
        %194 = sbr.rel (%p192) target = $region20
      $region19: #{rblock_pallas.6} parent=11 // pred_region
        _
      $region20: #{rblock_pallas.6} parent=11 // pred_fallthru
        _
    $region12: #{rblock_pallas.6} parent=5 // pred_fallthru
      _
    %p195 = scmp.lt.s32.totalorder %s12, 2
    // Predicated region
    $region21: #{rblock_pallas.6} parent=5 // pred_check
      %p196 = pneg %p195
    $region22: #{rblock_pallas.6} parent=5 // pred_check_branch
      %198 = sbr.rel (%p196) target = $region24
    $region23: #{rblock_pallas.6} parent=5 // pred_region
      // Predicated region
      $region25: #{rblock_pallas.6} parent=23 // pred_check
        %p199 = pneg %p46
      $region26: #{rblock_pallas.6} parent=23 // pred_check_branch
        %201 = sbr.rel (%p199) target = $region28
      $region27: #{rblock_pallas.6} parent=23 // pred_region
        %s202 = sadd.s32 %s19, %s20
        %p203 = scmp.lt.s32.totalorder %s202, 1
        %s204 = scalar_select %p203, %s202, 1
        %s205 = smul.addr %s204, 3
        %s206 = smul.addr %s205, 4
        %s207 = scalar_lea.vmem %s0, %s206
        %s208 = sadd.s32 %s19, %s20
      $region28: #{rblock_pallas.6} parent=23 // pred_fallthru
        _
    $region24: #{rblock_pallas.6} parent=5 // pred_fallthru
      _
    %p209 = scmp.le.s32.totalorder 1, %s12
    %p210 = scmp.lt.s32.totalorder %s12, 3
    %p211 = pnand %p209, %p210
    %p212 = pneg %p211
    // Predicated region
    $region29: #{rblock_pallas.6} parent=5 // pred_check
      _
    $region30: #{rblock_pallas.6} parent=5 // pred_check_branch
      %214 = sbr.rel (%p211) target = $region32
    $region31: #{rblock_pallas.6} parent=5 // pred_region
      %s215 = ssub.s32 %s12, 1
      %s216 = sadd.s32 %s21, %s22
      %p217 = scmp.lt.s32.totalorder %s216, 1
      %s218 = scalar_select %p217, %s216, 1
      %s219 = smul.addr %s218, 3
      %s220 = smul.addr %s219, 4
      %s221 = scalar_lea.vmem %s0, %s220
      %p222 = pneg %p52
      %p223 = pneg %p49
      %p224 = pneg %p73
      %p225 = pneg %p70
      %p226 = pneg %p94
      %p227 = pneg %p91
      %p228 = pneg %p122
      %p229 = pneg %p119
      %s230 = sadd.s32 %s21, %s22
      %p231 = scmp.lt.s32.totalorder %s230, 1
      %s232 = scalar_select %p231, %s230, 1
      %s233 = smul.addr %s232, 3
      %s234 = smul.addr %s233, 4
      %s235 = scalar_lea.vmem %s3, %s234
      %p236 = pneg %p148
      %p237 = pneg %p145
      %p238 = scmp.lt.s32.totalorder %s21, 1
      %s239 = scalar_select %p238, %s21, 1
      %s240 = smul.addr %s239, 8
      %s241 = scalar_lea.vmem %s4, %s240
      %p242 = pneg %p174
      %p243 = pneg %p171
      %p244 = scmp.lt.s32.totalorder %s21, 1
      %s245 = scalar_select %p244, %s21, 1
      %s246 = smul.addr %s245, 8
      %s247 = scalar_lea.vmem %s5, %s246
      %s248 = sadd.s32 %s21, %s22
      %p249 = scmp.lt.s32.totalorder %s248, 1
      %s250 = scalar_select %p249, %s248, 1
      %s251 = smul.addr %s250, 3
      %s252 = smul.addr %s251, 4
      %s253 = scalar_lea.vmem %s0, %s252
      %s254 = sadd.s32 %s21, %s22
      %s255 = sadd.s32 %s21, %s22
      %p256 = scmp.lt.s32.totalorder %s255, 1
      %s257 = scalar_select %p256, %s255, 1
      %s258 = smul.addr %s257, 3
      %s259 = smul.addr %s258, 4
      %s260 = scalar_lea.vmem %s3, %s259
      %s261 = sadd.s32 %s21, %s22
      %p262 = scmp.lt.s32.totalorder %s21, 1
      %s263 = scalar_select %p262, %s21, 1
      %s264 = smul.addr %s263, 8
      %s265 = scalar_lea.vmem %s4, %s264
      %p266 = scmp.lt.s32.totalorder %s21, 1
      %s267 = scalar_select %p266, %s21, 1
      %s268 = smul.addr %s267, 8
      %s269 = scalar_lea.vmem %s5, %s268
      %p271 = scmp.eq.s32.totalorder %s22, 0
      // Predicated region
      $region33: #{rblock_pallas.6} parent=31 // pred_check
        %p272 = pneg %p271
      $region34: #{rblock_pallas.6} parent=31 // pred_check_branch
        %274 = sbr.rel (%p272) target = $region36
      $region35: #{rblock_pallas.6} parent=31 // pred_region
        %vm275 = vcmask 7168
        %276 = vst.msk [vmem:[%s265] sm:$0xff] %vm275, 0.0
        %277 = vst.msk [vmem:[%s269] sm:$0xff] %vm275, 0.0
      $region36: #{rblock_pallas.6} parent=31 // pred_fallthru
        _
      %v278 = vld [vmem:[%s1] sm:$0xf]
      %v279 = vld [vmem:[%s253] sm:$0xff]
      %v280 = vld [vmem:[%s253 + $0x8] sm:$0xf]
      %s281 = scalar_lea.vmem %s1, 4
      %v282 = vld [vmem:[%s281] sm:$0xf]
      %v285 = vunpack.c.l.b16 %v279
      %v286 = vunpack.c.h.b16 %v279
      %v287 = vunpack.c.l.b16 %v280
      %v288 = vpack.c.b16 %v285, %v285
      %v289 = vpack.c.b16 %v286, %v286
      %v290 = vpack.c.b16 %v287, %v287
      %291 = vrot.lane.b32.xlu0 %v288, 127
      %v292 = vpop.permute.xlu0 %291
      %293 = vrot.lane.b32.xlu0 %v289, 127
      %v294 = vpop.permute.xlu0 %293
      %295 = vrot.lane.b32.xlu0 %v290, 127
      %v296 = vpop.permute.xlu0 %295
      %vm297 = vcmask 1039360
      %v298 = vsel %vm297, %v292, %v294
      %v299 = vsel %vm297, %v294, %v296
      %vm300 = vcmask 64512
      %v302 = vsel %vm300, %v282, 0
      %vm304 = vcmask 1043456
      %v306 = vsel %vm304, %v298, 0
      %v309 = vsel %vm304, %v299, 0
      %v312 = vsel %vm304, %v296, 0
      %314 = vmatprep.subr.bf16.mxu0 %v309
      %315 = vmatpush1.bf16.msra.mxu0 %v306
      %316 = vmatprep.subr.bf16.mxu0 0
      %317 = vmatpush1.bf16.msra.mxu0 0
      %318 = vmatprep.subr.bf16.mxu0 0
      %319 = vmatpush1.bf16.msra.mxu0 0
      %320 = vmatprep.subr.bf16.mxu0 0
      %321 = vmatpush1.bf16.msra.mxu0 0
      %322 = vmatprep.subr.bf16.mxu0 0
      %323 = vmatpush1.bf16.msra.mxu0 0
      %324 = vmatprep.subr.bf16.mxu0 0
      %325 = vmatpush1.bf16.msra.mxu0 0
      %326 = vmatprep.subr.bf16.mxu0 0
      %327 = vmatpush1.bf16.msra.mxu0 0
      %328 = vmatprep.subr.bf16.mxu0 0
      %329 = vmatpush1.bf16.msra.mxu0 0
      %330 = vmatprep.subr.bf16.mxu0 0
      %331 = vmatpush1.bf16.msra.mxu0 0
      %332 = vmatprep.subr.bf16.mxu0 0
      %333 = vmatpush1.bf16.msra.mxu0 0
      %334 = vmatprep.subr.bf16.mxu0 0
      %335 = vmatpush1.bf16.msra.mxu0 0
      %336 = vmatprep.subr.bf16.mxu0 0
      %337 = vmatpush1.bf16.msra.mxu0 0
      %338 = vmatprep.subr.bf16.mxu0 0
      %339 = vmatpush1.bf16.msra.mxu0 0
      %340 = vmatprep.subr.bf16.mxu0 0
      %341 = vmatpush1.bf16.msra.mxu0 0
      %342 = vmatprep.subr.bf16.mxu0 0
      %343 = vmatpush1.bf16.msra.mxu0 0
      %344 = vmatprep.subr.bf16.mxu0 0
      %345 = vmatpush1.bf16.msra.mxu0 0
      %346 = vmatprep.mubr.bf16.mxu0 0
      %347 = vmatmul.mubr.bf16.gmra.mrb[0].mxu0 %v302
      %v348 = vpop.f32.mrb[0].mxu0
      %v349 = vadd.f32 0.0, %v348
      %v350 = vpop.f32.mrb[0].mxu0
      %v351 = vadd.f32 0.0, %v350
      %v352 = vpop.f32.mrb[0].mxu0
      %v353 = vpop.f32.mrb[0].mxu0
      %354 = vdwg.mxu0
      %355 = vmatprep.subr.bf16.mxu0 0
      %356 = vmatpush1.bf16.msra.mxu0 %v312
      %357 = vmatprep.subr.bf16.mxu0 0
      %358 = vmatpush1.bf16.msra.mxu0 0
      %359 = vmatprep.subr.bf16.mxu0 0
      %360 = vmatpush1.bf16.msra.mxu0 0
      %361 = vmatprep.subr.bf16.mxu0 0
      %362 = vmatpush1.bf16.msra.mxu0 0
      %363 = vmatprep.subr.bf16.mxu0 0
      %364 = vmatpush1.bf16.msra.mxu0 0
      %365 = vmatprep.subr.bf16.mxu0 0
      %366 = vmatpush1.bf16.msra.mxu0 0
      %367 = vmatprep.subr.bf16.mxu0 0
      %368 = vmatpush1.bf16.msra.mxu0 0
      %369 = vmatprep.subr.bf16.mxu0 0
      %370 = vmatpush1.bf16.msra.mxu0 0
      %371 = vmatprep.subr.bf16.mxu0 0
      %372 = vmatpush1.bf16.msra.mxu0 0
      %373 = vmatprep.subr.bf16.mxu0 0
      %374 = vmatpush1.bf16.msra.mxu0 0
      %375 = vmatprep.subr.bf16.mxu0 0
      %376 = vmatpush1.bf16.msra.mxu0 0
      %377 = vmatprep.subr.bf16.mxu0 0
      %378 = vmatpush1.bf16.msra.mxu0 0
      %379 = vmatprep.subr.bf16.mxu0 0
      %380 = vmatpush1.bf16.msra.mxu0 0
      %381 = vmatprep.subr.bf16.mxu0 0
      %382 = vmatpush1.bf16.msra.mxu0 0
      %383 = vmatprep.subr.bf16.mxu0 0
      %384 = vmatpush1.bf16.msra.mxu0 0
      %385 = vmatprep.subr.bf16.mxu0 0
      %386 = vmatpush1.bf16.msra.mxu0 0
      %387 = vmatprep.mubr.bf16.mxu0 0
      %388 = vmatmul.mubr.bf16.gmra.mrb[0].mxu0 %v302
      %v389 = vpop.f32.mrb[0].mxu0
      %v390 = vadd.f32 0.0, %v389
      %v391 = vpop.f32.mrb[0].mxu0
      %v392 = vpop.f32.mrb[0].mxu0
      %v393 = vpop.f32.mrb[0].mxu0
      %394 = vdwg.mxu0
      %v396 = vsel %vm300, %v278, 0
      %v399 = vsel %vm304, %v288, 0
      %v402 = vsel %vm304, %v289, 0
      %v405 = vsel %vm304, %v290, 0
      %407 = vmatprep.subr.bf16.mxu0 %v402
      %408 = vmatpush1.bf16.msra.mxu0 %v399
      %409 = vmatprep.subr.bf16.mxu0 0
      %410 = vmatpush1.bf16.msra.mxu0 0
      %411 = vmatprep.subr.bf16.mxu0 0
      %412 = vmatpush1.bf16.msra.mxu0 0
      %413 = vmatprep.subr.bf16.mxu0 0
      %414 = vmatpush1.bf16.msra.mxu0 0
      %415 = vmatprep.subr.bf16.mxu0 0
      %416 = vmatpush1.bf16.msra.mxu0 0
      %417 = vmatprep.subr.bf16.mxu0 0
      %418 = vmatpush1.bf16.msra.mxu0 0
      %419 = vmatprep.subr.bf16.mxu0 0
      %420 = vmatpush1.bf16.msra.mxu0 0
      %421 = vmatprep.subr.bf16.mxu0 0
      %422 = vmatpush1.bf16.msra.mxu0 0
      %423 = vmatprep.subr.bf16.mxu0 0
      %424 = vmatpush1.bf16.msra.mxu0 0
      %425 = vmatprep.subr.bf16.mxu0 0
      %426 = vmatpush1.bf16.msra.mxu0 0
      %427 = vmatprep.subr.bf16.mxu0 0
      %428 = vmatpush1.bf16.msra.mxu0 0
      %429 = vmatprep.subr.bf16.mxu0 0
      %430 = vmatpush1.bf16.msra.mxu0 0
      %431 = vmatprep.subr.bf16.mxu0 0
      %432 = vmatpush1.bf16.msra.mxu0 0
      %433 = vmatprep.subr.bf16.mxu0 0
      %434 = vmatpush1.bf16.msra.mxu0 0
      %435 = vmatprep.subr.bf16.mxu0 0
      %436 = vmatpush1.bf16.msra.mxu0 0
      %437 = vmatprep.subr.bf16.mxu0 0
      %438 = vmatpush1.bf16.msra.mxu0 0
      %439 = vmatprep.mubr.bf16.mxu0 0
      %440 = vmatmul.mubr.bf16.gmra.mrb[0].mxu0 %v396
      %v441 = vpop.f32.mrb[0].mxu0
      %v442 = vadd.f32 %v349, %v441
      %v443 = vpop.f32.mrb[0].mxu0
      %v444 = vadd.f32 %v351, %v443
      %v445 = vpop.f32.mrb[0].mxu0
      %v446 = vpop.f32.mrb[0].mxu0
      %447 = vdwg.mxu0
      %448 = vmatprep.subr.bf16.mxu0 0
      %449 = vmatpush1.bf16.msra.mxu0 %v405
      %450 = vmatprep.subr.bf16.mxu0 0
      %451 = vmatpush1.bf16.msra.mxu0 0
      %452 = vmatprep.subr.bf16.mxu0 0
      %453 = vmatpush1.bf16.msra.mxu0 0
      %454 = vmatprep.subr.bf16.mxu0 0
      %455 = vmatpush1.bf16.msra.mxu0 0
      %456 = vmatprep.subr.bf16.mxu0 0
      %457 = vmatpush1.bf16.msra.mxu0 0
      %458 = vmatprep.subr.bf16.mxu0 0
      %459 = vmatpush1.bf16.msra.mxu0 0
      %460 = vmatprep.subr.bf16.mxu0 0
      %461 = vmatpush1.bf16.msra.mxu0 0
      %462 = vmatprep.subr.bf16.mxu0 0
      %463 = vmatpush1.bf16.msra.mxu0 0
      %464 = vmatprep.subr.bf16.mxu0 0
      %465 = vmatpush1.bf16.msra.mxu0 0
      %466 = vmatprep.subr.bf16.mxu0 0
      %467 = vmatpush1.bf16.msra.mxu0 0
      %468 = vmatprep.subr.bf16.mxu0 0
      %469 = vmatpush1.bf16.msra.mxu0 0
      %470 = vmatprep.subr.bf16.mxu0 0
      %471 = vmatpush1.bf16.msra.mxu0 0
      %472 = vmatprep.subr.bf16.mxu0 0
      %473 = vmatpush1.bf16.msra.mxu0 0
      %474 = vmatprep.subr.bf16.mxu0 0
      %475 = vmatpush1.bf16.msra.mxu0 0
      %476 = vmatprep.subr.bf16.mxu0 0
      %477 = vmatpush1.bf16.msra.mxu0 0
      %478 = vmatprep.subr.bf16.mxu0 0
      %479 = vmatpush1.bf16.msra.mxu0 0
      %480 = vmatprep.mubr.bf16.mxu0 0
      %481 = vmatmul.mubr.bf16.gmra.mrb[0].mxu0 %v396
      %v482 = vpop.f32.mrb[0].mxu0
      %v483 = vadd.f32 %v390, %v482
      %v484 = vpop.f32.mrb[0].mxu0
      %v485 = vpop.f32.mrb[0].mxu0
      %v486 = vpop.f32.mrb[0].mxu0
      %487 = vdwg.mxu0
      %s488 = scalar_lea.vmem %s1, 8
      %v489 = vld [vmem:[%s488] sm:$0xf]
      %490 = vrot.lane.b32.xlu0 %v288, 126
      %v491 = vpop.permute.xlu0 %490
      %492 = vrot.lane.b32.xlu0 %v289, 126
      %v493 = vpop.permute.xlu0 %492
      %494 = vrot.lane.b32.xlu0 %v290, 126
      %v495 = vpop.permute.xlu0 %494
      %vm496 = vcmask 1031168
      %v497 = vsel %vm496, %v491, %v493
      %v498 = vsel %vm496, %v493, %v495
      %v500 = vsel %vm300, %v489, 0
      %v503 = vsel %vm304, %v497, 0
      %v506 = vsel %vm304, %v498, 0
      %v509 = vsel %vm304, %v495, 0
      %511 = vmatprep.subr.bf16.mxu0 %v506
      %512 = vmatpush1.bf16.msra.mxu0 %v503
      %513 = vmatprep.subr.bf16.mxu0 0
      %514 = vmatpush1.bf16.msra.mxu0 0
      %515 = vmatprep.subr.bf16.mxu0 0
      %516 = vmatpush1.bf16.msra.mxu0 0
      %517 = vmatprep.subr.bf16.mxu0 0
      %518 = vmatpush1.bf16.msra.mxu0 0
      %519 = vmatprep.subr.bf16.mxu0 0
      %520 = vmatpush1.bf16.msra.mxu0 0
      %521 = vmatprep.subr.bf16.mxu0 0
      %522 = vmatpush1.bf16.msra.mxu0 0
      %523 = vmatprep.subr.bf16.mxu0 0
      %524 = vmatpush1.bf16.msra.mxu0 0
      %525 = vmatprep.subr.bf16.mxu0 0
      %526 = vmatpush1.bf16.msra.mxu0 0
      %527 = vmatprep.subr.bf16.mxu0 0
      %528 = vmatpush1.bf16.msra.mxu0 0
      %529 = vmatprep.subr.bf16.mxu0 0
      %530 = vmatpush1.bf16.msra.mxu0 0
      %531 = vmatprep.subr.bf16.mxu0 0
      %532 = vmatpush1.bf16.msra.mxu0 0
      %533 = vmatprep.subr.bf16.mxu0 0
      %534 = vmatpush1.bf16.msra.mxu0 0
      %535 = vmatprep.subr.bf16.mxu0 0
      %536 = vmatpush1.bf16.msra.mxu0 0
      %537 = vmatprep.subr.bf16.mxu0 0
      %538 = vmatpush1.bf16.msra.mxu0 0
      %539 = vmatprep.subr.bf16.mxu0 0
      %540 = vmatpush1.bf16.msra.mxu0 0
      %541 = vmatprep.subr.bf16.mxu0 0
      %542 = vmatpush1.bf16.msra.mxu0 0
      %543 = vmatprep.mubr.bf16.mxu0 0
      %544 = vmatmul.mubr.bf16.gmra.mrb[0].mxu0 %v500
      %v545 = vpop.f32.mrb[0].mxu0
      %v546 = vadd.f32 0.0, %v545
      %v547 = vpop.f32.mrb[0].mxu0
      %v548 = vadd.f32 0.0, %v547
      %v549 = vpop.f32.mrb[0].mxu0
      %v550 = vpop.f32.mrb[0].mxu0
      %551 = vdwg.mxu0
      %552 = vmatprep.subr.bf16.mxu0 0
      %553 = vmatpush1.bf16.msra.mxu0 %v509
      %554 = vmatprep.subr.bf16.mxu0 0
      %555 = vmatpush1.bf16.msra.mxu0 0
      %556 = vmatprep.subr.bf16.mxu0 0
      %557 = vmatpush1.bf16.msra.mxu0 0
      %558 = vmatprep.subr.bf16.mxu0 0
      %559 = vmatpush1.bf16.msra.mxu0 0
      %560 = vmatprep.subr.bf16.mxu0 0
      %561 = vmatpush1.bf16.msra.mxu0 0
      %562 = vmatprep.subr.bf16.mxu0 0
      %563 = vmatpush1.bf16.msra.mxu0 0
      %564 = vmatprep.subr.bf16.mxu0 0
      %565 = vmatpush1.bf16.msra.mxu0 0
      %566 = vmatprep.subr.bf16.mxu0 0
      %567 = vmatpush1.bf16.msra.mxu0 0
      %568 = vmatprep.subr.bf16.mxu0 0
      %569 = vmatpush1.bf16.msra.mxu0 0
      %570 = vmatprep.subr.bf16.mxu0 0
      %571 = vmatpush1.bf16.msra.mxu0 0
      %572 = vmatprep.subr.bf16.mxu0 0
      %573 = vmatpush1.bf16.msra.mxu0 0
      %574 = vmatprep.subr.bf16.mxu0 0
      %575 = vmatpush1.bf16.msra.mxu0 0
      %576 = vmatprep.subr.bf16.mxu0 0
      %577 = vmatpush1.bf16.msra.mxu0 0
      %578 = vmatprep.subr.bf16.mxu0 0
      %579 = vmatpush1.bf16.msra.mxu0 0
      %580 = vmatprep.subr.bf16.mxu0 0
      %581 = vmatpush1.bf16.msra.mxu0 0
      %582 = vmatprep.subr.bf16.mxu0 0
      %583 = vmatpush1.bf16.msra.mxu0 0
      %584 = vmatprep.mubr.bf16.mxu0 0
      %585 = vmatmul.mubr.bf16.gmra.mrb[0].mxu0 %v500
      %v586 = vpop.f32.mrb[0].mxu0
      %v587 = vadd.f32 0.0, %v586
      %v588 = vpop.f32.mrb[0].mxu0
      %v589 = vpop.f32.mrb[0].mxu0
      %v590 = vpop.f32.mrb[0].mxu0
      %591 = vdwg.mxu0
      %v592 = vadd.f32 %v442, %v546
      %v593 = vadd.f32 %v444, %v548
      %v594 = vadd.f32 %v483, %v587
      %s595 = scalar_lea.vmem %s1, 12
      %v596 = vld [vmem:[%s595] sm:$0xf]
      %597 = vrot.lane.b32.xlu0 %v288, 110
      %v598 = vpop.permute.xlu0 %597
      %599 = vrot.lane.b32.xlu0 %v289, 110
      %v600 = vpop.permute.xlu0 %599
      %601 = vrot.lane.b32.xlu0 %v290, 110
      %v602 = vpop.permute.xlu0 %601
      %vm603 = vcmask 900096
      %v604 = vsel %vm603, %v598, %v600
      %v605 = vsel %vm603, %v600, %v602
      %v607 = vsel %vm300, %v596, 0
      %v610 = vsel %vm304, %v604, 0
      %v613 = vsel %vm304, %v605, 0
      %v616 = vsel %vm304, %v602, 0
      %618 = vmatprep.subr.bf16.mxu0 %v613
      %619 = vmatpush1.bf16.msra.mxu0 %v610
      %620 = vmatprep.subr.bf16.mxu0 0
      %621 = vmatpush1.bf16.msra.mxu0 0
      %622 = vmatprep.subr.bf16.mxu0 0
      %623 = vmatpush1.bf16.msra.mxu0 0
      %624 = vmatprep.subr.bf16.mxu0 0
      %625 = vmatpush1.bf16.msra.mxu0 0
      %626 = vmatprep.subr.bf16.mxu0 0
      %627 = vmatpush1.bf16.msra.mxu0 0
      %628 = vmatprep.subr.bf16.mxu0 0
      %629 = vmatpush1.bf16.msra.mxu0 0
      %630 = vmatprep.subr.bf16.mxu0 0
      %631 = vmatpush1.bf16.msra.mxu0 0
      %632 = vmatprep.subr.bf16.mxu0 0
      %633 = vmatpush1.bf16.msra.mxu0 0
      %634 = vmatprep.subr.bf16.mxu0 0
      %635 = vmatpush1.bf16.msra.mxu0 0
      %636 = vmatprep.subr.bf16.mxu0 0
      %637 = vmatpush1.bf16.msra.mxu0 0
      %638 = vmatprep.subr.bf16.mxu0 0
      %639 = vmatpush1.bf16.msra.mxu0 0
      %640 = vmatprep.subr.bf16.mxu0 0
      %641 = vmatpush1.bf16.msra.mxu0 0
      %642 = vmatprep.subr.bf16.mxu0 0
      %643 = vmatpush1.bf16.msra.mxu0 0
      %644 = vmatprep.subr.bf16.mxu0 0
      %645 = vmatpush1.bf16.msra.mxu0 0
      %646 = vmatprep.subr.bf16.mxu0 0
      %647 = vmatpush1.bf16.msra.mxu0 0
      %648 = vmatprep.subr.bf16.mxu0 0
      %649 = vmatpush1.bf16.msra.mxu0 0
      %650 = vmatprep.mubr.bf16.mxu0 0
      %651 = vmatmul.mubr.bf16.gmra.mrb[0].mxu0 %v607
      %v652 = vpop.f32.mrb[0].mxu0
      %v653 = vadd.f32 0.0, %v652
      %v654 = vpop.f32.mrb[0].mxu0
      %v655 = vadd.f32 0.0, %v654
      %v656 = vpop.f32.mrb[0].mxu0
      %v657 = vpop.f32.mrb[0].mxu0
      %658 = vdwg.mxu0
      %659 = vmatprep.subr.bf16.mxu0 0
      %660 = vmatpush1.bf16.msra.mxu0 %v616
      %661 = vmatprep.subr.bf16.mxu0 0
      %662 = vmatpush1.bf16.msra.mxu0 0
      %663 = vmatprep.subr.bf16.mxu0 0
      %664 = vmatpush1.bf16.msra.mxu0 0
      %665 = vmatprep.subr.bf16.mxu0 0
      %666 = vmatpush1.bf16.msra.mxu0 0
      %667 = vmatprep.subr.bf16.mxu0 0
      %668 = vmatpush1.bf16.msra.mxu0 0
      %669 = vmatprep.subr.bf16.mxu0 0
      %670 = vmatpush1.bf16.msra.mxu0 0
      %671 = vmatprep.subr.bf16.mxu0 0
      %672 = vmatpush1.bf16.msra.mxu0 0
      %673 = vmatprep.subr.bf16.mxu0 0
      %674 = vmatpush1.bf16.msra.mxu0 0
      %675 = vmatprep.subr.bf16.mxu0 0
      %676 = vmatpush1.bf16.msra.mxu0 0
      %677 = vmatprep.subr.bf16.mxu0 0
      %678 = vmatpush1.bf16.msra.mxu0 0
      %679 = vmatprep.subr.bf16.mxu0 0
      %680 = vmatpush1.bf16.msra.mxu0 0
      %681 = vmatprep.subr.bf16.mxu0 0
      %682 = vmatpush1.bf16.msra.mxu0 0
      %683 = vmatprep.subr.bf16.mxu0 0
      %684 = vmatpush1.bf16.msra.mxu0 0
      %685 = vmatprep.subr.bf16.mxu0 0
      %686 = vmatpush1.bf16.msra.mxu0 0
      %687 = vmatprep.subr.bf16.mxu0 0
      %688 = vmatpush1.bf16.msra.mxu0 0
      %689 = vmatprep.subr.bf16.mxu0 0
      %690 = vmatpush1.bf16.msra.mxu0 0
      %691 = vmatprep.mubr.bf16.mxu0 0
      %692 = vmatmul.mubr.bf16.gmra.mrb[0].mxu0 %v607
      %v693 = vpop.f32.mrb[0].mxu0
      %v694 = vadd.f32 0.0, %v693
      %v695 = vpop.f32.mrb[0].mxu0
      %v696 = vpop.f32.mrb[0].mxu0
      %v697 = vpop.f32.mrb[0].mxu0
      %698 = vdwg.mxu0
      %v699 = vadd.f32 %v592, %v653
      %v700 = vadd.f32 %v593, %v655
      %v701 = vadd.f32 %v594, %v694
      %s702 = scalar_lea.vmem %s1, 16
      %v703 = vld [vmem:[%s702] sm:$0xf]
      %704 = vrot.lane.b32.xlu0 %v288, 109
      %v705 = vpop.permute.xlu0 %704
      %706 = vrot.lane.b32.xlu0 %v289, 109
      %v707 = vpop.permute.xlu0 %706
      %708 = vrot.lane.b32.xlu0 %v290, 109
      %v709 = vpop.permute.xlu0 %708
      %vm710 = vcmask 891904
      %v711 = vsel %vm710, %v705, %v707
      %v712 = vsel %vm710, %v707, %v709
      %v714 = vsel %vm300, %v703, 0
      %v717 = vsel %vm304, %v711, 0
      %v720 = vsel %vm304, %v712, 0
      %v723 = vsel %vm304, %v709, 0
      %725 = vmatprep.subr.bf16.mxu0 %v720
      %726 = vmatpush1.bf16.msra.mxu0 %v717
      %727 = vmatprep.subr.bf16.mxu0 0
      %728 = vmatpush1.bf16.msra.mxu0 0
      %729 = vmatprep.subr.bf16.mxu0 0
      %730 = vmatpush1.bf16.msra.mxu0 0
      %731 = vmatprep.subr.bf16.mxu0 0
      %732 = vmatpush1.bf16.msra.mxu0 0
      %733 = vmatprep.subr.bf16.mxu0 0
      %734 = vmatpush1.bf16.msra.mxu0 0
      %735 = vmatprep.subr.bf16.mxu0 0
      %736 = vmatpush1.bf16.msra.mxu0 0
      %737 = vmatprep.subr.bf16.mxu0 0
      %738 = vmatpush1.bf16.msra.mxu0 0
      %739 = vmatprep.subr.bf16.mxu0 0
      %740 = vmatpush1.bf16.msra.mxu0 0
      %741 = vmatprep.subr.bf16.mxu0 0
      %742 = vmatpush1.bf16.msra.mxu0 0
      %743 = vmatprep.subr.bf16.mxu0 0
      %744 = vmatpush1.bf16.msra.mxu0 0
      %745 = vmatprep.subr.bf16.mxu0 0
      %746 = vmatpush1.bf16.msra.mxu0 0
      %747 = vmatprep.subr.bf16.mxu0 0
      %748 = vmatpush1.bf16.msra.mxu0 0
      %749 = vmatprep.subr.bf16.mxu0 0
      %750 = vmatpush1.bf16.msra.mxu0 0
      %751 = vmatprep.subr.bf16.mxu0 0
      %752 = vmatpush1.bf16.msra.mxu0 0
      %753 = vmatprep.subr.bf16.mxu0 0
      %754 = vmatpush1.bf16.msra.mxu0 0
      %755 = vmatprep.subr.bf16.mxu0 0
      %756 = vmatpush1.bf16.msra.mxu0 0
      %757 = vmatprep.mubr.bf16.mxu0 0
      %758 = vmatmul.mubr.bf16.gmra.mrb[0].mxu0 %v714
      %v759 = vpop.f32.mrb[0].mxu0
      %v760 = vadd.f32 0.0, %v759
      %v761 = vpop.f32.mrb[0].mxu0
      %v762 = vadd.f32 0.0, %v761
      %v763 = vpop.f32.mrb[0].mxu0
      %v764 = vpop.f32.mrb[0].mxu0
      %765 = vdwg.mxu0
      %766 = vmatprep.subr.bf16.mxu0 0
      %767 = vmatpush1.bf16.msra.mxu0 %v723
      %768 = vmatprep.subr.bf16.mxu0 0
      %769 = vmatpush1.bf16.msra.mxu0 0
      %770 = vmatprep.subr.bf16.mxu0 0
      %771 = vmatpush1.bf16.msra.mxu0 0
      %772 = vmatprep.subr.bf16.mxu0 0
      %773 = vmatpush1.bf16.msra.mxu0 0
      %774 = vmatprep.subr.bf16.mxu0 0
      %775 = vmatpush1.bf16.msra.mxu0 0
      %776 = vmatprep.subr.bf16.mxu0 0
      %777 = vmatpush1.bf16.msra.mxu0 0
      %778 = vmatprep.subr.bf16.mxu0 0
      %779 = vmatpush1.bf16.msra.mxu0 0
      %780 = vmatprep.subr.bf16.mxu0 0
      %781 = vmatpush1.bf16.msra.mxu0 0
      %782 = vmatprep.subr.bf16.mxu0 0
      %783 = vmatpush1.bf16.msra.mxu0 0
      %784 = vmatprep.subr.bf16.mxu0 0
      %785 = vmatpush1.bf16.msra.mxu0 0
      %786 = vmatprep.subr.bf16.mxu0 0
      %787 = vmatpush1.bf16.msra.mxu0 0
      %788 = vmatprep.subr.bf16.mxu0 0
      %789 = vmatpush1.bf16.msra.mxu0 0
      %790 = vmatprep.subr.bf16.mxu0 0
      %791 = vmatpush1.bf16.msra.mxu0 0
      %792 = vmatprep.subr.bf16.mxu0 0
      %793 = vmatpush1.bf16.msra.mxu0 0
      %794 = vmatprep.subr.bf16.mxu0 0
      %795 = vmatpush1.bf16.msra.mxu0 0
      %796 = vmatprep.subr.bf16.mxu0 0
      %797 = vmatpush1.bf16.msra.mxu0 0
      %798 = vmatprep.mubr.bf16.mxu0 0
      %799 = vmatmul.mubr.bf16.gmra.mrb[0].mxu0 %v714
      %v800 = vpop.f32.mrb[0].mxu0
      %v801 = vadd.f32 0.0, %v800
      %v802 = vpop.f32.mrb[0].mxu0
      %v803 = vpop.f32.mrb[0].mxu0
      %v804 = vpop.f32.mrb[0].mxu0
      %805 = vdwg.mxu0
      %v806 = vadd.f32 %v699, %v760
      %v807 = vadd.f32 %v700, %v762
      %v808 = vadd.f32 %v701, %v801
      %s809 = scalar_lea.vmem %s1, 20
      %v810 = vld [vmem:[%s809] sm:$0xf]
      %811 = vrot.lane.b32.xlu0 %v288, 108
      %v812 = vpop.permute.xlu0 %811
      %813 = vrot.lane.b32.xlu0 %v289, 108
      %v814 = vpop.permute.xlu0 %813
      %815 = vrot.lane.b32.xlu0 %v290, 108
      %v816 = vpop.permute.xlu0 %815
      %vm817 = vcmask 883712
      %v818 = vsel %vm817, %v812, %v814
      %v819 = vsel %vm817, %v814, %v816
      %v821 = vsel %vm300, %v810, 0
      %v824 = vsel %vm304, %v818, 0
      %v827 = vsel %vm304, %v819, 0
      %v830 = vsel %vm304, %v816, 0
      %832 = vmatprep.subr.bf16.mxu0 %v827
      %833 = vmatpush1.bf16.msra.mxu0 %v824
      %834 = vmatprep.subr.bf16.mxu0 0
      %835 = vmatpush1.bf16.msra.mxu0 0
      %836 = vmatprep.subr.bf16.mxu0 0
      %837 = vmatpush1.bf16.msra.mxu0 0
      %838 = vmatprep.subr.bf16.mxu0 0
      %839 = vmatpush1.bf16.msra.mxu0 0
      %840 = vmatprep.subr.bf16.mxu0 0
      %841 = vmatpush1.bf16.msra.mxu0 0
      %842 = vmatprep.subr.bf16.mxu0 0
      %843 = vmatpush1.bf16.msra.mxu0 0
      %844 = vmatprep.subr.bf16.mxu0 0
      %845 = vmatpush1.bf16.msra.mxu0 0
      %846 = vmatprep.subr.bf16.mxu0 0
      %847 = vmatpush1.bf16.msra.mxu0 0
      %848 = vmatprep.subr.bf16.mxu0 0
      %849 = vmatpush1.bf16.msra.mxu0 0
      %850 = vmatprep.subr.bf16.mxu0 0
      %851 = vmatpush1.bf16.msra.mxu0 0
      %852 = vmatprep.subr.bf16.mxu0 0
      %853 = vmatpush1.bf16.msra.mxu0 0
      %854 = vmatprep.subr.bf16.mxu0 0
      %855 = vmatpush1.bf16.msra.mxu0 0
      %856 = vmatprep.subr.bf16.mxu0 0
      %857 = vmatpush1.bf16.msra.mxu0 0
      %858 = vmatprep.subr.bf16.mxu0 0
      %859 = vmatpush1.bf16.msra.mxu0 0
      %860 = vmatprep.subr.bf16.mxu0 0
      %861 = vmatpush1.bf16.msra.mxu0 0
      %862 = vmatprep.subr.bf16.mxu0 0
      %863 = vmatpush1.bf16.msra.mxu0 0
      %864 = vmatprep.mubr.bf16.mxu0 0
      %865 = vmatmul.mubr.bf16.gmra.mrb[0].mxu0 %v821
      %v866 = vpop.f32.mrb[0].mxu0
      %v867 = vadd.f32 0.0, %v866
      %v868 = vpop.f32.mrb[0].mxu0
      %v869 = vadd.f32 0.0, %v868
      %v870 = vpop.f32.mrb[0].mxu0
      %v871 = vpop.f32.mrb[0].mxu0
      %872 = vdwg.mxu0
      %873 = vmatprep.subr.bf16.mxu0 0
      %874 = vmatpush1.bf16.msra.mxu0 %v830
      %875 = vmatprep.subr.bf16.mxu0 0
      %876 = vmatpush1.bf16.msra.mxu0 0
      %877 = vmatprep.subr.bf16.mxu0 0
      %878 = vmatpush1.bf16.msra.mxu0 0
      %879 = vmatprep.subr.bf16.mxu0 0
      %880 = vmatpush1.bf16.msra.mxu0 0
      %881 = vmatprep.subr.bf16.mxu0 0
      %882 = vmatpush1.bf16.msra.mxu0 0
      %883 = vmatprep.subr.bf16.mxu0 0
      %884 = vmatpush1.bf16.msra.mxu0 0
      %885 = vmatprep.subr.bf16.mxu0 0
      %886 = vmatpush1.bf16.msra.mxu0 0
      %887 = vmatprep.subr.bf16.mxu0 0
      %888 = vmatpush1.bf16.msra.mxu0 0
      %889 = vmatprep.subr.bf16.mxu0 0
      %890 = vmatpush1.bf16.msra.mxu0 0
      %891 = vmatprep.subr.bf16.mxu0 0
      %892 = vmatpush1.bf16.msra.mxu0 0
      %893 = vmatprep.subr.bf16.mxu0 0
      %894 = vmatpush1.bf16.msra.mxu0 0
      %895 = vmatprep.subr.bf16.mxu0 0
      %896 = vmatpush1.bf16.msra.mxu0 0
      %897 = vmatprep.subr.bf16.mxu0 0
      %898 = vmatpush1.bf16.msra.mxu0 0
      %899 = vmatprep.subr.bf16.mxu0 0
      %900 = vmatpush1.bf16.msra.mxu0 0
      %901 = vmatprep.subr.bf16.mxu0 0
      %902 = vmatpush1.bf16.msra.mxu0 0
      %903 = vmatprep.subr.bf16.mxu0 0
      %904 = vmatpush1.bf16.msra.mxu0 0
      %905 = vmatprep.mubr.bf16.mxu0 0
      %906 = vmatmul.mubr.bf16.gmra.mrb[0].mxu0 %v821
      %v907 = vpop.f32.mrb[0].mxu0
      %v908 = vadd.f32 0.0, %v907
      %v909 = vpop.f32.mrb[0].mxu0
      %v910 = vpop.f32.mrb[0].mxu0
      %v911 = vpop.f32.mrb[0].mxu0
      %912 = vdwg.mxu0
      %v913 = vadd.f32 %v806, %v867
      %v914 = vadd.f32 %v807, %v869
      %v915 = vadd.f32 %v808, %v908
      %s916 = scalar_lea.vmem %s1, 24
      %v917 = vld [vmem:[%s916] sm:$0xf]
      %918 = vrot.lane.b32.xlu0 %v288, 92
      %v919 = vpop.permute.xlu0 %918
      %920 = vrot.lane.b32.xlu0 %v289, 92
      %v921 = vpop.permute.xlu0 %920
      %922 = vrot.lane.b32.xlu0 %v290, 92
      %v923 = vpop.permute.xlu0 %922
      %vm924 = vcmask 752640
      %v925 = vsel %vm924, %v919, %v921
      %v926 = vsel %vm924, %v921, %v923
      %v928 = vsel %vm300, %v917, 0
      %v931 = vsel %vm304, %v925, 0
      %v934 = vsel %vm304, %v926, 0
      %v937 = vsel %vm304, %v923, 0
      %939 = vmatprep.subr.bf16.mxu0 %v934
      %940 = vmatpush1.bf16.msra.mxu0 %v931
      %941 = vmatprep.subr.bf16.mxu0 0
      %942 = vmatpush1.bf16.msra.mxu0 0
      %943 = vmatprep.subr.bf16.mxu0 0
      %944 = vmatpush1.bf16.msra.mxu0 0
      %945 = vmatprep.subr.bf16.mxu0 0
      %946 = vmatpush1.bf16.msra.mxu0 0
      %947 = vmatprep.subr.bf16.mxu0 0
      %948 = vmatpush1.bf16.msra.mxu0 0
      %949 = vmatprep.subr.bf16.mxu0 0
      %950 = vmatpush1.bf16.msra.mxu0 0
      %951 = vmatprep.subr.bf16.mxu0 0
      %952 = vmatpush1.bf16.msra.mxu0 0
      %953 = vmatprep.subr.bf16.mxu0 0
      %954 = vmatpush1.bf16.msra.mxu0 0
      %955 = vmatprep.subr.bf16.mxu0 0
      %956 = vmatpush1.bf16.msra.mxu0 0
      %957 = vmatprep.subr.bf16.mxu0 0
      %958 = vmatpush1.bf16.msra.mxu0 0
      %959 = vmatprep.subr.bf16.mxu0 0
      %960 = vmatpush1.bf16.msra.mxu0 0
      %961 = vmatprep.subr.bf16.mxu0 0
      %962 = vmatpush1.bf16.msra.mxu0 0
      %963 = vmatprep.subr.bf16.mxu0 0
      %964 = vmatpush1.bf16.msra.mxu0 0
      %965 = vmatprep.subr.bf16.mxu0 0
      %966 = vmatpush1.bf16.msra.mxu0 0
      %967 = vmatprep.subr.bf16.mxu0 0
      %968 = vmatpush1.bf16.msra.mxu0 0
      %969 = vmatprep.subr.bf16.mxu0 0
      %970 = vmatpush1.bf16.msra.mxu0 0
      %971 = vmatprep.mubr.bf16.mxu0 0
      %972 = vmatmul.mubr.bf16.gmra.mrb[0].mxu0 %v928
      %v973 = vpop.f32.mrb[0].mxu0
      %v974 = vadd.f32 0.0, %v973
      %v975 = vpop.f32.mrb[0].mxu0
      %v976 = vadd.f32 0.0, %v975
      %v977 = vpop.f32.mrb[0].mxu0
      %v978 = vpop.f32.mrb[0].mxu0
      %979 = vdwg.mxu0
      %980 = vmatprep.subr.bf16.mxu0 0
      %981 = vmatpush1.bf16.msra.mxu0 %v937
      %982 = vmatprep.subr.bf16.mxu0 0
      %983 = vmatpush1.bf16.msra.mxu0 0
      %984 = vmatprep.subr.bf16.mxu0 0
      %985 = vmatpush1.bf16.msra.mxu0 0
      %986 = vmatprep.subr.bf16.mxu0 0
      %987 = vmatpush1.bf16.msra.mxu0 0
      %988 = vmatprep.subr.bf16.mxu0 0
      %989 = vmatpush1.bf16.msra.mxu0 0
      %990 = vmatprep.subr.bf16.mxu0 0
      %991 = vmatpush1.bf16.msra.mxu0 0
      %992 = vmatprep.subr.bf16.mxu0 0
      %993 = vmatpush1.bf16.msra.mxu0 0
      %994 = vmatprep.subr.bf16.mxu0 0
      %995 = vmatpush1.bf16.msra.mxu0 0
      %996 = vmatprep.subr.bf16.mxu0 0
      %997 = vmatpush1.bf16.msra.mxu0 0
      %998 = vmatprep.subr.bf16.mxu0 0
      %999 = vmatpush1.bf16.msra.mxu0 0
      %1000 = vmatprep.subr.bf16.mxu0 0
      %1001 = vmatpush1.bf16.msra.mxu0 0
      %1002 = vmatprep.subr.bf16.mxu0 0
      %1003 = vmatpush1.bf16.msra.mxu0 0
      %1004 = vmatprep.subr.bf16.mxu0 0
      %1005 = vmatpush1.bf16.msra.mxu0 0
      %1006 = vmatprep.subr.bf16.mxu0 0
      %1007 = vmatpush1.bf16.msra.mxu0 0
      %1008 = vmatprep.subr.bf16.mxu0 0
      %1009 = vmatpush1.bf16.msra.mxu0 0
      %1010 = vmatprep.subr.bf16.mxu0 0
      %1011 = vmatpush1.bf16.msra.mxu0 0
      %1012 = vmatprep.mubr.bf16.mxu0 0
      %1013 = vmatmul.mubr.bf16.gmra.mrb[0].mxu0 %v928
      %v1014 = vpop.f32.mrb[0].mxu0
      %v1015 = vadd.f32 0.0, %v1014
      %v1016 = vpop.f32.mrb[0].mxu0
      %v1017 = vpop.f32.mrb[0].mxu0
      %v1018 = vpop.f32.mrb[0].mxu0
      %1019 = vdwg.mxu0
      %v1020 = vadd.f32 %v913, %v974
      %v1021 = vadd.f32 %v914, %v976
      %v1022 = vadd.f32 %v915, %v1015
      %s1023 = scalar_lea.vmem %s1, 28
      %v1024 = vld [vmem:[%s1023] sm:$0xf]
      %1025 = vrot.lane.b32.xlu0 %v288, 91
      %v1026 = vpop.permute.xlu0 %1025
      %1027 = vrot.lane.b32.xlu0 %v289, 91
      %v1028 = vpop.permute.xlu0 %1027
      %1029 = vrot.lane.b32.xlu0 %v290, 91
      %v1030 = vpop.permute.xlu0 %1029
      %vm1031 = vcmask 744448
      %v1032 = vsel %vm1031, %v1026, %v1028
      %v1033 = vsel %vm1031, %v1028, %v1030
      %v1035 = vsel %vm300, %v1024, 0
      %v1038 = vsel %vm304, %v1032, 0
      %v1041 = vsel %vm304, %v1033, 0
      %v1044 = vsel %vm304, %v1030, 0
      %1046 = vmatprep.subr.bf16.mxu0 %v1041
      %1047 = vmatpush1.bf16.msra.mxu0 %v1038
      %1048 = vmatprep.subr.bf16.mxu0 0
      %1049 = vmatpush1.bf16.msra.mxu0 0
      %1050 = vmatprep.subr.bf16.mxu0 0
      %1051 = vmatpush1.bf16.msra.mxu0 0
      %1052 = vmatprep.subr.bf16.mxu0 0
      %1053 = vmatpush1.bf16.msra.mxu0 0
      %1054 = vmatprep.subr.bf16.mxu0 0
      %1055 = vmatpush1.bf16.msra.mxu0 0
      %1056 = vmatprep.subr.bf16.mxu0 0
      %1057 = vmatpush1.bf16.msra.mxu0 0
      %1058 = vmatprep.subr.bf16.mxu0 0
      %1059 = vmatpush1.bf16.msra.mxu0 0
      %1060 = vmatprep.subr.bf16.mxu0 0
      %1061 = vmatpush1.bf16.msra.mxu0 0
      %1062 = vmatprep.subr.bf16.mxu0 0
      %1063 = vmatpush1.bf16.msra.mxu0 0
      %1064 = vmatprep.subr.bf16.mxu0 0
      %1065 = vmatpush1.bf16.msra.mxu0 0
      %1066 = vmatprep.subr.bf16.mxu0 0
      %1067 = vmatpush1.bf16.msra.mxu0 0
      %1068 = vmatprep.subr.bf16.mxu0 0
      %1069 = vmatpush1.bf16.msra.mxu0 0
      %1070 = vmatprep.subr.bf16.mxu0 0
      %1071 = vmatpush1.bf16.msra.mxu0 0
      %1072 = vmatprep.subr.bf16.mxu0 0
      %1073 = vmatpush1.bf16.msra.mxu0 0
      %1074 = vmatprep.subr.bf16.mxu0 0
      %1075 = vmatpush1.bf16.msra.mxu0 0
      %1076 = vmatprep.subr.bf16.mxu0 0
      %1077 = vmatpush1.bf16.msra.mxu0 0
      %1078 = vmatprep.mubr.bf16.mxu0 0
      %1079 = vmatmul.mubr.bf16.gmra.mrb[0].mxu0 %v1035
      %v1080 = vpop.f32.mrb[0].mxu0
      %v1081 = vadd.f32 0.0, %v1080
      %v1082 = vpop.f32.mrb[0].mxu0
      %v1083 = vadd.f32 0.0, %v1082
      %v1084 = vpop.f32.mrb[0].mxu0
      %v1085 = vpop.f32.mrb[0].mxu0
      %1086 = vdwg.mxu0
      %1087 = vmatprep.subr.bf16.mxu0 0
      %1088 = vmatpush1.bf16.msra.mxu0 %v1044
      %1089 = vmatprep.subr.bf16.mxu0 0
      %1090 = vmatpush1.bf16.msra.mxu0 0
      %1091 = vmatprep.subr.bf16.mxu0 0
      %1092 = vmatpush1.bf16.msra.mxu0 0
      %1093 = vmatprep.subr.bf16.mxu0 0
      %1094 = vmatpush1.bf16.msra.mxu0 0
      %1095 = vmatprep.subr.bf16.mxu0 0
      %1096 = vmatpush1.bf16.msra.mxu0 0
      %1097 = vmatprep.subr.bf16.mxu0 0
      %1098 = vmatpush1.bf16.msra.mxu0 0
      %1099 = vmatprep.subr.bf16.mxu0 0
      %1100 = vmatpush1.bf16.msra.mxu0 0
      %1101 = vmatprep.subr.bf16.mxu0 0
      %1102 = vmatpush1.bf16.msra.mxu0 0
      %1103 = vmatprep.subr.bf16.mxu0 0
      %1104 = vmatpush1.bf16.msra.mxu0 0
      %1105 = vmatprep.subr.bf16.mxu0 0
      %1106 = vmatpush1.bf16.msra.mxu0 0
      %1107 = vmatprep.subr.bf16.mxu0 0
      %1108 = vmatpush1.bf16.msra.mxu0 0
      %1109 = vmatprep.subr.bf16.mxu0 0
      %1110 = vmatpush1.bf16.msra.mxu0 0
      %1111 = vmatprep.subr.bf16.mxu0 0
      %1112 = vmatpush1.bf16.msra.mxu0 0
      %1113 = vmatprep.subr.bf16.mxu0 0
      %1114 = vmatpush1.bf16.msra.mxu0 0
      %1115 = vmatprep.subr.bf16.mxu0 0
      %1116 = vmatpush1.bf16.msra.mxu0 0
      %1117 = vmatprep.subr.bf16.mxu0 0
      %1118 = vmatpush1.bf16.msra.mxu0 0
      %1119 = vmatprep.mubr.bf16.mxu0 0
      %1120 = vmatmul.mubr.bf16.gmra.mrb[0].mxu0 %v1035
      %v1121 = vpop.f32.mrb[0].mxu0
      %v1122 = vadd.f32 0.0, %v1121
      %v1123 = vpop.f32.mrb[0].mxu0
      %v1124 = vpop.f32.mrb[0].mxu0
      %v1125 = vpop.f32.mrb[0].mxu0
      %1126 = vdwg.mxu0
      %v1127 = vadd.f32 %v1020, %v1081
      %v1128 = vadd.f32 %v1021, %v1083
      %v1129 = vadd.f32 %v1022, %v1122
      %s1130 = scalar_lea.vmem %s1, 32
      %v1131 = vld [vmem:[%s1130] sm:$0xf]
      %1132 = vrot.lane.b32.xlu0 %v288, 90
      %v1133 = vpop.permute.xlu0 %1132
      %1134 = vrot.lane.b32.xlu0 %v289, 90
      %v1135 = vpop.permute.xlu0 %1134
      %1136 = vrot.lane.b32.xlu0 %v290, 90
      %v1137 = vpop.permute.xlu0 %1136
      %vm1138 = vcmask 736256
      %v1139 = vsel %vm1138, %v1133, %v1135
      %v1140 = vsel %vm1138, %v1135, %v1137
      %v1142 = vsel %vm300, %v1131, 0
      %v1145 = vsel %vm304, %v1139, 0
      %v1148 = vsel %vm304, %v1140, 0
      %v1151 = vsel %vm304, %v1137, 0
      %1153 = vmatprep.subr.bf16.mxu0 %v1148
      %1154 = vmatpush1.bf16.msra.mxu0 %v1145
      %1155 = vmatprep.subr.bf16.mxu0 0
      %1156 = vmatpush1.bf16.msra.mxu0 0
      %1157 = vmatprep.subr.bf16.mxu0 0
      %1158 = vmatpush1.bf16.msra.mxu0 0
      %1159 = vmatprep.subr.bf16.mxu0 0
      %1160 = vmatpush1.bf16.msra.mxu0 0
      %1161 = vmatprep.subr.bf16.mxu0 0
      %1162 = vmatpush1.bf16.msra.mxu0 0
      %1163 = vmatprep.subr.bf16.mxu0 0
      %1164 = vmatpush1.bf16.msra.mxu0 0
      %1165 = vmatprep.subr.bf16.mxu0 0
      %1166 = vmatpush1.bf16.msra.mxu0 0
      %1167 = vmatprep.subr.bf16.mxu0 0
      %1168 = vmatpush1.bf16.msra.mxu0 0
      %1169 = vmatprep.subr.bf16.mxu0 0
      %1170 = vmatpush1.bf16.msra.mxu0 0
      %1171 = vmatprep.subr.bf16.mxu0 0
      %1172 = vmatpush1.bf16.msra.mxu0 0
      %1173 = vmatprep.subr.bf16.mxu0 0
      %1174 = vmatpush1.bf16.msra.mxu0 0
      %1175 = vmatprep.subr.bf16.mxu0 0
      %1176 = vmatpush1.bf16.msra.mxu0 0
      %1177 = vmatprep.subr.bf16.mxu0 0
      %1178 = vmatpush1.bf16.msra.mxu0 0
      %1179 = vmatprep.subr.bf16.mxu0 0
      %1180 = vmatpush1.bf16.msra.mxu0 0
      %1181 = vmatprep.subr.bf16.mxu0 0
      %1182 = vmatpush1.bf16.msra.mxu0 0
      %1183 = vmatprep.subr.bf16.mxu0 0
      %1184 = vmatpush1.bf16.msra.mxu0 0
      %1185 = vmatprep.mubr.bf16.mxu0 0
      %1186 = vmatmul.mubr.bf16.gmra.mrb[0].mxu0 %v1142
      %v1187 = vpop.f32.mrb[0].mxu0
      %v1188 = vadd.f32 0.0, %v1187
      %v1189 = vpop.f32.mrb[0].mxu0
      %v1190 = vadd.f32 0.0, %v1189
      %v1191 = vpop.f32.mrb[0].mxu0
      %v1192 = vpop.f32.mrb[0].mxu0
      %1193 = vdwg.mxu0
      %1194 = vmatprep.subr.bf16.mxu0 0
      %1195 = vmatpush1.bf16.msra.mxu0 %v1151
      %1196 = vmatprep.subr.bf16.mxu0 0
      %1197 = vmatpush1.bf16.msra.mxu0 0
      %1198 = vmatprep.subr.bf16.mxu0 0
      %1199 = vmatpush1.bf16.msra.mxu0 0
      %1200 = vmatprep.subr.bf16.mxu0 0
      %1201 = vmatpush1.bf16.msra.mxu0 0
      %1202 = vmatprep.subr.bf16.mxu0 0
      %1203 = vmatpush1.bf16.msra.mxu0 0
      %1204 = vmatprep.subr.bf16.mxu0 0
      %1205 = vmatpush1.bf16.msra.mxu0 0
      %1206 = vmatprep.subr.bf16.mxu0 0
      %1207 = vmatpush1.bf16.msra.mxu0 0
      %1208 = vmatprep.subr.bf16.mxu0 0
      %1209 = vmatpush1.bf16.msra.mxu0 0
      %1210 = vmatprep.subr.bf16.mxu0 0
      %1211 = vmatpush1.bf16.msra.mxu0 0
      %1212 = vmatprep.subr.bf16.mxu0 0
      %1213 = vmatpush1.bf16.msra.mxu0 0
      %1214 = vmatprep.subr.bf16.mxu0 0
      %1215 = vmatpush1.bf16.msra.mxu0 0
      %1216 = vmatprep.subr.bf16.mxu0 0
      %1217 = vmatpush1.bf16.msra.mxu0 0
      %1218 = vmatprep.subr.bf16.mxu0 0
      %1219 = vmatpush1.bf16.msra.mxu0 0
      %1220 = vmatprep.subr.bf16.mxu0 0
      %1221 = vmatpush1.bf16.msra.mxu0 0
      %1222 = vmatprep.subr.bf16.mxu0 0
      %1223 = vmatpush1.bf16.msra.mxu0 0
      %1224 = vmatprep.subr.bf16.mxu0 0
      %1225 = vmatpush1.bf16.msra.mxu0 0
      %1226 = vmatprep.mubr.bf16.mxu0 0
      %1227 = vmatmul.mubr.bf16.gmra.mrb[0].mxu0 %v1142
      %v1228 = vpop.f32.mrb[0].mxu0
      %v1229 = vadd.f32 0.0, %v1228
      %v1230 = vpop.f32.mrb[0].mxu0
      %v1231 = vpop.f32.mrb[0].mxu0
      %v1232 = vpop.f32.mrb[0].mxu0
      %1233 = vdwg.mxu0
      %v1234 = vadd.f32 %v1127, %v1188
      %v1235 = vadd.f32 %v1128, %v1190
      %v1236 = vadd.f32 %v1129, %v1229
      %v1237 = vpack.c.bf16 %v1234, %v1234
      %v1238 = vpack.c.bf16 %v1235, %v1235
      %v1239 = vpack.c.bf16 %v1236, %v1236
      %v1243 = vunpack.c.l.b16 %v1237
      %v1244 = vunpack.c.l.b16 %v1238
      %v1245 = vunpack.c.l.b16 %v1239
      %v1246 = vpack.c.b16 %v1244, %v1243
      %v1247 = vpack.c.b16 %v1245, %v1245
      %1250 = vst [vmem:[%s260] sm:$0xff] %v1246
      %vm1251 = vcmask 551936
      %1252 = vst.msk [vmem:[%s260 + $0x8] sm:$0xf] %vm1251, %v1247
      %v1253 = vld [vmem:[%s2] sm:$0x7]
      %v1255 = vlaneseq
      %v1256 = vshrl.u32 %v1255, 7
      %v1257 = vsub.s32 0, %v1256
      %v1258 = vrot.slane %v1253, %v1257
      %v1259 = vlaneseq
      %v1260 = vshrl.u32 %v1259, 7
      %v1261 = vsub.s32 1, %v1260
      %v1262 = vrot.slane %v1253, %v1261
      %v1263 = vlaneseq
      %v1264 = vshrl.u32 %v1263, 7
      %v1265 = vsub.s32 2, %v1264
      %v1266 = vrot.slane %v1253, %v1265
      %v1270 = vmul.f32 %v1234, %v1258
      %v1271 = vmul.f32 %v1235, %v1262
      %v1272 = vmul.f32 %v1236, %v1266
      %v1273 = vld [vmem:[%s265] sm:$0xff]
      %v1274 = vadd.f32 %v1270, %v1271
      %vm1275 = vcmask 556032
      %v1276 = vsel %vm1275, %v1272, 0.0
      %v1277 = vadd.f32 %v1274, %v1276
      %1278 = vadd.xlane.f32.xlu0 %v1277
      %v1279 = vpop.xlane.xlu0 %1278
      %v1280 = vadd.f32 %v1273, %v1279
      %vm1281 = vcmask 7168
      %1282 = vst.msk [vmem:[%s265] sm:$0xff] %vm1281, %v1280
      %v1283 = vld [vmem:[%s269] sm:$0xff]
      %v1284 = vmul.f32 %v1234, %v1270
      %v1285 = vmul.f32 %v1235, %v1271
      %v1286 = vmul.f32 %v1236, %v1272
      %v1287 = vadd.f32 %v1284, %v1285
      %v1288 = vsel %vm1275, %v1286, 0.0
      %v1289 = vadd.f32 %v1287, %v1288
      %1290 = vadd.xlane.f32.xlu0 %v1289
      %v1291 = vpop.xlane.xlu0 %1290
      %v1292 = vadd.f32 %v1283, %v1291
      %1293 = vst.msk [vmem:[%s269] sm:$0xff] %vm1281, %v1292
      %s1294 = sadd.s32 %s21, %s22
      %p1295 = scmp.lt.s32.totalorder %s1294, 1
      %s1296 = scalar_select %p1295, %s1294, 1
      %s1297 = smul.addr %s1296, 3
      %s1298 = smul.addr %s1297, 4
      %s1299 = scalar_lea.vmem %s3, %s1298
      %p1300 = scmp.lt.s32.totalorder %s21, 1
      %s1301 = scalar_select %p1300, %s21, 1
      %s1302 = smul.addr %s1301, 8
      %s1303 = scalar_lea.vmem %s4, %s1302
      %p1304 = scmp.lt.s32.totalorder %s21, 1
      %s1305 = scalar_select %p1304, %s21, 1
      %s1306 = smul.addr %s1305, 8
      %s1307 = scalar_lea.vmem %s5, %s1306
      // Predicated region
      $region37: #{rblock_pallas.6} parent=31 // pred_check
        %p1308 = pneg %p119
      $region38: #{rblock_pallas.6} parent=31 // pred_check_branch
        %1310 = sbr.rel (%p1308) target = $region40
      $region39: #{rblock_pallas.6} parent=31 // pred_region
        %s1311 = sadd.s32 %s21, %s22
      $region40: #{rblock_pallas.6} parent=31 // pred_fallthru
        _
      // Predicated region
      $region41: #{rblock_pallas.6} parent=31 // pred_check
        %p1312 = pneg %p145
      $region42: #{rblock_pallas.6} parent=31 // pred_check_branch
        %1314 = sbr.rel (%p1312) target = $region44
      $region43: #{rblock_pallas.6} parent=31 // pred_region
        _
      $region44: #{rblock_pallas.6} parent=31 // pred_fallthru
        _
      // Predicated region
      $region45: #{rblock_pallas.6} parent=31 // pred_check
        %p1315 = pneg %p171
      $region46: #{rblock_pallas.6} parent=31 // pred_check_branch
        %1317 = sbr.rel (%p1315) target = $region48
      $region47: #{rblock_pallas.6} parent=31 // pred_region
        _
      $region48: #{rblock_pallas.6} parent=31 // pred_fallthru
        _
    $region32: #{rblock_pallas.6} parent=5 // pred_fallthru
      _
    %p1318 = scmp.le.s32.totalorder 2, %s12
    // Predicated region
    $region49: #{rblock_pallas.6} parent=5 // pred_check
      %p1319 = pneg %p1318
    $region50: #{rblock_pallas.6} parent=5 // pred_check_branch
      %1321 = sbr.rel (%p1319) target = $region52
    $region51: #{rblock_pallas.6} parent=5 // pred_region
      %s1322 = ssub.s32 %s12, 2
      // Predicated region
      $region53: #{rblock_pallas.6} parent=51 // pred_check
        %p1323 = pneg %p125
      $region54: #{rblock_pallas.6} parent=51 // pred_check_branch
        %1325 = sbr.rel (%p1323) target = $region56
      $region55: #{rblock_pallas.6} parent=51 // pred_region
        %s1326 = sadd.s32 %s23, %s24
        %p1327 = scmp.lt.s32.totalorder %s1326, 1
        %s1328 = scalar_select %p1327, %s1326, 1
        %s1329 = smul.addr %s1328, 3
        %s1330 = smul.addr %s1329, 4
        %s1331 = scalar_lea.vmem %s3, %s1330
      $region56: #{rblock_pallas.6} parent=51 // pred_fallthru
        _
      // Predicated region
      $region57: #{rblock_pallas.6} parent=51 // pred_check
        %p1332 = pneg %p151
      $region58: #{rblock_pallas.6} parent=51 // pred_check_branch
        %1334 = sbr.rel (%p1332) target = $region60
      $region59: #{rblock_pallas.6} parent=51 // pred_region
        %p1335 = scmp.lt.s32.totalorder %s23, 1
        %s1336 = scalar_select %p1335, %s23, 1
        %s1337 = smul.addr %s1336, 8
        %s1338 = scalar_lea.vmem %s4, %s1337
      $region60: #{rblock_pallas.6} parent=51 // pred_fallthru
        _
      // Predicated region
      $region61: #{rblock_pallas.6} parent=51 // pred_check
        %p1339 = pneg %p177
      $region62: #{rblock_pallas.6} parent=51 // pred_check_branch
        %1341 = sbr.rel (%p1339) target = $region64
      $region63: #{rblock_pallas.6} parent=51 // pred_region
        %p1342 = scmp.lt.s32.totalorder %s23, 1
        %s1343 = scalar_select %p1342, %s23, 1
        %s1344 = smul.addr %s1343, 8
        %s1345 = scalar_lea.vmem %s5, %s1344
      $region64: #{rblock_pallas.6} parent=51 // pred_fallthru
        _
    $region52: #{rblock_pallas.6} parent=5 // pred_fallthru
      _
  $region6: #{rblock_pallas.6} parent=0 // loop_footer
    %s16 = sadd.s32 1, %s12
  $region7: #{rblock_pallas.6} parent=0 // loop_footer_branch
    %11 = sbr.rel target = $region3
  $region8: #{rblock_pallas.6} parent=0 // loop_exit
    _

// kernel: rblock_pallas.4
$region0: #{rblock_pallas.4}
  #allocation0 [shape = 'u32[]', space=smem, size = 0x4, offset = 0x4, fixed_abs, tag = 'smem constant byte address 0x4 - core index']
  #allocation1 [shape = 'u32[144,128]{1,0:T(1,128)}', space=vmem, size = 0x12000, scoped, tag = 'internal scratch']
  %s0 = inlined_call_operand.vmem [shape: bf16[2,4,400], index: 0, kind: input, shape index: {}]
  %s1 = inlined_call_operand.vmem [shape: bf16[9,8,4], index: 1, kind: input, shape index: {}]
  %s2 = inlined_call_operand.vmem [shape: bf16[8,4], index: 2, kind: input, shape index: {}]
  %s3 = inlined_call_operand.vmem [shape: f32[1,324], index: 3, kind: input, shape index: {}]
  %s4 = inlined_call_operand.vmem [shape: f32[1,362], index: 4, kind: input, shape index: {}]
  %s5 = inlined_call_operand.vmem [shape: bf16[2,8,362], index: 5, kind: output, shape index: {0}]
  %s6 = inlined_call_operand.vmem [shape: bf16[2,8,324], index: 6, kind: output, shape index: {1}]
  %s7 = inlined_call_operand.vmem [shape: f32[2,8,1], index: 7, kind: output, shape index: {2}]
  %s8 = inlined_call_operand.vmem [shape: f32[2,8,1], index: 8, kind: output, shape index: {3}]
  %s9 = inlined_call_operand.vmem [shape: f32[2,8,1], index: 9, kind: output, shape index: {4}]
  %s10 = inlined_call_operand.vmem [shape: f32[2,8,1], index: 10, kind: output, shape index: {5}]
  %11 = xla_tuple %s5, %s6, %s7, %s8, %s9, %s10
  %s12 = sld [smem:[#allocation0]]
  $region97: #{rblock_pallas.4} parent=0
    _
  %s14 = ssub.s32 1, %s12
  %s15 = scalar_select 0, %s14, %s12
  loop: start=0, step=1, limit=4
  $region2: #{rblock_pallas.4} parent=0 // loop_pre_header
    _
  $region3: #{rblock_pallas.4} parent=0 // loop_header
    %s17 = sphi 0, %s21
    %p18 = scmp.ge.s32.totalorder %s17, 4
    %s24 = sphi 0, %s36
    %s25 = sphi 0, %s32
    %s26 = sphi 0, %s24
    %s27 = sphi 0, %s25
    %s28 = sphi 0, %s26
    %s29 = sphi 0, %s27
    %s41 = sphi 0, %s43
    %s44 = sphi 0, %s41
    %s45 = sphi 0, %s44
    %s61 = sphi 0, %s45
    %s65 = sphi 0, %s65
    %s67 = sphi 0, %s65
    %s68 = sphi 0, %s67
    %s82 = sphi 0, %s68
    %s86 = sphi 0, %s86
    %s88 = sphi 0, %s86
    %s89 = sphi 0, %s88
    %s103 = sphi 0, %s89
    %s107 = sphi 0, %s107
    %s109 = sphi 0, %s107
    %s110 = sphi 0, %s109
    %s124 = sphi 0, %s110
    %s128 = sphi 0, %s128
    %s130 = sphi 0, %s128
    %s131 = sphi 0, %s130
    %s145 = sphi 0, %s131
    %s153 = sphi 0, %s155
    %s156 = sphi 0, %s153
    %s157 = sphi 0, %s156
    %s173 = sphi 0, %s157
    %s181 = sphi 0, %s183
    %s184 = sphi 0, %s181
    %s185 = sphi 0, %s184
    %s201 = sphi 0, %s185
    %s207 = sphi 0, %s209
    %s210 = sphi 0, %s207
    %s211 = sphi 0, %s210
    %s227 = sphi 0, %s211
    %s233 = sphi 0, %s235
    %s236 = sphi 0, %s233
    %s237 = sphi 0, %s236
    %s253 = sphi 0, %s237
    %s259 = sphi 0, %s261
    %s262 = sphi 0, %s259
    %s263 = sphi 0, %s262
    %s279 = sphi 0, %s263
    %s285 = sphi 0, %s287
    %s288 = sphi 0, %s285
    %s289 = sphi 0, %s288
    %s305 = sphi 0, %s289
  $region4: #{rblock_pallas.4} parent=0 // loop_header_branch
    %20 = sbr.rel (%p18) target = $region8
  $region5: #{rblock_pallas.4} parent=0 // loop_body
    %s22 = ssub.s32 %s17, 1
    %s23 = ssub.s32 %s17, 2
    %s30 = sadd.s32 1, %s25
    %p31 = scmp.ge.s32.totalorder %s30, 1
    %s32 = scalar_select %p31, 0, %s30
    %s33 = sadd.s32 1, %s24
    %s34 = scalar_select %p31, %s33, %s24
    %p35 = scmp.ge.s32.totalorder %s34, 2
    %s36 = scalar_select %p35, 0, %s34
    %s37 = sadd.s32 %s24, %s25
    %s38 = sadd.s32 %s36, %s32
    %s39 = ssub.s32 %s37, %s38
    %p40 = scmp.eq.s32.totalorder %s39, 0
    %s42 = sadd.s32 %s41, 1
    %s43 = scalar_select %p40, %s41, %s42
    %p46 = pneg %p40
    %p47 = scmp.eq.s32.totalorder %s17, 1
    %p48 = por %p46, %p47
    %p49 = scmp.ne.s32.totalorder %s41, %s44
    %p50 = scmp.eq.s32.totalorder %s17, 0
    %p51 = por %p49, %p50
    %p52 = scmp.ne.s32.totalorder %s41, %s44
    %p53 = scmp.eq.s32.totalorder %s22, 1
    %p54 = por %p52, %p53
    %p55 = scmp.ne.s32.totalorder %s44, %s45
    %p56 = scmp.eq.s32.totalorder %s22, 0
    %p57 = por %p55, %p56
    %p58 = scmp.ne.s32.totalorder %s44, %s45
    %p59 = scmp.eq.s32.totalorder %s23, 1
    %p60 = por %p58, %p59
    %p62 = scmp.ne.s32.totalorder %s45, %s61
    %p63 = scmp.eq.s32.totalorder %s23, 0
    %p64 = por %p62, %p63
    %s66 = sadd.s32 %s65, 1
    %p69 = scmp.eq.s32.totalorder %s17, 1
    %p70 = scmp.ne.s32.totalorder %s65, %s67
    %p71 = scmp.eq.s32.totalorder %s17, 0
    %p72 = por %p70, %p71
    %p73 = scmp.ne.s32.totalorder %s65, %s67
    %p74 = scmp.eq.s32.totalorder %s22, 1
    %p75 = por %p73, %p74
    %p76 = scmp.ne.s32.totalorder %s67, %s68
    %p77 = scmp.eq.s32.totalorder %s22, 0
    %p78 = por %p76, %p77
    %p79 = scmp.ne.s32.totalorder %s67, %s68
    %p80 = scmp.eq.s32.totalorder %s23, 1
    %p81 = por %p79, %p80
    %p83 = scmp.ne.s32.totalorder %s68, %s82
    %p84 = scmp.eq.s32.totalorder %s23, 0
    %p85 = por %p83, %p84
    %s87 = sadd.s32 %s86, 1
    %p90 = scmp.eq.s32.totalorder %s17, 1
    %p91 = scmp.ne.s32.totalorder %s86, %s88
    %p92 = scmp.eq.s32.totalorder %s17, 0
    %p93 = por %p91, %p92
    %p94 = scmp.ne.s32.totalorder %s86, %s88
    %p95 = scmp.eq.s32.totalorder %s22, 1
    %p96 = por %p94, %p95
    %p97 = scmp.ne.s32.totalorder %s88, %s89
    %p98 = scmp.eq.s32.totalorder %s22, 0
    %p99 = por %p97, %p98
    %p100 = scmp.ne.s32.totalorder %s88, %s89
    %p101 = scmp.eq.s32.totalorder %s23, 1
    %p102 = por %p100, %p101
    %p104 = scmp.ne.s32.totalorder %s89, %s103
    %p105 = scmp.eq.s32.totalorder %s23, 0
    %p106 = por %p104, %p105
    %s108 = sadd.s32 %s107, 1
    %p111 = scmp.eq.s32.totalorder %s17, 1
    %p112 = scmp.ne.s32.totalorder %s107, %s109
    %p113 = scmp.eq.s32.totalorder %s17, 0
    %p114 = por %p112, %p113
    %p115 = scmp.ne.s32.totalorder %s107, %s109
    %p116 = scmp.eq.s32.totalorder %s22, 1
    %p117 = por %p115, %p116
    %p118 = scmp.ne.s32.totalorder %s109, %s110
    %p119 = scmp.eq.s32.totalorder %s22, 0
    %p120 = por %p118, %p119
    %p121 = scmp.ne.s32.totalorder %s109, %s110
    %p122 = scmp.eq.s32.totalorder %s23, 1
    %p123 = por %p121, %p122
    %p125 = scmp.ne.s32.totalorder %s110, %s124
    %p126 = scmp.eq.s32.totalorder %s23, 0
    %p127 = por %p125, %p126
    %s129 = sadd.s32 %s128, 1
    %p132 = scmp.eq.s32.totalorder %s17, 1
    %p133 = scmp.ne.s32.totalorder %s128, %s130
    %p134 = scmp.eq.s32.totalorder %s17, 0
    %p135 = por %p133, %p134
    %p136 = scmp.ne.s32.totalorder %s128, %s130
    %p137 = scmp.eq.s32.totalorder %s22, 1
    %p138 = por %p136, %p137
    %p139 = scmp.ne.s32.totalorder %s130, %s131
    %p140 = scmp.eq.s32.totalorder %s22, 0
    %p141 = por %p139, %p140
    %p142 = scmp.ne.s32.totalorder %s130, %s131
    %p143 = scmp.eq.s32.totalorder %s23, 1
    %p144 = por %p142, %p143
    %p146 = scmp.ne.s32.totalorder %s131, %s145
    %p147 = scmp.eq.s32.totalorder %s23, 0
    %p148 = por %p146, %p147
    %s149 = sadd.s32 %s24, %s25
    %s150 = sadd.s32 %s36, %s32
    %s151 = ssub.s32 %s149, %s150
    %p152 = scmp.eq.s32.totalorder %s151, 0
    %s154 = sadd.s32 %s153, 1
    %s155 = scalar_select %p152, %s153, %s154
    %p158 = pneg %p152
    %p159 = scmp.eq.s32.totalorder %s17, 1
    %p160 = por %p158, %p159
    %p161 = scmp.ne.s32.totalorder %s153, %s156
    %p162 = scmp.eq.s32.totalorder %s17, 0
    %p163 = por %p161, %p162
    %p164 = scmp.ne.s32.totalorder %s153, %s156
    %p165 = scmp.eq.s32.totalorder %s22, 1
    %p166 = por %p164, %p165
    %p167 = scmp.ne.s32.totalorder %s156, %s157
    %p168 = scmp.eq.s32.totalorder %s22, 0
    %p169 = por %p167, %p168
    %p170 = scmp.ne.s32.totalorder %s156, %s157
    %p171 = scmp.eq.s32.totalorder %s23, 1
    %p172 = por %p170, %p171
    %p174 = scmp.ne.s32.totalorder %s157, %s173
    %p175 = scmp.eq.s32.totalorder %s23, 0
    %p176 = por %p174, %p175
    %s177 = sadd.s32 %s24, %s25
    %s178 = sadd.s32 %s36, %s32
    %s179 = ssub.s32 %s177, %s178
    %p180 = scmp.eq.s32.totalorder %s179, 0
    %s182 = sadd.s32 %s181, 1
    %s183 = scalar_select %p180, %s181, %s182
    %p186 = pneg %p180
    %p187 = scmp.eq.s32.totalorder %s17, 1
    %p188 = por %p186, %p187
    %p189 = scmp.ne.s32.totalorder %s181, %s184
    %p190 = scmp.eq.s32.totalorder %s17, 0
    %p191 = por %p189, %p190
    %p192 = scmp.ne.s32.totalorder %s181, %s184
    %p193 = scmp.eq.s32.totalorder %s22, 1
    %p194 = por %p192, %p193
    %p195 = scmp.ne.s32.totalorder %s184, %s185
    %p196 = scmp.eq.s32.totalorder %s22, 0
    %p197 = por %p195, %p196
    %p198 = scmp.ne.s32.totalorder %s184, %s185
    %p199 = scmp.eq.s32.totalorder %s23, 1
    %p200 = por %p198, %p199
    %p202 = scmp.ne.s32.totalorder %s185, %s201
    %p203 = scmp.eq.s32.totalorder %s23, 0
    %p204 = por %p202, %p203
    %s205 = ssub.s32 %s24, %s36
    %p206 = scmp.eq.s32.totalorder %s205, 0
    %s208 = sadd.s32 %s207, 1
    %s209 = scalar_select %p206, %s207, %s208
    %p212 = pneg %p206
    %p213 = scmp.eq.s32.totalorder %s17, 1
    %p214 = por %p212, %p213
    %p215 = scmp.ne.s32.totalorder %s207, %s210
    %p216 = scmp.eq.s32.totalorder %s17, 0
    %p217 = por %p215, %p216
    %p218 = scmp.ne.s32.totalorder %s207, %s210
    %p219 = scmp.eq.s32.totalorder %s22, 1
    %p220 = por %p218, %p219
    %p221 = scmp.ne.s32.totalorder %s210, %s211
    %p222 = scmp.eq.s32.totalorder %s22, 0
    %p223 = por %p221, %p222
    %p224 = scmp.ne.s32.totalorder %s210, %s211
    %p225 = scmp.eq.s32.totalorder %s23, 1
    %p226 = por %p224, %p225
    %p228 = scmp.ne.s32.totalorder %s211, %s227
    %p229 = scmp.eq.s32.totalorder %s23, 0
    %p230 = por %p228, %p229
    %s231 = ssub.s32 %s24, %s36
    %p232 = scmp.eq.s32.totalorder %s231, 0
    %s234 = sadd.s32 %s233, 1
    %s235 = scalar_select %p232, %s233, %s234
    %p238 = pneg %p232
    %p239 = scmp.eq.s32.totalorder %s17, 1
    %p240 = por %p238, %p239
    %p241 = scmp.ne.s32.totalorder %s233, %s236
    %p242 = scmp.eq.s32.totalorder %s17, 0
    %p243 = por %p241, %p242
    %p244 = scmp.ne.s32.totalorder %s233, %s236
    %p245 = scmp.eq.s32.totalorder %s22, 1
    %p246 = por %p244, %p245
    %p247 = scmp.ne.s32.totalorder %s236, %s237
    %p248 = scmp.eq.s32.totalorder %s22, 0
    %p249 = por %p247, %p248
    %p250 = scmp.ne.s32.totalorder %s236, %s237
    %p251 = scmp.eq.s32.totalorder %s23, 1
    %p252 = por %p250, %p251
    %p254 = scmp.ne.s32.totalorder %s237, %s253
    %p255 = scmp.eq.s32.totalorder %s23, 0
    %p256 = por %p254, %p255
    %s257 = ssub.s32 %s24, %s36
    %p258 = scmp.eq.s32.totalorder %s257, 0
    %s260 = sadd.s32 %s259, 1
    %s261 = scalar_select %p258, %s259, %s260
    %p264 = pneg %p258
    %p265 = scmp.eq.s32.totalorder %s17, 1
    %p266 = por %p264, %p265
    %p267 = scmp.ne.s32.totalorder %s259, %s262
    %p268 = scmp.eq.s32.totalorder %s17, 0
    %p269 = por %p267, %p268
    %p270 = scmp.ne.s32.totalorder %s259, %s262
    %p271 = scmp.eq.s32.totalorder %s22, 1
    %p272 = por %p270, %p271
    %p273 = scmp.ne.s32.totalorder %s262, %s263
    %p274 = scmp.eq.s32.totalorder %s22, 0
    %p275 = por %p273, %p274
    %p276 = scmp.ne.s32.totalorder %s262, %s263
    %p277 = scmp.eq.s32.totalorder %s23, 1
    %p278 = por %p276, %p277
    %p280 = scmp.ne.s32.totalorder %s263, %s279
    %p281 = scmp.eq.s32.totalorder %s23, 0
    %p282 = por %p280, %p281
    %s283 = ssub.s32 %s24, %s36
    %p284 = scmp.eq.s32.totalorder %s283, 0
    %s286 = sadd.s32 %s285, 1
    %s287 = scalar_select %p284, %s285, %s286
    %p290 = pneg %p284
    %p291 = scmp.eq.s32.totalorder %s17, 1
    %p292 = por %p290, %p291
    %p293 = scmp.ne.s32.totalorder %s285, %s288
    %p294 = scmp.eq.s32.totalorder %s17, 0
    %p295 = por %p293, %p294
    %p296 = scmp.ne.s32.totalorder %s285, %s288
    %p297 = scmp.eq.s32.totalorder %s22, 1
    %p298 = por %p296, %p297
    %p299 = scmp.ne.s32.totalorder %s288, %s289
    %p300 = scmp.eq.s32.totalorder %s22, 0
    %p301 = por %p299, %p300
    %p302 = scmp.ne.s32.totalorder %s288, %s289
    %p303 = scmp.eq.s32.totalorder %s23, 1
    %p304 = por %p302, %p303
    %p306 = scmp.ne.s32.totalorder %s289, %s305
    %p307 = scmp.eq.s32.totalorder %s23, 0
    %p308 = por %p306, %p307
    %p309 = scmp.le.s32.totalorder 1, %s17
    %p310 = scmp.lt.s32.totalorder %s17, 3
    %p311 = pnand %p309, %p310
    %p312 = pneg %p311
    // Predicated region
    $region9: #{rblock_pallas.4} parent=5 // pred_check
      _
    $region10: #{rblock_pallas.4} parent=5 // pred_check_branch
      %314 = sbr.rel (%p311) target = $region12
    $region11: #{rblock_pallas.4} parent=5 // pred_region
      %s315 = ssub.s32 %s17, 1
      // Predicated region
      $region13: #{rblock_pallas.4} parent=11 // pred_check
        %p316 = pneg %p78
      $region14: #{rblock_pallas.4} parent=11 // pred_check_branch
        %318 = sbr.rel (%p316) target = $region16
      $region15: #{rblock_pallas.4} parent=11 // pred_region
        _
      $region16: #{rblock_pallas.4} parent=11 // pred_fallthru
        _
      // Predicated region
      $region17: #{rblock_pallas.4} parent=11 // pred_check
        %p319 = pneg %p99
      $region18: #{rblock_pallas.4} parent=11 // pred_check_branch
        %321 = sbr.rel (%p319) target = $region20
      $region19: #{rblock_pallas.4} parent=11 // pred_region
        _
      $region20: #{rblock_pallas.4} parent=11 // pred_fallthru
        _
      // Predicated region
      $region21: #{rblock_pallas.4} parent=11 // pred_check
        %p322 = pneg %p120
      $region22: #{rblock_pallas.4} parent=11 // pred_check_branch
        %324 = sbr.rel (%p322) target = $region24
      $region23: #{rblock_pallas.4} parent=11 // pred_region
        _
      $region24: #{rblock_pallas.4} parent=11 // pred_fallthru
        _
      // Predicated region
      $region25: #{rblock_pallas.4} parent=11 // pred_check
        %p325 = pneg %p141
      $region26: #{rblock_pallas.4} parent=11 // pred_check_branch
        %327 = sbr.rel (%p325) target = $region28
      $region27: #{rblock_pallas.4} parent=11 // pred_region
        _
      $region28: #{rblock_pallas.4} parent=11 // pred_fallthru
        _
    $region12: #{rblock_pallas.4} parent=5 // pred_fallthru
      _
    %p328 = scmp.lt.s32.totalorder %s17, 2
    // Predicated region
    $region29: #{rblock_pallas.4} parent=5 // pred_check
      %p329 = pneg %p328
    $region30: #{rblock_pallas.4} parent=5 // pred_check_branch
      %331 = sbr.rel (%p329) target = $region32
    $region31: #{rblock_pallas.4} parent=5 // pred_region
      // Predicated region
      $region33: #{rblock_pallas.4} parent=31 // pred_check
        %p332 = pneg %p51
      $region34: #{rblock_pallas.4} parent=31 // pred_check_branch
        %334 = sbr.rel (%p332) target = $region36
      $region35: #{rblock_pallas.4} parent=31 // pred_region
        %s335 = sadd.s32 %s24, %s25
        %p336 = scmp.lt.s32.totalorder %s335, 1
        %s337 = scalar_select %p336, %s335, 1
        %s338 = smul.addr %s337, 4
        %s339 = smul.addr %s338, 2
        %s340 = scalar_lea.vmem %s0, %s339
        %s341 = sadd.s32 %s24, %s25
      $region36: #{rblock_pallas.4} parent=31 // pred_fallthru
        _
    $region32: #{rblock_pallas.4} parent=5 // pred_fallthru
      _
    %p342 = scmp.le.s32.totalorder 1, %s17
    %p343 = scmp.lt.s32.totalorder %s17, 3
    %p344 = pnand %p342, %p343
    %p345 = pneg %p344
    // Predicated region
    $region37: #{rblock_pallas.4} parent=5 // pred_check
      _
    $region38: #{rblock_pallas.4} parent=5 // pred_check_branch
      %347 = sbr.rel (%p344) target = $region40
    $region39: #{rblock_pallas.4} parent=5 // pred_region
      %s348 = ssub.s32 %s17, 1
      %s349 = sadd.s32 %s26, %s27
      %p350 = scmp.lt.s32.totalorder %s349, 1
      %s351 = scalar_select %p350, %s349, 1
      %s352 = smul.addr %s351, 4
      %s353 = smul.addr %s352, 2
      %s354 = scalar_lea.vmem %s0, %s353
      %p355 = pneg %p57
      %p356 = pneg %p54
      %p357 = pneg %p78
      %p358 = pneg %p75
      %p359 = pneg %p99
      %p360 = pneg %p96
      %p361 = pneg %p120
      %p362 = pneg %p117
      %p363 = pneg %p141
      %p364 = pneg %p138
      %p365 = pneg %p169
      %p366 = pneg %p166
      %s367 = sadd.s32 %s26, %s27
      %p368 = scmp.lt.s32.totalorder %s367, 1
      %s369 = scalar_select %p368, %s367, 1
      %s370 = smul.addr %s369, 3
      %s371 = smul.addr %s370, 4
      %s372 = scalar_lea.vmem %s5, %s371
      %p373 = pneg %p197
      %p374 = pneg %p194
      %s375 = sadd.s32 %s26, %s27
      %p376 = scmp.lt.s32.totalorder %s375, 1
      %s377 = scalar_select %p376, %s375, 1
      %s378 = smul.addr %s377, 3
      %s379 = smul.addr %s378, 4
      %s380 = scalar_lea.vmem %s6, %s379
      %p381 = pneg %p223
      %p382 = pneg %p220
      %p383 = scmp.lt.s32.totalorder %s26, 1
      %s384 = scalar_select %p383, %s26, 1
      %s385 = smul.addr %s384, 8
      %s386 = scalar_lea.vmem %s7, %s385
      %p387 = pneg %p249
      %p388 = pneg %p246
      %p389 = scmp.lt.s32.totalorder %s26, 1
      %s390 = scalar_select %p389, %s26, 1
      %s391 = smul.addr %s390, 8
      %s392 = scalar_lea.vmem %s8, %s391
      %p393 = pneg %p275
      %p394 = pneg %p272
      %p395 = scmp.lt.s32.totalorder %s26, 1
      %s396 = scalar_select %p395, %s26, 1
      %s397 = smul.addr %s396, 8
      %s398 = scalar_lea.vmem %s9, %s397
      %p399 = pneg %p301
      %p400 = pneg %p298
      %p401 = scmp.lt.s32.totalorder %s26, 1
      %s402 = scalar_select %p401, %s26, 1
      %s403 = smul.addr %s402, 8
      %s404 = scalar_lea.vmem %s10, %s403
      %s405 = sadd.s32 %s26, %s27
      %p406 = scmp.lt.s32.totalorder %s405, 1
      %s407 = scalar_select %p406, %s405, 1
      %s408 = smul.addr %s407, 4
      %s409 = smul.addr %s408, 2
      %s410 = scalar_lea.vmem %s0, %s409
      %s411 = sadd.s32 %s26, %s27
      %s412 = sadd.s32 %s26, %s27
      %p413 = scmp.lt.s32.totalorder %s412, 1
      %s414 = scalar_select %p413, %s412, 1
      %s415 = smul.addr %s414, 3
      %s416 = smul.addr %s415, 4
      %s417 = scalar_lea.vmem %s5, %s416
      %s418 = sadd.s32 %s26, %s27
      %s419 = sadd.s32 %s26, %s27
      %p420 = scmp.lt.s32.totalorder %s419, 1
      %s421 = scalar_select %p420, %s419, 1
      %s422 = smul.addr %s421, 3
      %s423 = smul.addr %s422, 4
      %s424 = scalar_lea.vmem %s6, %s423
      %s425 = sadd.s32 %s26, %s27
      %p426 = scmp.lt.s32.totalorder %s26, 1
      %s427 = scalar_select %p426, %s26, 1
      %s428 = smul.addr %s427, 8
      %s429 = scalar_lea.vmem %s7, %s428
      %p430 = scmp.lt.s32.totalorder %s26, 1
      %s431 = scalar_select %p430, %s26, 1
      %s432 = smul.addr %s431, 8
      %s433 = scalar_lea.vmem %s8, %s432
      %p434 = scmp.lt.s32.totalorder %s26, 1
      %s435 = scalar_select %p434, %s26, 1
      %s436 = smul.addr %s435, 8
      %s437 = scalar_lea.vmem %s9, %s436
      %p438 = scmp.lt.s32.totalorder %s26, 1
      %s439 = scalar_select %p438, %s26, 1
      %s440 = smul.addr %s439, 8
      %s441 = scalar_lea.vmem %s10, %s440
      %p443 = scmp.eq.s32.totalorder %s27, 0
      // Predicated region
      $region41: #{rblock_pallas.4} parent=39 // pred_check
        %p444 = pneg %p443
      $region42: #{rblock_pallas.4} parent=39 // pred_check_branch
        %446 = sbr.rel (%p444) target = $region44
      $region43: #{rblock_pallas.4} parent=39 // pred_region
        %vm447 = vcmask 7168
        %448 = vst.msk [vmem:[%s429] sm:$0xff] %vm447, 0.0
        %449 = vst.msk [vmem:[%s433] sm:$0xff] %vm447, 0.0
        %450 = vst.msk [vmem:[%s437] sm:$0xff] %vm447, 0.0
        %451 = vst.msk [vmem:[%s441] sm:$0xff] %vm447, 0.0
      $region44: #{rblock_pallas.4} parent=39 // pred_fallthru
        _
      %v452 = vld [vmem:[%s1] sm:$0xf]
      %v453 = vld [vmem:[%s410] sm:$0x3f]
      %s454 = scalar_lea.vmem %s1, 4
      %v455 = vld [vmem:[%s454] sm:$0xf]
      %v457 = vcombine.high %v453, %v453
      %v459 = vunpack.c.l.s4 1983009808
      %v460 = vunpack.c.0.s8 %v459
      %v461 = vlaneseq
      %v462 = vshrl.u32 %v461, 7
      %v463 = vsub.s32 %v460, %v462
      %v464 = vrot.slane %v453, %v463
      %v466 = vunpack.c.l.s4 1983009808
      %v467 = vunpack.c.0.s8 %v466
      %v468 = vlaneseq
      %v469 = vshrl.u32 %v468, 7
      %v470 = vsub.s32 %v467, %v469
      %v471 = vrot.slane %v457, %v470
      %v472 = vcombine.high %v464, %v464
      %473 = vrot.lane.b32.xlu0 %v464, 127
      %v474 = vpop.permute.xlu0 %473
      %475 = vrot.lane.b32.xlu0 %v472, 127
      %v476 = vpop.permute.xlu0 %475
      %477 = vrot.lane.b32.xlu0 %v471, 127
      %v478 = vpop.permute.xlu0 %477
      %vm479 = vcmask 1039360
      %v480 = vsel %vm479, %v474, %v476
      %v481 = vsel %vm479, %v476, %v478
      %vm482 = vcmask 31744
      %v484 = vsel %vm482, %v455, 0
      %vm486 = vcmask 1041408
      %v488 = vsel %vm486, %v480, 0
      %v491 = vsel %vm486, %v481, 0
      %v494 = vsel %vm486, %v478, 0
      %496 = vmatprep.subr.bf16.mxu0 %v491
      %497 = vmatpush1.bf16.msra.mxu0 %v488
      %498 = vmatprep.subr.bf16.mxu0 0
      %499 = vmatpush1.bf16.msra.mxu0 0
      %500 = vmatprep.subr.bf16.mxu0 0
      %501 = vmatpush1.bf16.msra.mxu0 0
      %502 = vmatprep.subr.bf16.mxu0 0
      %503 = vmatpush1.bf16.msra.mxu0 0
      %504 = vmatprep.subr.bf16.mxu0 0
      %505 = vmatpush1.bf16.msra.mxu0 0
      %506 = vmatprep.subr.bf16.mxu0 0
      %507 = vmatpush1.bf16.msra.mxu0 0
      %508 = vmatprep.subr.bf16.mxu0 0
      %509 = vmatpush1.bf16.msra.mxu0 0
      %510 = vmatprep.subr.bf16.mxu0 0
      %511 = vmatpush1.bf16.msra.mxu0 0
      %512 = vmatprep.subr.bf16.mxu0 0
      %513 = vmatpush1.bf16.msra.mxu0 0
      %514 = vmatprep.subr.bf16.mxu0 0
      %515 = vmatpush1.bf16.msra.mxu0 0
      %516 = vmatprep.subr.bf16.mxu0 0
      %517 = vmatpush1.bf16.msra.mxu0 0
      %518 = vmatprep.subr.bf16.mxu0 0
      %519 = vmatpush1.bf16.msra.mxu0 0
      %520 = vmatprep.subr.bf16.mxu0 0
      %521 = vmatpush1.bf16.msra.mxu0 0
      %522 = vmatprep.subr.bf16.mxu0 0
      %523 = vmatpush1.bf16.msra.mxu0 0
      %524 = vmatprep.subr.bf16.mxu0 0
      %525 = vmatpush1.bf16.msra.mxu0 0
      %526 = vmatprep.subr.bf16.mxu0 0
      %527 = vmatpush1.bf16.msra.mxu0 0
      %528 = vmatprep.mubr.bf16.mxu0 0
      %529 = vmatmul.mubr.bf16.gmra.mrb[0].mxu0 %v484
      %v530 = vpop.f32.mrb[0].mxu0
      %v531 = vadd.f32 0.0, %v530
      %v532 = vpop.f32.mrb[0].mxu0
      %v533 = vadd.f32 0.0, %v532
      %v534 = vpop.f32.mrb[0].mxu0
      %v535 = vpop.f32.mrb[0].mxu0
      %536 = vdwg.mxu0
      %537 = vmatprep.subr.bf16.mxu0 0
      %538 = vmatpush1.bf16.msra.mxu0 %v494
      %539 = vmatprep.subr.bf16.mxu0 0
      %540 = vmatpush1.bf16.msra.mxu0 0
      %541 = vmatprep.subr.bf16.mxu0 0
      %542 = vmatpush1.bf16.msra.mxu0 0
      %543 = vmatprep.subr.bf16.mxu0 0
      %544 = vmatpush1.bf16.msra.mxu0 0
      %545 = vmatprep.subr.bf16.mxu0 0
      %546 = vmatpush1.bf16.msra.mxu0 0
      %547 = vmatprep.subr.bf16.mxu0 0
      %548 = vmatpush1.bf16.msra.mxu0 0
      %549 = vmatprep.subr.bf16.mxu0 0
      %550 = vmatpush1.bf16.msra.mxu0 0
      %551 = vmatprep.subr.bf16.mxu0 0
      %552 = vmatpush1.bf16.msra.mxu0 0
      %553 = vmatprep.subr.bf16.mxu0 0
      %554 = vmatpush1.bf16.msra.mxu0 0
      %555 = vmatprep.subr.bf16.mxu0 0
      %556 = vmatpush1.bf16.msra.mxu0 0
      %557 = vmatprep.subr.bf16.mxu0 0
      %558 = vmatpush1.bf16.msra.mxu0 0
      %559 = vmatprep.subr.bf16.mxu0 0
      %560 = vmatpush1.bf16.msra.mxu0 0
      %561 = vmatprep.subr.bf16.mxu0 0
      %562 = vmatpush1.bf16.msra.mxu0 0
      %563 = vmatprep.subr.bf16.mxu0 0
      %564 = vmatpush1.bf16.msra.mxu0 0
      %565 = vmatprep.subr.bf16.mxu0 0
      %566 = vmatpush1.bf16.msra.mxu0 0
      %567 = vmatprep.subr.bf16.mxu0 0
      %568 = vmatpush1.bf16.msra.mxu0 0
      %569 = vmatprep.mubr.bf16.mxu0 0
      %570 = vmatmul.mubr.bf16.gmra.mrb[0].mxu0 %v484
      %v571 = vpop.f32.mrb[0].mxu0
      %v572 = vadd.f32 0.0, %v571
      %v573 = vpop.f32.mrb[0].mxu0
      %v574 = vpop.f32.mrb[0].mxu0
      %v575 = vpop.f32.mrb[0].mxu0
      %576 = vdwg.mxu0
      %v578 = vsel %vm482, %v452, 0
      %v581 = vsel %vm486, %v464, 0
      %v584 = vsel %vm486, %v472, 0
      %v587 = vsel %vm486, %v471, 0
      %589 = vmatprep.subr.bf16.mxu0 %v584
      %590 = vmatpush1.bf16.msra.mxu0 %v581
      %591 = vmatprep.subr.bf16.mxu0 0
      %592 = vmatpush1.bf16.msra.mxu0 0
      %593 = vmatprep.subr.bf16.mxu0 0
      %594 = vmatpush1.bf16.msra.mxu0 0
      %595 = vmatprep.subr.bf16.mxu0 0
      %596 = vmatpush1.bf16.msra.mxu0 0
      %597 = vmatprep.subr.bf16.mxu0 0
      %598 = vmatpush1.bf16.msra.mxu0 0
      %599 = vmatprep.subr.bf16.mxu0 0
      %600 = vmatpush1.bf16.msra.mxu0 0
      %601 = vmatprep.subr.bf16.mxu0 0
      %602 = vmatpush1.bf16.msra.mxu0 0
      %603 = vmatprep.subr.bf16.mxu0 0
      %604 = vmatpush1.bf16.msra.mxu0 0
      %605 = vmatprep.subr.bf16.mxu0 0
      %606 = vmatpush1.bf16.msra.mxu0 0
      %607 = vmatprep.subr.bf16.mxu0 0
      %608 = vmatpush1.bf16.msra.mxu0 0
      %609 = vmatprep.subr.bf16.mxu0 0
      %610 = vmatpush1.bf16.msra.mxu0 0
      %611 = vmatprep.subr.bf16.mxu0 0
      %612 = vmatpush1.bf16.msra.mxu0 0
      %613 = vmatprep.subr.bf16.mxu0 0
      %614 = vmatpush1.bf16.msra.mxu0 0
      %615 = vmatprep.subr.bf16.mxu0 0
      %616 = vmatpush1.bf16.msra.mxu0 0
      %617 = vmatprep.subr.bf16.mxu0 0
      %618 = vmatpush1.bf16.msra.mxu0 0
      %619 = vmatprep.subr.bf16.mxu0 0
      %620 = vmatpush1.bf16.msra.mxu0 0
      %621 = vmatprep.mubr.bf16.mxu0 0
      %622 = vmatmul.mubr.bf16.gmra.mrb[0].mxu0 %v578
      %v623 = vpop.f32.mrb[0].mxu0
      %v624 = vadd.f32 %v531, %v623
      %v625 = vpop.f32.mrb[0].mxu0
      %v626 = vadd.f32 %v533, %v625
      %v627 = vpop.f32.mrb[0].mxu0
      %v628 = vpop.f32.mrb[0].mxu0
      %629 = vdwg.mxu0
      %630 = vmatprep.subr.bf16.mxu0 0
      %631 = vmatpush1.bf16.msra.mxu0 %v587
      %632 = vmatprep.subr.bf16.mxu0 0
      %633 = vmatpush1.bf16.msra.mxu0 0
      %634 = vmatprep.subr.bf16.mxu0 0
      %635 = vmatpush1.bf16.msra.mxu0 0
      %636 = vmatprep.subr.bf16.mxu0 0
      %637 = vmatpush1.bf16.msra.mxu0 0
      %638 = vmatprep.subr.bf16.mxu0 0
      %639 = vmatpush1.bf16.msra.mxu0 0
      %640 = vmatprep.subr.bf16.mxu0 0
      %641 = vmatpush1.bf16.msra.mxu0 0
      %642 = vmatprep.subr.bf16.mxu0 0
      %643 = vmatpush1.bf16.msra.mxu0 0
      %644 = vmatprep.subr.bf16.mxu0 0
      %645 = vmatpush1.bf16.msra.mxu0 0
      %646 = vmatprep.subr.bf16.mxu0 0
      %647 = vmatpush1.bf16.msra.mxu0 0
      %648 = vmatprep.subr.bf16.mxu0 0
      %649 = vmatpush1.bf16.msra.mxu0 0
      %650 = vmatprep.subr.bf16.mxu0 0
      %651 = vmatpush1.bf16.msra.mxu0 0
      %652 = vmatprep.subr.bf16.mxu0 0
      %653 = vmatpush1.bf16.msra.mxu0 0
      %654 = vmatprep.subr.bf16.mxu0 0
      %655 = vmatpush1.bf16.msra.mxu0 0
      %656 = vmatprep.subr.bf16.mxu0 0
      %657 = vmatpush1.bf16.msra.mxu0 0
      %658 = vmatprep.subr.bf16.mxu0 0
      %659 = vmatpush1.bf16.msra.mxu0 0
      %660 = vmatprep.subr.bf16.mxu0 0
      %661 = vmatpush1.bf16.msra.mxu0 0
      %662 = vmatprep.mubr.bf16.mxu0 0
      %663 = vmatmul.mubr.bf16.gmra.mrb[0].mxu0 %v578
      %v664 = vpop.f32.mrb[0].mxu0
      %v665 = vadd.f32 %v572, %v664
      %v666 = vpop.f32.mrb[0].mxu0
      %v667 = vpop.f32.mrb[0].mxu0
      %v668 = vpop.f32.mrb[0].mxu0
      %669 = vdwg.mxu0
      %s670 = scalar_lea.vmem %s1, 8
      %v671 = vld [vmem:[%s670] sm:$0xf]
      %v672 = vld [vmem:[%s410] sm:$0x3f]
      %v674 = vcombine.high %v672, %v672
      %v676 = vunpack.c.l.s4 1983009808
      %v677 = vunpack.c.0.s8 %v676
      %v678 = vlaneseq
      %v679 = vshrl.u32 %v678, 7
      %v680 = vsub.s32 %v677, %v679
      %v681 = vrot.slane %v672, %v680
      %v683 = vunpack.c.l.s4 1983009808
      %v684 = vunpack.c.0.s8 %v683
      %v685 = vlaneseq
      %v686 = vshrl.u32 %v685, 7
      %v687 = vsub.s32 %v684, %v686
      %v688 = vrot.slane %v674, %v687
      %v689 = vcombine.high %v681, %v681
      %690 = vrot.lane.b32.xlu0 %v681, 126
      %v691 = vpop.permute.xlu0 %690
      %692 = vrot.lane.b32.xlu0 %v689, 126
      %v693 = vpop.permute.xlu0 %692
      %694 = vrot.lane.b32.xlu0 %v688, 126
      %v695 = vpop.permute.xlu0 %694
      %vm696 = vcmask 1031168
      %v697 = vsel %vm696, %v691, %v693
      %v698 = vsel %vm696, %v693, %v695
      %v700 = vsel %vm482, %v671, 0
      %v703 = vsel %vm486, %v697, 0
      %v706 = vsel %vm486, %v698, 0
      %v709 = vsel %vm486, %v695, 0
      %711 = vmatprep.subr.bf16.mxu0 %v706
      %712 = vmatpush1.bf16.msra.mxu0 %v703
      %713 = vmatprep.subr.bf16.mxu0 0
      %714 = vmatpush1.bf16.msra.mxu0 0
      %715 = vmatprep.subr.bf16.mxu0 0
      %716 = vmatpush1.bf16.msra.mxu0 0
      %717 = vmatprep.subr.bf16.mxu0 0
      %718 = vmatpush1.bf16.msra.mxu0 0
      %719 = vmatprep.subr.bf16.mxu0 0
      %720 = vmatpush1.bf16.msra.mxu0 0
      %721 = vmatprep.subr.bf16.mxu0 0
      %722 = vmatpush1.bf16.msra.mxu0 0
      %723 = vmatprep.subr.bf16.mxu0 0
      %724 = vmatpush1.bf16.msra.mxu0 0
      %725 = vmatprep.subr.bf16.mxu0 0
      %726 = vmatpush1.bf16.msra.mxu0 0
      %727 = vmatprep.subr.bf16.mxu0 0
      %728 = vmatpush1.bf16.msra.mxu0 0
      %729 = vmatprep.subr.bf16.mxu0 0
      %730 = vmatpush1.bf16.msra.mxu0 0
      %731 = vmatprep.subr.bf16.mxu0 0
      %732 = vmatpush1.bf16.msra.mxu0 0
      %733 = vmatprep.subr.bf16.mxu0 0
      %734 = vmatpush1.bf16.msra.mxu0 0
      %735 = vmatprep.subr.bf16.mxu0 0
      %736 = vmatpush1.bf16.msra.mxu0 0
      %737 = vmatprep.subr.bf16.mxu0 0
      %738 = vmatpush1.bf16.msra.mxu0 0
      %739 = vmatprep.subr.bf16.mxu0 0
      %740 = vmatpush1.bf16.msra.mxu0 0
      %741 = vmatprep.subr.bf16.mxu0 0
      %742 = vmatpush1.bf16.msra.mxu0 0
      %743 = vmatprep.mubr.bf16.mxu0 0
      %744 = vmatmul.mubr.bf16.gmra.mrb[0].mxu0 %v700
      %v745 = vpop.f32.mrb[0].mxu0
      %v746 = vadd.f32 0.0, %v745
      %v747 = vpop.f32.mrb[0].mxu0
      %v748 = vadd.f32 0.0, %v747
      %v749 = vpop.f32.mrb[0].mxu0
      %v750 = vpop.f32.mrb[0].mxu0
      %751 = vdwg.mxu0
      %752 = vmatprep.subr.bf16.mxu0 0
      %753 = vmatpush1.bf16.msra.mxu0 %v709
      %754 = vmatprep.subr.bf16.mxu0 0
      %755 = vmatpush1.bf16.msra.mxu0 0
      %756 = vmatprep.subr.bf16.mxu0 0
      %757 = vmatpush1.bf16.msra.mxu0 0
      %758 = vmatprep.subr.bf16.mxu0 0
      %759 = vmatpush1.bf16.msra.mxu0 0
      %760 = vmatprep.subr.bf16.mxu0 0
      %761 = vmatpush1.bf16.msra.mxu0 0
      %762 = vmatprep.subr.bf16.mxu0 0
      %763 = vmatpush1.bf16.msra.mxu0 0
      %764 = vmatprep.subr.bf16.mxu0 0
      %765 = vmatpush1.bf16.msra.mxu0 0
      %766 = vmatprep.subr.bf16.mxu0 0
      %767 = vmatpush1.bf16.msra.mxu0 0
      %768 = vmatprep.subr.bf16.mxu0 0
      %769 = vmatpush1.bf16.msra.mxu0 0
      %770 = vmatprep.subr.bf16.mxu0 0
      %771 = vmatpush1.bf16.msra.mxu0 0
      %772 = vmatprep.subr.bf16.mxu0 0
      %773 = vmatpush1.bf16.msra.mxu0 0
      %774 = vmatprep.subr.bf16.mxu0 0
      %775 = vmatpush1.bf16.msra.mxu0 0
      %776 = vmatprep.subr.bf16.mxu0 0
      %777 = vmatpush1.bf16.msra.mxu0 0
      %778 = vmatprep.subr.bf16.mxu0 0
      %779 = vmatpush1.bf16.msra.mxu0 0
      %780 = vmatprep.subr.bf16.mxu0 0
      %781 = vmatpush1.bf16.msra.mxu0 0
      %782 = vmatprep.subr.bf16.mxu0 0
      %783 = vmatpush1.bf16.msra.mxu0 0
      %784 = vmatprep.mubr.bf16.mxu0 0
      %785 = vmatmul.mubr.bf16.gmra.mrb[0].mxu0 %v700
      %v786 = vpop.f32.mrb[0].mxu0
      %v787 = vadd.f32 0.0, %v786
      %v788 = vpop.f32.mrb[0].mxu0
      %v789 = vpop.f32.mrb[0].mxu0
      %v790 = vpop.f32.mrb[0].mxu0
      %791 = vdwg.mxu0
      %v792 = vadd.f32 %v624, %v746
      %v793 = vadd.f32 %v626, %v748
      %v794 = vadd.f32 %v665, %v787
      %s795 = scalar_lea.vmem %s1, 12
      %v796 = vld [vmem:[%s795] sm:$0xf]
      %v797 = vld [vmem:[%s410] sm:$0x3f]
      %v799 = vcombine.high %v797, %v797
      %v801 = vunpack.c.l.s4 1983009808
      %v802 = vunpack.c.0.s8 %v801
      %v803 = vlaneseq
      %v804 = vshrl.u32 %v803, 7
      %v805 = vsub.s32 %v802, %v804
      %v806 = vrot.slane %v797, %v805
      %v808 = vunpack.c.l.s4 1983009808
      %v809 = vunpack.c.0.s8 %v808
      %v810 = vlaneseq
      %v811 = vshrl.u32 %v810, 7
      %v812 = vsub.s32 %v809, %v811
      %v813 = vrot.slane %v799, %v812
      %v814 = vcombine.high %v806, %v806
      %815 = vrot.lane.b32.xlu0 %v806, 110
      %v816 = vpop.permute.xlu0 %815
      %817 = vrot.lane.b32.xlu0 %v814, 110
      %v818 = vpop.permute.xlu0 %817
      %819 = vrot.lane.b32.xlu0 %v813, 110
      %v820 = vpop.permute.xlu0 %819
      %vm821 = vcmask 900096
      %v822 = vsel %vm821, %v816, %v818
      %v823 = vsel %vm821, %v818, %v820
      %v825 = vsel %vm482, %v796, 0
      %v828 = vsel %vm486, %v822, 0
      %v831 = vsel %vm486, %v823, 0
      %v834 = vsel %vm486, %v820, 0
      %836 = vmatprep.subr.bf16.mxu0 %v831
      %837 = vmatpush1.bf16.msra.mxu0 %v828
      %838 = vmatprep.subr.bf16.mxu0 0
      %839 = vmatpush1.bf16.msra.mxu0 0
      %840 = vmatprep.subr.bf16.mxu0 0
      %841 = vmatpush1.bf16.msra.mxu0 0
      %842 = vmatprep.subr.bf16.mxu0 0
      %843 = vmatpush1.bf16.msra.mxu0 0
      %844 = vmatprep.subr.bf16.mxu0 0
      %845 = vmatpush1.bf16.msra.mxu0 0
      %846 = vmatprep.subr.bf16.mxu0 0
      %847 = vmatpush1.bf16.msra.mxu0 0
      %848 = vmatprep.subr.bf16.mxu0 0
      %849 = vmatpush1.bf16.msra.mxu0 0
      %850 = vmatprep.subr.bf16.mxu0 0
      %851 = vmatpush1.bf16.msra.mxu0 0
      %852 = vmatprep.subr.bf16.mxu0 0
      %853 = vmatpush1.bf16.msra.mxu0 0
      %854 = vmatprep.subr.bf16.mxu0 0
      %855 = vmatpush1.bf16.msra.mxu0 0
      %856 = vmatprep.subr.bf16.mxu0 0
      %857 = vmatpush1.bf16.msra.mxu0 0
      %858 = vmatprep.subr.bf16.mxu0 0
      %859 = vmatpush1.bf16.msra.mxu0 0
      %860 = vmatprep.subr.bf16.mxu0 0
      %861 = vmatpush1.bf16.msra.mxu0 0
      %862 = vmatprep.subr.bf16.mxu0 0
      %863 = vmatpush1.bf16.msra.mxu0 0
      %864 = vmatprep.subr.bf16.mxu0 0
      %865 = vmatpush1.bf16.msra.mxu0 0
      %866 = vmatprep.subr.bf16.mxu0 0
      %867 = vmatpush1.bf16.msra.mxu0 0
      %868 = vmatprep.mubr.bf16.mxu0 0
      %869 = vmatmul.mubr.bf16.gmra.mrb[0].mxu0 %v825
      %v870 = vpop.f32.mrb[0].mxu0
      %v871 = vadd.f32 0.0, %v870
      %v872 = vpop.f32.mrb[0].mxu0
      %v873 = vadd.f32 0.0, %v872
      %v874 = vpop.f32.mrb[0].mxu0
      %v875 = vpop.f32.mrb[0].mxu0
      %876 = vdwg.mxu0
      %877 = vmatprep.subr.bf16.mxu0 0
      %878 = vmatpush1.bf16.msra.mxu0 %v834
      %879 = vmatprep.subr.bf16.mxu0 0
      %880 = vmatpush1.bf16.msra.mxu0 0
      %881 = vmatprep.subr.bf16.mxu0 0
      %882 = vmatpush1.bf16.msra.mxu0 0
      %883 = vmatprep.subr.bf16.mxu0 0
      %884 = vmatpush1.bf16.msra.mxu0 0
      %885 = vmatprep.subr.bf16.mxu0 0
      %886 = vmatpush1.bf16.msra.mxu0 0
      %887 = vmatprep.subr.bf16.mxu0 0
      %888 = vmatpush1.bf16.msra.mxu0 0
      %889 = vmatprep.subr.bf16.mxu0 0
      %890 = vmatpush1.bf16.msra.mxu0 0
      %891 = vmatprep.subr.bf16.mxu0 0
      %892 = vmatpush1.bf16.msra.mxu0 0
      %893 = vmatprep.subr.bf16.mxu0 0
      %894 = vmatpush1.bf16.msra.mxu0 0
      %895 = vmatprep.subr.bf16.mxu0 0
      %896 = vmatpush1.bf16.msra.mxu0 0
      %897 = vmatprep.subr.bf16.mxu0 0
      %898 = vmatpush1.bf16.msra.mxu0 0
      %899 = vmatprep.subr.bf16.mxu0 0
      %900 = vmatpush1.bf16.msra.mxu0 0
      %901 = vmatprep.subr.bf16.mxu0 0
      %902 = vmatpush1.bf16.msra.mxu0 0
      %903 = vmatprep.subr.bf16.mxu0 0
      %904 = vmatpush1.bf16.msra.mxu0 0
      %905 = vmatprep.subr.bf16.mxu0 0
      %906 = vmatpush1.bf16.msra.mxu0 0
      %907 = vmatprep.subr.bf16.mxu0 0
      %908 = vmatpush1.bf16.msra.mxu0 0
      %909 = vmatprep.mubr.bf16.mxu0 0
      %910 = vmatmul.mubr.bf16.gmra.mrb[0].mxu0 %v825
      %v911 = vpop.f32.mrb[0].mxu0
      %v912 = vadd.f32 0.0, %v911
      %v913 = vpop.f32.mrb[0].mxu0
      %v914 = vpop.f32.mrb[0].mxu0
      %v915 = vpop.f32.mrb[0].mxu0
      %916 = vdwg.mxu0
      %v917 = vadd.f32 %v792, %v871
      %v918 = vadd.f32 %v793, %v873
      %v919 = vadd.f32 %v794, %v912
      %s920 = scalar_lea.vmem %s1, 16
      %v921 = vld [vmem:[%s920] sm:$0xf]
      %v922 = vld [vmem:[%s410] sm:$0x3f]
      %v924 = vcombine.high %v922, %v922
      %v926 = vunpack.c.l.s4 1983009808
      %v927 = vunpack.c.0.s8 %v926
      %v928 = vlaneseq
      %v929 = vshrl.u32 %v928, 7
      %v930 = vsub.s32 %v927, %v929
      %v931 = vrot.slane %v922, %v930
      %v933 = vunpack.c.l.s4 1983009808
      %v934 = vunpack.c.0.s8 %v933
      %v935 = vlaneseq
      %v936 = vshrl.u32 %v935, 7
      %v937 = vsub.s32 %v934, %v936
      %v938 = vrot.slane %v924, %v937
      %v939 = vcombine.high %v931, %v931
      %940 = vrot.lane.b32.xlu0 %v931, 109
      %v941 = vpop.permute.xlu0 %940
      %942 = vrot.lane.b32.xlu0 %v939, 109
      %v943 = vpop.permute.xlu0 %942
      %944 = vrot.lane.b32.xlu0 %v938, 109
      %v945 = vpop.permute.xlu0 %944
      %vm946 = vcmask 891904
      %v947 = vsel %vm946, %v941, %v943
      %v948 = vsel %vm946, %v943, %v945
      %v950 = vsel %vm482, %v921, 0
      %v953 = vsel %vm486, %v947, 0
      %v956 = vsel %vm486, %v948, 0
      %v959 = vsel %vm486, %v945, 0
      %961 = vmatprep.subr.bf16.mxu0 %v956
      %962 = vmatpush1.bf16.msra.mxu0 %v953
      %963 = vmatprep.subr.bf16.mxu0 0
      %964 = vmatpush1.bf16.msra.mxu0 0
      %965 = vmatprep.subr.bf16.mxu0 0
      %966 = vmatpush1.bf16.msra.mxu0 0
      %967 = vmatprep.subr.bf16.mxu0 0
      %968 = vmatpush1.bf16.msra.mxu0 0
      %969 = vmatprep.subr.bf16.mxu0 0
      %970 = vmatpush1.bf16.msra.mxu0 0
      %971 = vmatprep.subr.bf16.mxu0 0
      %972 = vmatpush1.bf16.msra.mxu0 0
      %973 = vmatprep.subr.bf16.mxu0 0
      %974 = vmatpush1.bf16.msra.mxu0 0
      %975 = vmatprep.subr.bf16.mxu0 0
      %976 = vmatpush1.bf16.msra.mxu0 0
      %977 = vmatprep.subr.bf16.mxu0 0
      %978 = vmatpush1.bf16.msra.mxu0 0
      %979 = vmatprep.subr.bf16.mxu0 0
      %980 = vmatpush1.bf16.msra.mxu0 0
      %981 = vmatprep.subr.bf16.mxu0 0
      %982 = vmatpush1.bf16.msra.mxu0 0
      %983 = vmatprep.subr.bf16.mxu0 0
      %984 = vmatpush1.bf16.msra.mxu0 0
      %985 = vmatprep.subr.bf16.mxu0 0
      %986 = vmatpush1.bf16.msra.mxu0 0
      %987 = vmatprep.subr.bf16.mxu0 0
      %988 = vmatpush1.bf16.msra.mxu0 0
      %989 = vmatprep.subr.bf16.mxu0 0
      %990 = vmatpush1.bf16.msra.mxu0 0
      %991 = vmatprep.subr.bf16.mxu0 0
      %992 = vmatpush1.bf16.msra.mxu0 0
      %993 = vmatprep.mubr.bf16.mxu0 0
      %994 = vmatmul.mubr.bf16.gmra.mrb[0].mxu0 %v950
      %v995 = vpop.f32.mrb[0].mxu0
      %v996 = vadd.f32 0.0, %v995
      %v997 = vpop.f32.mrb[0].mxu0
      %v998 = vadd.f32 0.0, %v997
      %v999 = vpop.f32.mrb[0].mxu0
      %v1000 = vpop.f32.mrb[0].mxu0
      %1001 = vdwg.mxu0
      %1002 = vmatprep.subr.bf16.mxu0 0
      %1003 = vmatpush1.bf16.msra.mxu0 %v959
      %1004 = vmatprep.subr.bf16.mxu0 0
      %1005 = vmatpush1.bf16.msra.mxu0 0
      %1006 = vmatprep.subr.bf16.mxu0 0
      %1007 = vmatpush1.bf16.msra.mxu0 0
      %1008 = vmatprep.subr.bf16.mxu0 0
      %1009 = vmatpush1.bf16.msra.mxu0 0
      %1010 = vmatprep.subr.bf16.mxu0 0
      %1011 = vmatpush1.bf16.msra.mxu0 0
      %1012 = vmatprep.subr.bf16.mxu0 0
      %1013 = vmatpush1.bf16.msra.mxu0 0
      %1014 = vmatprep.subr.bf16.mxu0 0
      %1015 = vmatpush1.bf16.msra.mxu0 0
      %1016 = vmatprep.subr.bf16.mxu0 0
      %1017 = vmatpush1.bf16.msra.mxu0 0
      %1018 = vmatprep.subr.bf16.mxu0 0
      %1019 = vmatpush1.bf16.msra.mxu0 0
      %1020 = vmatprep.subr.bf16.mxu0 0
      %1021 = vmatpush1.bf16.msra.mxu0 0
      %1022 = vmatprep.subr.bf16.mxu0 0
      %1023 = vmatpush1.bf16.msra.mxu0 0
      %1024 = vmatprep.subr.bf16.mxu0 0
      %1025 = vmatpush1.bf16.msra.mxu0 0
      %1026 = vmatprep.subr.bf16.mxu0 0
      %1027 = vmatpush1.bf16.msra.mxu0 0
      %1028 = vmatprep.subr.bf16.mxu0 0
      %1029 = vmatpush1.bf16.msra.mxu0 0
      %1030 = vmatprep.subr.bf16.mxu0 0
      %1031 = vmatpush1.bf16.msra.mxu0 0
      %1032 = vmatprep.subr.bf16.mxu0 0
      %1033 = vmatpush1.bf16.msra.mxu0 0
      %1034 = vmatprep.mubr.bf16.mxu0 0
      %1035 = vmatmul.mubr.bf16.gmra.mrb[0].mxu0 %v950
      %v1036 = vpop.f32.mrb[0].mxu0
      %v1037 = vadd.f32 0.0, %v1036
      %v1038 = vpop.f32.mrb[0].mxu0
      %v1039 = vpop.f32.mrb[0].mxu0
      %v1040 = vpop.f32.mrb[0].mxu0
      %1041 = vdwg.mxu0
      %v1042 = vadd.f32 %v917, %v996
      %v1043 = vadd.f32 %v918, %v998
      %v1044 = vadd.f32 %v919, %v1037
      %s1045 = scalar_lea.vmem %s1, 20
      %v1046 = vld [vmem:[%s1045] sm:$0xf]
      %v1047 = vld [vmem:[%s410] sm:$0x3f]
      %v1049 = vcombine.high %v1047, %v1047
      %v1051 = vunpack.c.l.s4 1983009808
      %v1052 = vunpack.c.0.s8 %v1051
      %v1053 = vlaneseq
      %v1054 = vshrl.u32 %v1053, 7
      %v1055 = vsub.s32 %v1052, %v1054
      %v1056 = vrot.slane %v1047, %v1055
      %v1058 = vunpack.c.l.s4 1983009808
      %v1059 = vunpack.c.0.s8 %v1058
      %v1060 = vlaneseq
      %v1061 = vshrl.u32 %v1060, 7
      %v1062 = vsub.s32 %v1059, %v1061
      %v1063 = vrot.slane %v1049, %v1062
      %v1064 = vcombine.high %v1056, %v1056
      %1065 = vrot.lane.b32.xlu0 %v1056, 108
      %v1066 = vpop.permute.xlu0 %1065
      %1067 = vrot.lane.b32.xlu0 %v1064, 108
      %v1068 = vpop.permute.xlu0 %1067
      %1069 = vrot.lane.b32.xlu0 %v1063, 108
      %v1070 = vpop.permute.xlu0 %1069
      %vm1071 = vcmask 883712
      %v1072 = vsel %vm1071, %v1066, %v1068
      %v1073 = vsel %vm1071, %v1068, %v1070
      %v1075 = vsel %vm482, %v1046, 0
      %v1078 = vsel %vm486, %v1072, 0
      %v1081 = vsel %vm486, %v1073, 0
      %v1084 = vsel %vm486, %v1070, 0
      %1086 = vmatprep.subr.bf16.mxu0 %v1081
      %1087 = vmatpush1.bf16.msra.mxu0 %v1078
      %1088 = vmatprep.subr.bf16.mxu0 0
      %1089 = vmatpush1.bf16.msra.mxu0 0
      %1090 = vmatprep.subr.bf16.mxu0 0
      %1091 = vmatpush1.bf16.msra.mxu0 0
      %1092 = vmatprep.subr.bf16.mxu0 0
      %1093 = vmatpush1.bf16.msra.mxu0 0
      %1094 = vmatprep.subr.bf16.mxu0 0
      %1095 = vmatpush1.bf16.msra.mxu0 0
      %1096 = vmatprep.subr.bf16.mxu0 0
      %1097 = vmatpush1.bf16.msra.mxu0 0
      %1098 = vmatprep.subr.bf16.mxu0 0
      %1099 = vmatpush1.bf16.msra.mxu0 0
      %1100 = vmatprep.subr.bf16.mxu0 0
      %1101 = vmatpush1.bf16.msra.mxu0 0
      %1102 = vmatprep.subr.bf16.mxu0 0
      %1103 = vmatpush1.bf16.msra.mxu0 0
      %1104 = vmatprep.subr.bf16.mxu0 0
      %1105 = vmatpush1.bf16.msra.mxu0 0
      %1106 = vmatprep.subr.bf16.mxu0 0
      %1107 = vmatpush1.bf16.msra.mxu0 0
      %1108 = vmatprep.subr.bf16.mxu0 0
      %1109 = vmatpush1.bf16.msra.mxu0 0
      %1110 = vmatprep.subr.bf16.mxu0 0
      %1111 = vmatpush1.bf16.msra.mxu0 0
      %1112 = vmatprep.subr.bf16.mxu0 0
      %1113 = vmatpush1.bf16.msra.mxu0 0
      %1114 = vmatprep.subr.bf16.mxu0 0
      %1115 = vmatpush1.bf16.msra.mxu0 0
      %1116 = vmatprep.subr.bf16.mxu0 0
      %1117 = vmatpush1.bf16.msra.mxu0 0
      %1118 = vmatprep.mubr.bf16.mxu0 0
      %1119 = vmatmul.mubr.bf16.gmra.mrb[0].mxu0 %v1075
      %v1120 = vpop.f32.mrb[0].mxu0
      %v1121 = vadd.f32 0.0, %v1120
      %v1122 = vpop.f32.mrb[0].mxu0
      %v1123 = vadd.f32 0.0, %v1122
      %v1124 = vpop.f32.mrb[0].mxu0
      %v1125 = vpop.f32.mrb[0].mxu0
      %1126 = vdwg.mxu0
      %1127 = vmatprep.subr.bf16.mxu0 0
      %1128 = vmatpush1.bf16.msra.mxu0 %v1084
      %1129 = vmatprep.subr.bf16.mxu0 0
      %1130 = vmatpush1.bf16.msra.mxu0 0
      %1131 = vmatprep.subr.bf16.mxu0 0
      %1132 = vmatpush1.bf16.msra.mxu0 0
      %1133 = vmatprep.subr.bf16.mxu0 0
      %1134 = vmatpush1.bf16.msra.mxu0 0
      %1135 = vmatprep.subr.bf16.mxu0 0
      %1136 = vmatpush1.bf16.msra.mxu0 0
      %1137 = vmatprep.subr.bf16.mxu0 0
      %1138 = vmatpush1.bf16.msra.mxu0 0
      %1139 = vmatprep.subr.bf16.mxu0 0
      %1140 = vmatpush1.bf16.msra.mxu0 0
      %1141 = vmatprep.subr.bf16.mxu0 0
      %1142 = vmatpush1.bf16.msra.mxu0 0
      %1143 = vmatprep.subr.bf16.mxu0 0
      %1144 = vmatpush1.bf16.msra.mxu0 0
      %1145 = vmatprep.subr.bf16.mxu0 0
      %1146 = vmatpush1.bf16.msra.mxu0 0
      %1147 = vmatprep.subr.bf16.mxu0 0
      %1148 = vmatpush1.bf16.msra.mxu0 0
      %1149 = vmatprep.subr.bf16.mxu0 0
      %1150 = vmatpush1.bf16.msra.mxu0 0
      %1151 = vmatprep.subr.bf16.mxu0 0
      %1152 = vmatpush1.bf16.msra.mxu0 0
      %1153 = vmatprep.subr.bf16.mxu0 0
      %1154 = vmatpush1.bf16.msra.mxu0 0
      %1155 = vmatprep.subr.bf16.mxu0 0
      %1156 = vmatpush1.bf16.msra.mxu0 0
      %1157 = vmatprep.subr.bf16.mxu0 0
      %1158 = vmatpush1.bf16.msra.mxu0 0
      %1159 = vmatprep.mubr.bf16.mxu0 0
      %1160 = vmatmul.mubr.bf16.gmra.mrb[0].mxu0 %v1075
      %v1161 = vpop.f32.mrb[0].mxu0
      %v1162 = vadd.f32 0.0, %v1161
      %v1163 = vpop.f32.mrb[0].mxu0
      %v1164 = vpop.f32.mrb[0].mxu0
      %v1165 = vpop.f32.mrb[0].mxu0
      %1166 = vdwg.mxu0
      %v1167 = vadd.f32 %v1042, %v1121
      %v1168 = vadd.f32 %v1043, %v1123
      %v1169 = vadd.f32 %v1044, %v1162
      %s1170 = scalar_lea.vmem %s1, 24
      %v1171 = vld [vmem:[%s1170] sm:$0xf]
      %v1172 = vld [vmem:[%s410] sm:$0xff]
      %v1174 = vcombine.high %v1172, %v1172
      %v1176 = vunpack.c.l.s4 1983009808
      %v1177 = vunpack.c.0.s8 %v1176
      %v1178 = vlaneseq
      %v1179 = vshrl.u32 %v1178, 7
      %v1180 = vsub.s32 %v1177, %v1179
      %v1181 = vrot.slane %v1172, %v1180
      %v1183 = vunpack.c.l.s4 1983009808
      %v1184 = vunpack.c.0.s8 %v1183
      %v1185 = vlaneseq
      %v1186 = vshrl.u32 %v1185, 7
      %v1187 = vsub.s32 %v1184, %v1186
      %v1188 = vrot.slane %v1174, %v1187
      %v1189 = vcombine.high %v1181, %v1181
      %v1190 = vcombine.high %v1188, %v1188
      %1191 = vrot.lane.b32.xlu0 %v1181, 92
      %v1192 = vpop.permute.xlu0 %1191
      %1193 = vrot.lane.b32.xlu0 %v1189, 92
      %v1194 = vpop.permute.xlu0 %1193
      %1195 = vrot.lane.b32.xlu0 %v1188, 92
      %v1196 = vpop.permute.xlu0 %1195
      %1197 = vrot.lane.b32.xlu0 %v1190, 92
      %v1198 = vpop.permute.xlu0 %1197
      %vm1199 = vcmask 752640
      %v1200 = vsel %vm1199, %v1192, %v1194
      %v1201 = vsel %vm1199, %v1194, %v1196
      %v1202 = vsel %vm1199, %v1196, %v1198
      %v1204 = vsel %vm482, %v1171, 0
      %v1207 = vsel %vm486, %v1200, 0
      %v1210 = vsel %vm486, %v1201, 0
      %v1213 = vsel %vm486, %v1202, 0
      %1215 = vmatprep.subr.bf16.mxu0 %v1210
      %1216 = vmatpush1.bf16.msra.mxu0 %v1207
      %1217 = vmatprep.subr.bf16.mxu0 0
      %1218 = vmatpush1.bf16.msra.mxu0 0
      %1219 = vmatprep.subr.bf16.mxu0 0
      %1220 = vmatpush1.bf16.msra.mxu0 0
      %1221 = vmatprep.subr.bf16.mxu0 0
      %1222 = vmatpush1.bf16.msra.mxu0 0
      %1223 = vmatprep.subr.bf16.mxu0 0
      %1224 = vmatpush1.bf16.msra.mxu0 0
      %1225 = vmatprep.subr.bf16.mxu0 0
      %1226 = vmatpush1.bf16.msra.mxu0 0
      %1227 = vmatprep.subr.bf16.mxu0 0
      %1228 = vmatpush1.bf16.msra.mxu0 0
      %1229 = vmatprep.subr.bf16.mxu0 0
      %1230 = vmatpush1.bf16.msra.mxu0 0
      %1231 = vmatprep.subr.bf16.mxu0 0
      %1232 = vmatpush1.bf16.msra.mxu0 0
      %1233 = vmatprep.subr.bf16.mxu0 0
      %1234 = vmatpush1.bf16.msra.mxu0 0
      %1235 = vmatprep.subr.bf16.mxu0 0
      %1236 = vmatpush1.bf16.msra.mxu0 0
      %1237 = vmatprep.subr.bf16.mxu0 0
      %1238 = vmatpush1.bf16.msra.mxu0 0
      %1239 = vmatprep.subr.bf16.mxu0 0
      %1240 = vmatpush1.bf16.msra.mxu0 0
      %1241 = vmatprep.subr.bf16.mxu0 0
      %1242 = vmatpush1.bf16.msra.mxu0 0
      %1243 = vmatprep.subr.bf16.mxu0 0
      %1244 = vmatpush1.bf16.msra.mxu0 0
      %1245 = vmatprep.subr.bf16.mxu0 0
      %1246 = vmatpush1.bf16.msra.mxu0 0
      %1247 = vmatprep.mubr.bf16.mxu0 0
      %1248 = vmatmul.mubr.bf16.gmra.mrb[0].mxu0 %v1204
      %v1249 = vpop.f32.mrb[0].mxu0
      %v1250 = vadd.f32 0.0, %v1249
      %v1251 = vpop.f32.mrb[0].mxu0
      %v1252 = vadd.f32 0.0, %v1251
      %v1253 = vpop.f32.mrb[0].mxu0
      %v1254 = vpop.f32.mrb[0].mxu0
      %1255 = vdwg.mxu0
      %1256 = vmatprep.subr.bf16.mxu0 0
      %1257 = vmatpush1.bf16.msra.mxu0 %v1213
      %1258 = vmatprep.subr.bf16.mxu0 0
      %1259 = vmatpush1.bf16.msra.mxu0 0
      %1260 = vmatprep.subr.bf16.mxu0 0
      %1261 = vmatpush1.bf16.msra.mxu0 0
      %1262 = vmatprep.subr.bf16.mxu0 0
      %1263 = vmatpush1.bf16.msra.mxu0 0
      %1264 = vmatprep.subr.bf16.mxu0 0
      %1265 = vmatpush1.bf16.msra.mxu0 0
      %1266 = vmatprep.subr.bf16.mxu0 0
      %1267 = vmatpush1.bf16.msra.mxu0 0
      %1268 = vmatprep.subr.bf16.mxu0 0
      %1269 = vmatpush1.bf16.msra.mxu0 0
      %1270 = vmatprep.subr.bf16.mxu0 0
      %1271 = vmatpush1.bf16.msra.mxu0 0
      %1272 = vmatprep.subr.bf16.mxu0 0
      %1273 = vmatpush1.bf16.msra.mxu0 0
      %1274 = vmatprep.subr.bf16.mxu0 0
      %1275 = vmatpush1.bf16.msra.mxu0 0
      %1276 = vmatprep.subr.bf16.mxu0 0
      %1277 = vmatpush1.bf16.msra.mxu0 0
      %1278 = vmatprep.subr.bf16.mxu0 0
      %1279 = vmatpush1.bf16.msra.mxu0 0
      %1280 = vmatprep.subr.bf16.mxu0 0
      %1281 = vmatpush1.bf16.msra.mxu0 0
      %1282 = vmatprep.subr.bf16.mxu0 0
      %1283 = vmatpush1.bf16.msra.mxu0 0
      %1284 = vmatprep.subr.bf16.mxu0 0
      %1285 = vmatpush1.bf16.msra.mxu0 0
      %1286 = vmatprep.subr.bf16.mxu0 0
      %1287 = vmatpush1.bf16.msra.mxu0 0
      %1288 = vmatprep.mubr.bf16.mxu0 0
      %1289 = vmatmul.mubr.bf16.gmra.mrb[0].mxu0 %v1204
      %v1290 = vpop.f32.mrb[0].mxu0
      %v1291 = vadd.f32 0.0, %v1290
      %v1292 = vpop.f32.mrb[0].mxu0
      %v1293 = vpop.f32.mrb[0].mxu0
      %v1294 = vpop.f32.mrb[0].mxu0
      %1295 = vdwg.mxu0
      %v1296 = vadd.f32 %v1167, %v1250
      %v1297 = vadd.f32 %v1168, %v1252
      %v1298 = vadd.f32 %v1169, %v1291
      %s1299 = scalar_lea.vmem %s1, 28
      %v1300 = vld [vmem:[%s1299] sm:$0xf]
      %v1301 = vld [vmem:[%s410] sm:$0xff]
      %v1303 = vcombine.high %v1301, %v1301
      %v1305 = vunpack.c.l.s4 1983009808
      %v1306 = vunpack.c.0.s8 %v1305
      %v1307 = vlaneseq
      %v1308 = vshrl.u32 %v1307, 7
      %v1309 = vsub.s32 %v1306, %v1308
      %v1310 = vrot.slane %v1301, %v1309
      %v1312 = vunpack.c.l.s4 1983009808
      %v1313 = vunpack.c.0.s8 %v1312
      %v1314 = vlaneseq
      %v1315 = vshrl.u32 %v1314, 7
      %v1316 = vsub.s32 %v1313, %v1315
      %v1317 = vrot.slane %v1303, %v1316
      %v1318 = vcombine.high %v1310, %v1310
      %v1319 = vcombine.high %v1317, %v1317
      %1320 = vrot.lane.b32.xlu0 %v1310, 91
      %v1321 = vpop.permute.xlu0 %1320
      %1322 = vrot.lane.b32.xlu0 %v1318, 91
      %v1323 = vpop.permute.xlu0 %1322
      %1324 = vrot.lane.b32.xlu0 %v1317, 91
      %v1325 = vpop.permute.xlu0 %1324
      %1326 = vrot.lane.b32.xlu0 %v1319, 91
      %v1327 = vpop.permute.xlu0 %1326
      %vm1328 = vcmask 744448
      %v1329 = vsel %vm1328, %v1321, %v1323
      %v1330 = vsel %vm1328, %v1323, %v1325
      %v1331 = vsel %vm1328, %v1325, %v1327
      %v1333 = vsel %vm482, %v1300, 0
      %v1336 = vsel %vm486, %v1329, 0
      %v1339 = vsel %vm486, %v1330, 0
      %v1342 = vsel %vm486, %v1331, 0
      %1344 = vmatprep.subr.bf16.mxu0 %v1339
      %1345 = vmatpush1.bf16.msra.mxu0 %v1336
      %1346 = vmatprep.subr.bf16.mxu0 0
      %1347 = vmatpush1.bf16.msra.mxu0 0
      %1348 = vmatprep.subr.bf16.mxu0 0
      %1349 = vmatpush1.bf16.msra.mxu0 0
      %1350 = vmatprep.subr.bf16.mxu0 0
      %1351 = vmatpush1.bf16.msra.mxu0 0
      %1352 = vmatprep.subr.bf16.mxu0 0
      %1353 = vmatpush1.bf16.msra.mxu0 0
      %1354 = vmatprep.subr.bf16.mxu0 0
      %1355 = vmatpush1.bf16.msra.mxu0 0
      %1356 = vmatprep.subr.bf16.mxu0 0
      %1357 = vmatpush1.bf16.msra.mxu0 0
      %1358 = vmatprep.subr.bf16.mxu0 0
      %1359 = vmatpush1.bf16.msra.mxu0 0
      %1360 = vmatprep.subr.bf16.mxu0 0
      %1361 = vmatpush1.bf16.msra.mxu0 0
      %1362 = vmatprep.subr.bf16.mxu0 0
      %1363 = vmatpush1.bf16.msra.mxu0 0
      %1364 = vmatprep.subr.bf16.mxu0 0
      %1365 = vmatpush1.bf16.msra.mxu0 0
      %1366 = vmatprep.subr.bf16.mxu0 0
      %1367 = vmatpush1.bf16.msra.mxu0 0
      %1368 = vmatprep.subr.bf16.mxu0 0
      %1369 = vmatpush1.bf16.msra.mxu0 0
      %1370 = vmatprep.subr.bf16.mxu0 0
      %1371 = vmatpush1.bf16.msra.mxu0 0
      %1372 = vmatprep.subr.bf16.mxu0 0
      %1373 = vmatpush1.bf16.msra.mxu0 0
      %1374 = vmatprep.subr.bf16.mxu0 0
      %1375 = vmatpush1.bf16.msra.mxu0 0
      %1376 = vmatprep.mubr.bf16.mxu0 0
      %1377 = vmatmul.mubr.bf16.gmra.mrb[0].mxu0 %v1333
      %v1378 = vpop.f32.mrb[0].mxu0
      %v1379 = vadd.f32 0.0, %v1378
      %v1380 = vpop.f32.mrb[0].mxu0
      %v1381 = vadd.f32 0.0, %v1380
      %v1382 = vpop.f32.mrb[0].mxu0
      %v1383 = vpop.f32.mrb[0].mxu0
      %1384 = vdwg.mxu0
      %1385 = vmatprep.subr.bf16.mxu0 0
      %1386 = vmatpush1.bf16.msra.mxu0 %v1342
      %1387 = vmatprep.subr.bf16.mxu0 0
      %1388 = vmatpush1.bf16.msra.mxu0 0
      %1389 = vmatprep.subr.bf16.mxu0 0
      %1390 = vmatpush1.bf16.msra.mxu0 0
      %1391 = vmatprep.subr.bf16.mxu0 0
      %1392 = vmatpush1.bf16.msra.mxu0 0
      %1393 = vmatprep.subr.bf16.mxu0 0
      %1394 = vmatpush1.bf16.msra.mxu0 0
      %1395 = vmatprep.subr.bf16.mxu0 0
      %1396 = vmatpush1.bf16.msra.mxu0 0
      %1397 = vmatprep.subr.bf16.mxu0 0
      %1398 = vmatpush1.bf16.msra.mxu0 0
      %1399 = vmatprep.subr.bf16.mxu0 0
      %1400 = vmatpush1.bf16.msra.mxu0 0
      %1401 = vmatprep.subr.bf16.mxu0 0
      %1402 = vmatpush1.bf16.msra.mxu0 0
      %1403 = vmatprep.subr.bf16.mxu0 0
      %1404 = vmatpush1.bf16.msra.mxu0 0
      %1405 = vmatprep.subr.bf16.mxu0 0
      %1406 = vmatpush1.bf16.msra.mxu0 0
      %1407 = vmatprep.subr.bf16.mxu0 0
      %1408 = vmatpush1.bf16.msra.mxu0 0
      %1409 = vmatprep.subr.bf16.mxu0 0
      %1410 = vmatpush1.bf16.msra.mxu0 0
      %1411 = vmatprep.subr.bf16.mxu0 0
      %1412 = vmatpush1.bf16.msra.mxu0 0
      %1413 = vmatprep.subr.bf16.mxu0 0
      %1414 = vmatpush1.bf16.msra.mxu0 0
      %1415 = vmatprep.subr.bf16.mxu0 0
      %1416 = vmatpush1.bf16.msra.mxu0 0
      %1417 = vmatprep.mubr.bf16.mxu0 0
      %1418 = vmatmul.mubr.bf16.gmra.mrb[0].mxu0 %v1333
      %v1419 = vpop.f32.mrb[0].mxu0
      %v1420 = vadd.f32 0.0, %v1419
      %v1421 = vpop.f32.mrb[0].mxu0
      %v1422 = vpop.f32.mrb[0].mxu0
      %v1423 = vpop.f32.mrb[0].mxu0
      %1424 = vdwg.mxu0
      %v1425 = vadd.f32 %v1296, %v1379
      %v1426 = vadd.f32 %v1297, %v1381
      %v1427 = vadd.f32 %v1298, %v1420
      %s1428 = scalar_lea.vmem %s1, 32
      %v1429 = vld [vmem:[%s1428] sm:$0xf]
      %v1430 = vld [vmem:[%s410] sm:$0xff]
      %v1432 = vcombine.high %v1430, %v1430
      %v1434 = vunpack.c.l.s4 1983009808
      %v1435 = vunpack.c.0.s8 %v1434
      %v1436 = vlaneseq
      %v1437 = vshrl.u32 %v1436, 7
      %v1438 = vsub.s32 %v1435, %v1437
      %v1439 = vrot.slane %v1430, %v1438
      %v1441 = vunpack.c.l.s4 1983009808
      %v1442 = vunpack.c.0.s8 %v1441
      %v1443 = vlaneseq
      %v1444 = vshrl.u32 %v1443, 7
      %v1445 = vsub.s32 %v1442, %v1444
      %v1446 = vrot.slane %v1432, %v1445
      %v1447 = vcombine.high %v1439, %v1439
      %v1448 = vcombine.high %v1446, %v1446
      %1449 = vrot.lane.b32.xlu0 %v1439, 90
      %v1450 = vpop.permute.xlu0 %1449
      %1451 = vrot.lane.b32.xlu0 %v1447, 90
      %v1452 = vpop.permute.xlu0 %1451
      %1453 = vrot.lane.b32.xlu0 %v1446, 90
      %v1454 = vpop.permute.xlu0 %1453
      %1455 = vrot.lane.b32.xlu0 %v1448, 90
      %v1456 = vpop.permute.xlu0 %1455
      %vm1457 = vcmask 736256
      %v1458 = vsel %vm1457, %v1450, %v1452
      %v1459 = vsel %vm1457, %v1452, %v1454
      %v1460 = vsel %vm1457, %v1454, %v1456
      %v1462 = vsel %vm482, %v1429, 0
      %v1465 = vsel %vm486, %v1458, 0
      %v1468 = vsel %vm486, %v1459, 0
      %v1471 = vsel %vm486, %v1460, 0
      %1473 = vmatprep.subr.bf16.mxu0 %v1468
      %1474 = vmatpush1.bf16.msra.mxu0 %v1465
      %1475 = vmatprep.subr.bf16.mxu0 0
      %1476 = vmatpush1.bf16.msra.mxu0 0
      %1477 = vmatprep.subr.bf16.mxu0 0
      %1478 = vmatpush1.bf16.msra.mxu0 0
      %1479 = vmatprep.subr.bf16.mxu0 0
      %1480 = vmatpush1.bf16.msra.mxu0 0
      %1481 = vmatprep.subr.bf16.mxu0 0
      %1482 = vmatpush1.bf16.msra.mxu0 0
      %1483 = vmatprep.subr.bf16.mxu0 0
      %1484 = vmatpush1.bf16.msra.mxu0 0
      %1485 = vmatprep.subr.bf16.mxu0 0
      %1486 = vmatpush1.bf16.msra.mxu0 0
      %1487 = vmatprep.subr.bf16.mxu0 0
      %1488 = vmatpush1.bf16.msra.mxu0 0
      %1489 = vmatprep.subr.bf16.mxu0 0
      %1490 = vmatpush1.bf16.msra.mxu0 0
      %1491 = vmatprep.subr.bf16.mxu0 0
      %1492 = vmatpush1.bf16.msra.mxu0 0
      %1493 = vmatprep.subr.bf16.mxu0 0
      %1494 = vmatpush1.bf16.msra.mxu0 0
      %1495 = vmatprep.subr.bf16.mxu0 0
      %1496 = vmatpush1.bf16.msra.mxu0 0
      %1497 = vmatprep.subr.bf16.mxu0 0
      %1498 = vmatpush1.bf16.msra.mxu0 0
      %1499 = vmatprep.subr.bf16.mxu0 0
      %1500 = vmatpush1.bf16.msra.mxu0 0
      %1501 = vmatprep.subr.bf16.mxu0 0
      %1502 = vmatpush1.bf16.msra.mxu0 0
      %1503 = vmatprep.subr.bf16.mxu0 0
      %1504 = vmatpush1.bf16.msra.mxu0 0
      %1505 = vmatprep.mubr.bf16.mxu0 0
      %1506 = vmatmul.mubr.bf16.gmra.mrb[0].mxu0 %v1462
      %v1507 = vpop.f32.mrb[0].mxu0
      %v1508 = vadd.f32 0.0, %v1507
      %v1509 = vpop.f32.mrb[0].mxu0
      %v1510 = vadd.f32 0.0, %v1509
      %v1511 = vpop.f32.mrb[0].mxu0
      %v1512 = vpop.f32.mrb[0].mxu0
      %1513 = vdwg.mxu0
      %1514 = vmatprep.subr.bf16.mxu0 0
      %1515 = vmatpush1.bf16.msra.mxu0 %v1471
      %1516 = vmatprep.subr.bf16.mxu0 0
      %1517 = vmatpush1.bf16.msra.mxu0 0
      %1518 = vmatprep.subr.bf16.mxu0 0
      %1519 = vmatpush1.bf16.msra.mxu0 0
      %1520 = vmatprep.subr.bf16.mxu0 0
      %1521 = vmatpush1.bf16.msra.mxu0 0
      %1522 = vmatprep.subr.bf16.mxu0 0
      %1523 = vmatpush1.bf16.msra.mxu0 0
      %1524 = vmatprep.subr.bf16.mxu0 0
      %1525 = vmatpush1.bf16.msra.mxu0 0
      %1526 = vmatprep.subr.bf16.mxu0 0
      %1527 = vmatpush1.bf16.msra.mxu0 0
      %1528 = vmatprep.subr.bf16.mxu0 0
      %1529 = vmatpush1.bf16.msra.mxu0 0
      %1530 = vmatprep.subr.bf16.mxu0 0
      %1531 = vmatpush1.bf16.msra.mxu0 0
      %1532 = vmatprep.subr.bf16.mxu0 0
      %1533 = vmatpush1.bf16.msra.mxu0 0
      %1534 = vmatprep.subr.bf16.mxu0 0
      %1535 = vmatpush1.bf16.msra.mxu0 0
      %1536 = vmatprep.subr.bf16.mxu0 0
      %1537 = vmatpush1.bf16.msra.mxu0 0
      %1538 = vmatprep.subr.bf16.mxu0 0
      %1539 = vmatpush1.bf16.msra.mxu0 0
      %1540 = vmatprep.subr.bf16.mxu0 0
      %1541 = vmatpush1.bf16.msra.mxu0 0
      %1542 = vmatprep.subr.bf16.mxu0 0
      %1543 = vmatpush1.bf16.msra.mxu0 0
      %1544 = vmatprep.subr.bf16.mxu0 0
      %1545 = vmatpush1.bf16.msra.mxu0 0
      %1546 = vmatprep.mubr.bf16.mxu0 0
      %1547 = vmatmul.mubr.bf16.gmra.mrb[0].mxu0 %v1462
      %v1548 = vpop.f32.mrb[0].mxu0
      %v1549 = vadd.f32 0.0, %v1548
      %v1550 = vpop.f32.mrb[0].mxu0
      %v1551 = vpop.f32.mrb[0].mxu0
      %v1552 = vpop.f32.mrb[0].mxu0
      %1553 = vdwg.mxu0
      %v1554 = vadd.f32 %v1425, %v1508
      %v1555 = vadd.f32 %v1426, %v1510
      %v1556 = vadd.f32 %v1427, %v1549
      %v1557 = vpack.c.bf16 %v1554, %v1554
      %v1558 = vpack.c.bf16 %v1555, %v1555
      %v1559 = vpack.c.bf16 %v1556, %v1556
      %v1563 = vunpack.c.l.b16 %v1557
      %v1564 = vunpack.c.l.b16 %v1558
      %v1565 = vunpack.c.l.b16 %v1559
      %v1566 = vpack.c.b16 %v1564, %v1563
      %v1567 = vpack.c.b16 %v1565, %v1565
      %1570 = vst [vmem:[%s417] sm:$0xff] %v1566
      %vm1571 = vcmask 863232
      %1572 = vst.msk [vmem:[%s417 + $0x8] sm:$0xf] %vm1571, %v1567
      %v1573 = vld [vmem:[%s4] sm:$0x7]
      %v1575 = vlaneseq
      %v1576 = vshrl.u32 %v1575, 7
      %v1577 = vsub.s32 0, %v1576
      %v1578 = vrot.slane %v1573, %v1577
      %v1579 = vlaneseq
      %v1580 = vshrl.u32 %v1579, 7
      %v1581 = vsub.s32 1, %v1580
      %v1582 = vrot.slane %v1573, %v1581
      %v1583 = vlaneseq
      %v1584 = vshrl.u32 %v1583, 7
      %v1585 = vsub.s32 2, %v1584
      %v1586 = vrot.slane %v1573, %v1585
      %v1590 = vmul.f32 %v1554, %v1578
      %v1591 = vmul.f32 %v1555, %v1582
      %v1592 = vmul.f32 %v1556, %v1586
      %v1593 = vld [vmem:[%s429] sm:$0xff]
      %v1594 = vadd.f32 %v1590, %v1591
      %vm1595 = vcmask 867328
      %v1596 = vsel %vm1595, %v1592, 0.0
      %v1597 = vadd.f32 %v1594, %v1596
      %1598 = vadd.xlane.f32.xlu0 %v1597
      %v1599 = vpop.xlane.xlu0 %1598
      %v1600 = vadd.f32 %v1593, %v1599
      %vm1601 = vcmask 7168
      %1602 = vst.msk [vmem:[%s429] sm:$0xff] %vm1601, %v1600
      %v1603 = vld [vmem:[%s433] sm:$0xff]
      %v1604 = vmul.f32 %v1554, %v1590
      %v1605 = vmul.f32 %v1555, %v1591
      %v1606 = vmul.f32 %v1556, %v1592
      %v1607 = vadd.f32 %v1604, %v1605
      %v1608 = vsel %vm1595, %v1606, 0.0
      %v1609 = vadd.f32 %v1607, %v1608
      %1610 = vadd.xlane.f32.xlu0 %v1609
      %v1611 = vpop.xlane.xlu0 %1610
      %v1612 = vadd.f32 %v1603, %v1611
      %1613 = vst.msk [vmem:[%s433] sm:$0xff] %vm1601, %v1612
      %v1614 = vld [vmem:[%s2] sm:$0xf]
      %v1615 = vld [vmem:[%s410] sm:$0x3f]
      %v1617 = vcombine.high %v1615, %v1615
      %v1619 = vunpack.c.l.s4 1983009808
      %v1620 = vunpack.c.0.s8 %v1619
      %v1621 = vlaneseq
      %v1622 = vshrl.u32 %v1621, 7
      %v1623 = vsub.s32 %v1620, %v1622
      %v1624 = vrot.slane %v1615, %v1623
      %v1626 = vunpack.c.l.s4 1983009808
      %v1627 = vunpack.c.0.s8 %v1626
      %v1628 = vlaneseq
      %v1629 = vshrl.u32 %v1628, 7
      %v1630 = vsub.s32 %v1627, %v1629
      %v1631 = vrot.slane %v1617, %v1630
      %v1632 = vcombine.high %v1624, %v1624
      %1633 = vrot.lane.b32.xlu0 %v1624, 90
      %v1634 = vpop.permute.xlu0 %1633
      %1635 = vrot.lane.b32.xlu0 %v1632, 90
      %v1636 = vpop.permute.xlu0 %1635
      %1637 = vrot.lane.b32.xlu0 %v1631, 90
      %v1638 = vpop.permute.xlu0 %1637
      %v1639 = vsel %vm1457, %v1634, %v1636
      %v1640 = vsel %vm1457, %v1636, %v1638
      %v1642 = vsel %vm482, %v1614, 0
      %v1645 = vsel %vm486, %v1639, 0
      %v1648 = vsel %vm486, %v1640, 0
      %v1651 = vsel %vm486, %v1638, 0
      %1653 = vmatprep.subr.bf16.mxu0 %v1648
      %1654 = vmatpush1.bf16.msra.mxu0 %v1645
      %1655 = vmatprep.subr.bf16.mxu0 0
      %1656 = vmatpush1.bf16.msra.mxu0 0
      %1657 = vmatprep.subr.bf16.mxu0 0
      %1658 = vmatpush1.bf16.msra.mxu0 0
      %1659 = vmatprep.subr.bf16.mxu0 0
      %1660 = vmatpush1.bf16.msra.mxu0 0
      %1661 = vmatprep.subr.bf16.mxu0 0
      %1662 = vmatpush1.bf16.msra.mxu0 0
      %1663 = vmatprep.subr.bf16.mxu0 0
      %1664 = vmatpush1.bf16.msra.mxu0 0
      %1665 = vmatprep.subr.bf16.mxu0 0
      %1666 = vmatpush1.bf16.msra.mxu0 0
      %1667 = vmatprep.subr.bf16.mxu0 0
      %1668 = vmatpush1.bf16.msra.mxu0 0
      %1669 = vmatprep.subr.bf16.mxu0 0
      %1670 = vmatpush1.bf16.msra.mxu0 0
      %1671 = vmatprep.subr.bf16.mxu0 0
      %1672 = vmatpush1.bf16.msra.mxu0 0
      %1673 = vmatprep.subr.bf16.mxu0 0
      %1674 = vmatpush1.bf16.msra.mxu0 0
      %1675 = vmatprep.subr.bf16.mxu0 0
      %1676 = vmatpush1.bf16.msra.mxu0 0
      %1677 = vmatprep.subr.bf16.mxu0 0
      %1678 = vmatpush1.bf16.msra.mxu0 0
      %1679 = vmatprep.subr.bf16.mxu0 0
      %1680 = vmatpush1.bf16.msra.mxu0 0
      %1681 = vmatprep.subr.bf16.mxu0 0
      %1682 = vmatpush1.bf16.msra.mxu0 0
      %1683 = vmatprep.subr.bf16.mxu0 0
      %1684 = vmatpush1.bf16.msra.mxu0 0
      %1685 = vmatprep.mubr.bf16.mxu0 0
      %1686 = vmatmul.mubr.bf16.gmra.mrb[0].mxu0 %v1642
      %v1687 = vpop.f32.mrb[0].mxu0
      %v1688 = vadd.f32 0.0, %v1687
      %v1689 = vpop.f32.mrb[0].mxu0
      %v1690 = vadd.f32 0.0, %v1689
      %v1691 = vpop.f32.mrb[0].mxu0
      %v1692 = vpop.f32.mrb[0].mxu0
      %1693 = vdwg.mxu0
      %1694 = vmatprep.subr.bf16.mxu0 0
      %1695 = vmatpush1.bf16.msra.mxu0 %v1651
      %1696 = vmatprep.subr.bf16.mxu0 0
      %1697 = vmatpush1.bf16.msra.mxu0 0
      %1698 = vmatprep.subr.bf16.mxu0 0
      %1699 = vmatpush1.bf16.msra.mxu0 0
      %1700 = vmatprep.subr.bf16.mxu0 0
      %1701 = vmatpush1.bf16.msra.mxu0 0
      %1702 = vmatprep.subr.bf16.mxu0 0
      %1703 = vmatpush1.bf16.msra.mxu0 0
      %1704 = vmatprep.subr.bf16.mxu0 0
      %1705 = vmatpush1.bf16.msra.mxu0 0
      %1706 = vmatprep.subr.bf16.mxu0 0
      %1707 = vmatpush1.bf16.msra.mxu0 0
      %1708 = vmatprep.subr.bf16.mxu0 0
      %1709 = vmatpush1.bf16.msra.mxu0 0
      %1710 = vmatprep.subr.bf16.mxu0 0
      %1711 = vmatpush1.bf16.msra.mxu0 0
      %1712 = vmatprep.subr.bf16.mxu0 0
      %1713 = vmatpush1.bf16.msra.mxu0 0
      %1714 = vmatprep.subr.bf16.mxu0 0
      %1715 = vmatpush1.bf16.msra.mxu0 0
      %1716 = vmatprep.subr.bf16.mxu0 0
      %1717 = vmatpush1.bf16.msra.mxu0 0
      %1718 = vmatprep.subr.bf16.mxu0 0
      %1719 = vmatpush1.bf16.msra.mxu0 0
      %1720 = vmatprep.subr.bf16.mxu0 0
      %1721 = vmatpush1.bf16.msra.mxu0 0
      %1722 = vmatprep.subr.bf16.mxu0 0
      %1723 = vmatpush1.bf16.msra.mxu0 0
      %1724 = vmatprep.subr.bf16.mxu0 0
      %1725 = vmatpush1.bf16.msra.mxu0 0
      %1726 = vmatprep.mubr.bf16.mxu0 0
      %1727 = vmatmul.mubr.bf16.gmra.mrb[0].mxu0 %v1642
      %v1728 = vpop.f32.mrb[0].mxu0
      %v1729 = vadd.f32 0.0, %v1728
      %v1730 = vpop.f32.mrb[0].mxu0
      %v1731 = vpop.f32.mrb[0].mxu0
      %v1732 = vpop.f32.mrb[0].mxu0
      %1733 = vdwg.mxu0
      %v1734 = vpack.c.bf16 %v1688, %v1688
      %v1735 = vpack.c.bf16 %v1690, %v1690
      %v1736 = vpack.c.bf16 %v1729, %v1729
      %v1740 = vunpack.c.l.b16 %v1734
      %v1741 = vunpack.c.l.b16 %v1735
      %v1742 = vunpack.c.l.b16 %v1736
      %v1743 = vpack.c.b16 %v1741, %v1740
      %v1744 = vpack.c.b16 %v1742, %v1742
      %1747 = vst [vmem:[%s424] sm:$0xff] %v1743
      %vm1748 = vcmask 551936
      %1749 = vst.msk [vmem:[%s424 + $0x8] sm:$0xf] %vm1748, %v1744
      %v1750 = vld [vmem:[%s3] sm:$0x7]
      %v1752 = vlaneseq
      %v1753 = vshrl.u32 %v1752, 7
      %v1754 = vsub.s32 0, %v1753
      %v1755 = vrot.slane %v1750, %v1754
      %v1756 = vlaneseq
      %v1757 = vshrl.u32 %v1756, 7
      %v1758 = vsub.s32 1, %v1757
      %v1759 = vrot.slane %v1750, %v1758
      %v1760 = vlaneseq
      %v1761 = vshrl.u32 %v1760, 7
      %v1762 = vsub.s32 2, %v1761
      %v1763 = vrot.slane %v1750, %v1762
      %v1767 = vmul.f32 %v1688, %v1755
      %v1768 = vmul.f32 %v1690, %v1759
      %v1769 = vmul.f32 %v1729, %v1763
      %v1770 = vld [vmem:[%s437] sm:$0xff]
      %v1771 = vadd.f32 %v1767, %v1768
      %vm1772 = vcmask 556032
      %v1773 = vsel %vm1772, %v1769, 0.0
      %v1774 = vadd.f32 %v1771, %v1773
      %1775 = vadd.xlane.f32.xlu0 %v1774
      %v1776 = vpop.xlane.xlu0 %1775
      %v1777 = vadd.f32 %v1770, %v1776
      %1778 = vst.msk [vmem:[%s437] sm:$0xff] %vm1601, %v1777
      %v1779 = vld [vmem:[%s441] sm:$0xff]
      %v1780 = vmul.f32 %v1688, %v1767
      %v1781 = vmul.f32 %v1690, %v1768
      %v1782 = vmul.f32 %v1729, %v1769
      %v1783 = vadd.f32 %v1780, %v1781
      %v1784 = vsel %vm1772, %v1782, 0.0
      %v1785 = vadd.f32 %v1783, %v1784
      %1786 = vadd.xlane.f32.xlu0 %v1785
      %v1787 = vpop.xlane.xlu0 %1786
      %v1788 = vadd.f32 %v1779, %v1787
      %1789 = vst.msk [vmem:[%s441] sm:$0xff] %vm1601, %v1788
      %s1790 = sadd.s32 %s26, %s27
      %p1791 = scmp.lt.s32.totalorder %s1790, 1
      %s1792 = scalar_select %p1791, %s1790, 1
      %s1793 = smul.addr %s1792, 3
      %s1794 = smul.addr %s1793, 4
      %s1795 = scalar_lea.vmem %s5, %s1794
      %s1796 = sadd.s32 %s26, %s27
      %p1797 = scmp.lt.s32.totalorder %s1796, 1
      %s1798 = scalar_select %p1797, %s1796, 1
      %s1799 = smul.addr %s1798, 3
      %s1800 = smul.addr %s1799, 4
      %s1801 = scalar_lea.vmem %s6, %s1800
      %p1802 = scmp.lt.s32.totalorder %s26, 1
      %s1803 = scalar_select %p1802, %s26, 1
      %s1804 = smul.addr %s1803, 8
      %s1805 = scalar_lea.vmem %s7, %s1804
      %p1806 = scmp.lt.s32.totalorder %s26, 1
      %s1807 = scalar_select %p1806, %s26, 1
      %s1808 = smul.addr %s1807, 8
      %s1809 = scalar_lea.vmem %s8, %s1808
      %p1810 = scmp.lt.s32.totalorder %s26, 1
      %s1811 = scalar_select %p1810, %s26, 1
      %s1812 = smul.addr %s1811, 8
      %s1813 = scalar_lea.vmem %s9, %s1812
      %p1814 = scmp.lt.s32.totalorder %s26, 1
      %s1815 = scalar_select %p1814, %s26, 1
      %s1816 = smul.addr %s1815, 8
      %s1817 = scalar_lea.vmem %s10, %s1816
      // Predicated region
      $region45: #{rblock_pallas.4} parent=39 // pred_check
        %p1818 = pneg %p166
      $region46: #{rblock_pallas.4} parent=39 // pred_check_branch
        %1820 = sbr.rel (%p1818) target = $region48
      $region47: #{rblock_pallas.4} parent=39 // pred_region
        %s1821 = sadd.s32 %s26, %s27
      $region48: #{rblock_pallas.4} parent=39 // pred_fallthru
        _
      // Predicated region
      $region49: #{rblock_pallas.4} parent=39 // pred_check
        %p1822 = pneg %p194
      $region50: #{rblock_pallas.4} parent=39 // pred_check_branch
        %1824 = sbr.rel (%p1822) target = $region52
      $region51: #{rblock_pallas.4} parent=39 // pred_region
        %s1825 = sadd.s32 %s26, %s27
      $region52: #{rblock_pallas.4} parent=39 // pred_fallthru
        _
      // Predicated region
      $region53: #{rblock_pallas.4} parent=39 // pred_check
        %p1826 = pneg %p220
      $region54: #{rblock_pallas.4} parent=39 // pred_check_branch
        %1828 = sbr.rel (%p1826) target = $region56
      $region55: #{rblock_pallas.4} parent=39 // pred_region
        _
      $region56: #{rblock_pallas.4} parent=39 // pred_fallthru
        _
      // Predicated region
      $region57: #{rblock_pallas.4} parent=39 // pred_check
        %p1829 = pneg %p246
      $region58: #{rblock_pallas.4} parent=39 // pred_check_branch
        %1831 = sbr.rel (%p1829) target = $region60
      $region59: #{rblock_pallas.4} parent=39 // pred_region
        _
      $region60: #{rblock_pallas.4} parent=39 // pred_fallthru
        _
      // Predicated region
      $region61: #{rblock_pallas.4} parent=39 // pred_check
        %p1832 = pneg %p272
      $region62: #{rblock_pallas.4} parent=39 // pred_check_branch
        %1834 = sbr.rel (%p1832) target = $region64
      $region63: #{rblock_pallas.4} parent=39 // pred_region
        _
      $region64: #{rblock_pallas.4} parent=39 // pred_fallthru
        _
      // Predicated region
      $region65: #{rblock_pallas.4} parent=39 // pred_check
        %p1835 = pneg %p298
      $region66: #{rblock_pallas.4} parent=39 // pred_check_branch
        %1837 = sbr.rel (%p1835) target = $region68
      $region67: #{rblock_pallas.4} parent=39 // pred_region
        _
      $region68: #{rblock_pallas.4} parent=39 // pred_fallthru
        _
    $region40: #{rblock_pallas.4} parent=5 // pred_fallthru
      _
    %p1838 = scmp.le.s32.totalorder 2, %s17
    // Predicated region
    $region69: #{rblock_pallas.4} parent=5 // pred_check
      %p1839 = pneg %p1838
    $region70: #{rblock_pallas.4} parent=5 // pred_check_branch
      %1841 = sbr.rel (%p1839) target = $region72
    $region71: #{rblock_pallas.4} parent=5 // pred_region
      %s1842 = ssub.s32 %s17, 2
      // Predicated region
      $region73: #{rblock_pallas.4} parent=71 // pred_check
        %p1843 = pneg %p172
      $region74: #{rblock_pallas.4} parent=71 // pred_check_branch
        %1845 = sbr.rel (%p1843) target = $region76
      $region75: #{rblock_pallas.4} parent=71 // pred_region
        %s1846 = sadd.s32 %s28, %s29
        %p1847 = scmp.lt.s32.totalorder %s1846, 1
        %s1848 = scalar_select %p1847, %s1846, 1
        %s1849 = smul.addr %s1848, 3
        %s1850 = smul.addr %s1849, 4
        %s1851 = scalar_lea.vmem %s5, %s1850
      $region76: #{rblock_pallas.4} parent=71 // pred_fallthru
        _
      // Predicated region
      $region77: #{rblock_pallas.4} parent=71 // pred_check
        %p1852 = pneg %p200
      $region78: #{rblock_pallas.4} parent=71 // pred_check_branch
        %1854 = sbr.rel (%p1852) target = $region80
      $region79: #{rblock_pallas.4} parent=71 // pred_region
        %s1855 = sadd.s32 %s28, %s29
        %p1856 = scmp.lt.s32.totalorder %s1855, 1
        %s1857 = scalar_select %p1856, %s1855, 1
        %s1858 = smul.addr %s1857, 3
        %s1859 = smul.addr %s1858, 4
        %s1860 = scalar_lea.vmem %s6, %s1859
      $region80: #{rblock_pallas.4} parent=71 // pred_fallthru
        _
      // Predicated region
      $region81: #{rblock_pallas.4} parent=71 // pred_check
        %p1861 = pneg %p226
      $region82: #{rblock_pallas.4} parent=71 // pred_check_branch
        %1863 = sbr.rel (%p1861) target = $region84
      $region83: #{rblock_pallas.4} parent=71 // pred_region
        %p1864 = scmp.lt.s32.totalorder %s28, 1
        %s1865 = scalar_select %p1864, %s28, 1
        %s1866 = smul.addr %s1865, 8
        %s1867 = scalar_lea.vmem %s7, %s1866
      $region84: #{rblock_pallas.4} parent=71 // pred_fallthru
        _
      // Predicated region
      $region85: #{rblock_pallas.4} parent=71 // pred_check
        %p1868 = pneg %p252
      $region86: #{rblock_pallas.4} parent=71 // pred_check_branch
        %1870 = sbr.rel (%p1868) target = $region88
      $region87: #{rblock_pallas.4} parent=71 // pred_region
        %p1871 = scmp.lt.s32.totalorder %s28, 1
        %s1872 = scalar_select %p1871, %s28, 1
        %s1873 = smul.addr %s1872, 8
        %s1874 = scalar_lea.vmem %s8, %s1873
      $region88: #{rblock_pallas.4} parent=71 // pred_fallthru
        _
      // Predicated region
      $region89: #{rblock_pallas.4} parent=71 // pred_check
        %p1875 = pneg %p278
      $region90: #{rblock_pallas.4} parent=71 // pred_check_branch
        %1877 = sbr.rel (%p1875) target = $region92
      $region91: #{rblock_pallas.4} parent=71 // pred_region
        %p1878 = scmp.lt.s32.totalorder %s28, 1
        %s1879 = scalar_select %p1878, %s28, 1
        %s1880 = smul.addr %s1879, 8
        %s1881 = scalar_lea.vmem %s9, %s1880
      $region92: #{rblock_pallas.4} parent=71 // pred_fallthru
        _
      // Predicated region
      $region93: #{rblock_pallas.4} parent=71 // pred_check
        %p1882 = pneg %p304
      $region94: #{rblock_pallas.4} parent=71 // pred_check_branch
        %1884 = sbr.rel (%p1882) target = $region96
      $region95: #{rblock_pallas.4} parent=71 // pred_region
        %p1885 = scmp.lt.s32.totalorder %s28, 1
        %s1886 = scalar_select %p1885, %s28, 1
        %s1887 = smul.addr %s1886, 8
        %s1888 = scalar_lea.vmem %s10, %s1887
      $region96: #{rblock_pallas.4} parent=71 // pred_fallthru
        _
    $region72: #{rblock_pallas.4} parent=5 // pred_fallthru
      _
  $region6: #{rblock_pallas.4} parent=0 // loop_footer
    %s21 = sadd.s32 1, %s17
  $region7: #{rblock_pallas.4} parent=0 // loop_footer_branch
    %16 = sbr.rel target = $region3
  $region8: #{rblock_pallas.4} parent=0 // loop_exit
    _

</llo_original>
